<compile_context>
chip_gen: v6e
topology: v6e:2x2x1
jax: 0.10.0
libtpu: 0.0.40
codegen_flags: <defaults>
</compile_context>

<pallas_src>
import jax
import jax.numpy as jnp
from jax.experimental import pallas as pl
from jax.experimental.pallas import tpu as pltpu

H1 = 300        # true hidden sizes of the torch module
H2 = 500
H1P = 384       # padded (lane/sublane friendly); padding is exactly zero
H2P = 512


def _round_up(n, m):
    return (n + m - 1) // m * m


def _padded_k(hid_dim):
    # contracting dim of the fused layer-1 matmul: hid features + 1 bias row,
    # rounded up for bf16 sublane packing.
    return _round_up(hid_dim + 1, 16)


def _choose_tile_b(b128, max_tile_b):
    """Pick a batch tile (multiple of 128) that
    (1) minimizes padded work b_pad - B,
    (2) prefers >= 2 grid steps (v7x megacore sharding),
    (3) otherwise minimizes grid steps (per-step overhead)."""
    best_key, best_tile = None, 128
    for tile in range(128, max_tile_b + 1, 128):
        b_pad = _round_up(b128, tile)
        steps = b_pad // tile
        key = (b_pad, 0 if steps >= 2 else 1, steps)
        if best_key is None or key < best_key:
            best_key, best_tile = key, tile
    return best_tile


def net2_kernel(x_ref, t_ref,
                w1c_ref,
                w2_0_ref, w2_1_ref,
                w3_0_ref, b3_0_ref, w3_1_ref, b3_1_ref,
                y_ref):
    x = x_ref[...]                                   # (KP, TILE_B) bf16, bias row = 1

    # ---- layer 1, both branches fused, bias folded into K ----
    h1 = jnp.dot(w1c_ref[...], x, preferred_element_type=jnp.float32)
    h1 = jnp.maximum(h1, 0.0).astype(jnp.bfloat16)   # (2*H1P, TILE_B)
    h1_0 = h1[:H1P, :]                               # branch t0 (row H1P-1 == 1)
    h1_1 = h1[H1P:, :]                               # branch t1 (row H1P-1 == 1)

    # ---- layer 2, per branch, bias folded into the constant-1 column ----
    r0 = jnp.maximum(
        jnp.dot(w2_0_ref[...], h1_0, preferred_element_type=jnp.float32), 0.0)
    r1 = jnp.maximum(
        jnp.dot(w2_1_ref[...], h1_1, preferred_element_type=jnp.float32), 0.0)

    # ---- layer 3: VPU multiply + cross-sublane reduce (no 1-wide MXU) ----
    y0 = jnp.sum(r0 * w3_0_ref[...], axis=0, keepdims=True) + b3_0_ref[...]
    y1 = jnp.sum(r1 * w3_1_ref[...], axis=0, keepdims=True) + b3_1_ref[...]

    # torch.where(t > 0, y_1, y_0); lane-dense (1, TILE_B) store.
    y_ref[...] = jnp.where(t_ref[...] > 0.0, y1, y0)


def net2_forward(x, t, kparams, *, max_tile_b=1024):
    """x: (B, hid) f32, t: (B,) f32, kparams from prep_kernel_params -> (B,) f32."""
    B, hid = x.shape
    kp = _padded_k(hid)
    b128 = _round_up(B, 128)
    tile_b = _choose_tile_b(b128, max_tile_b)
    b_pad = _round_up(b128, tile_b)
    grid = (b_pad // tile_b,)

    # transposed, padded, bf16 input: batch on lanes, features on sublanes,
    # plus a constant-1 row at index `hid` that carries the layer-1 bias.
    # TODO(synk): if xprof shows this host-side transpose/pad pass is hot for
    # very large B, fuse the cast/transpose into the upstream producer.
    x_t = jnp.zeros((kp, b_pad), jnp.bfloat16)
    x_t = x_t.at[:hid, :B].set(x.T.astype(jnp.bfloat16))
    x_t = x_t.at[hid, :].set(jnp.ones((b_pad,), jnp.bfloat16))
    t_row = jnp.zeros((1, b_pad), jnp.float32)
    t_row = t_row.at[0, :B].set(t.astype(jnp.float32))

    def resident(shape):
        # full-array block + constant index_map -> stays resident across steps
        return pl.BlockSpec(shape, lambda i: (0, 0))

    in_specs = [
        pl.BlockSpec((kp, tile_b), lambda i: (0, i)),     # x tile
        pl.BlockSpec((1, tile_b), lambda i: (0, i)),      # t tile
        resident((2 * H1P, kp)),                          # fused W1 (+bias col)
        resident((H2P, H1P)),                             # W2 t0 (+bias col)
        resident((H2P, H1P)),                             # W2 t1 (+bias col)
        resident((H2P, 1)), resident((1, 1)),             # W3/b3 t0
        resident((H2P, 1)), resident((1, 1)),             # W3/b3 t1
    ]
    out_spec = pl.BlockSpec((1, tile_b), lambda i: (0, i))

    y = pl.pallas_call(
        net2_kernel,
        out_shape=jax.ShapeDtypeStruct((1, b_pad), jnp.float32),
        grid=grid,
        in_specs=in_specs,
        out_specs=out_spec,
        compiler_params=pltpu.CompilerParams(
            dimension_semantics=("parallel",),
            vmem_limit_bytes=32 * 1024 * 1024,
        ),
    )(x_t, t_row, *kparams)
    return y[0, :B]


def init_params(key, hid_dim):
    """Mirror the PyTorch init: weight ~ U(0, 0.002), bias ~ U(-0.1, 0.1).
    Weights stored as (in, out) = transpose of torch's (out, in)."""
    dims = [(hid_dim, H1), (H1, H2), (H2, 1)]
    params = []
    for _branch in range(2):
        for din, dout in dims:
            key, kw, kb = jax.random.split(key, 3)
            w = jax.random.uniform(kw, (din, dout), jnp.float32, 0.0, 0.002)
            b = jax.random.uniform(kb, (1, dout), jnp.float32, -0.1, 0.1)
            params += [w, b]
    return tuple(params)


def prep_kernel_params(params, hid_dim):
    """Build padded / transposed / bf16 kernel-side parameters with the
    layer-1 and layer-2 biases folded into the matmuls."""
    (w1_0, b1_0, w2_0, b2_0, w3_0, b3_0,
     w1_1, b1_1, w2_1, b2_1, w3_1, b3_1) = params
    kp = _padded_k(hid_dim)

    # Fused layer-1 weight.  Rows [0,H1) / [H1P, H1P+H1) hold the two branches;
    # column `hid_dim` is the layer-1 bias (x carries a constant-1 row there);
    # rows H1P-1 and 2*H1P-1 are constant-1 generators (weight 0, "bias" 1)
    # used to fold the layer-2 biases.  All other padding is exactly zero.
    w1c = jnp.zeros((2 * H1P, kp), jnp.float32)
    w1c = w1c.at[:H1, :hid_dim].set(w1_0.T)
    w1c = w1c.at[H1P:H1P + H1, :hid_dim].set(w1_1.T)
    w1c = w1c.at[:H1, hid_dim].set(b1_0[0])
    w1c = w1c.at[H1P:H1P + H1, hid_dim].set(b1_1[0])
    w1c = w1c.at[H1P - 1, hid_dim].set(1.0)
    w1c = w1c.at[2 * H1P - 1, hid_dim].set(1.0)

    def prep2(w2, b2):
        w = jnp.zeros((H2P, H1P), jnp.float32)
        w = w.at[:H2, :H1].set(w2.T)
        w = w.at[:H2, H1P - 1].set(b2[0])   # bias column hits the constant-1 row
        return w.astype(jnp.bfloat16)

    def prep3(w3, b3):
        w = jnp.zeros((H2P, 1), jnp.float32).at[:H2, :].set(w3)
        return w, b3.reshape(1, 1)

    w2_0p = prep2(w2_0, b2_0)
    w2_1p = prep2(w2_1, b2_1)
    w3_0p, b3_0p = prep3(w3_0, b3_0)
    w3_1p, b3_1p = prep3(w3_1, b3_1)
    return (w1c.astype(jnp.bfloat16),
            w2_0p, w2_1p,
            w3_0p, b3_0p, w3_1p, b3_1p)


def net2_reference_f32(x, t, params):
    """Pure-f32 reference (exact torch semantics, eval mode)."""
    (w1_0, b1_0, w2_0, b2_0, w3_0, b3_0,
     w1_1, b1_1, w2_1, b2_1, w3_1, b3_1) = params
    hi = jax.lax.Precision.HIGHEST

    def branch(w1, b1, w2, b2, w3, b3):
        r = jax.nn.relu(jnp.dot(x, w1, precision=hi) + b1)
        r = jax.nn.relu(jnp.dot(r, w2, precision=hi) + b2)
        return (jnp.dot(r, w3, precision=hi) + b3).reshape(-1)

    y0 = branch(w1_0, b1_0, w2_0, b2_0, w3_0, b3_0)
    y1 = branch(w1_1, b1_1, w2_1, b2_1, w3_1, b3_1)
    return jnp.where(t > 0.0, y1, y0)


def net2_reference_bf16(x, t, params):
    """Pure-JAX reference mirroring the kernel numerics: bf16 MXU inputs
    (weights AND folded biases rounded to bf16), f32 accumulation / ReLU /
    final layer / select."""
    (w1_0, b1_0, w2_0, b2_0, w3_0, b3_0,
     w1_1, b1_1, w2_1, b2_1, w3_1, b3_1) = params
    xb = x.astype(jnp.bfloat16)

    def branch(w1, b1, w2, b2, w3, b3):
        h1 = (jnp.dot(xb, w1.astype(jnp.bfloat16),
                      preferred_element_type=jnp.float32)
              + b1.astype(jnp.bfloat16).astype(jnp.float32))
        h1 = jnp.maximum(h1, 0.0).astype(jnp.bfloat16)
        h2 = (jnp.dot(h1, w2.astype(jnp.bfloat16),
                      preferred_element_type=jnp.float32)
              + b2.astype(jnp.bfloat16).astype(jnp.float32))
        h2 = jnp.maximum(h2, 0.0)
        return jnp.sum(h2 * w3[:, 0], axis=-1) + b3[0, 0]

    y0 = branch(w1_0, b1_0, w2_0, b2_0, w3_0, b3_0)
    y1 = branch(w1_1, b1_1, w2_1, b2_1, w3_1, b3_1)
    return jnp.where(t > 0.0, y1, y0)


def _check(batch, hid_dim, key):
    kx, kt, kp = jax.random.split(key, 3)
    x = jax.random.normal(kx, (batch, hid_dim), jnp.float32)
    t = (jax.random.uniform(kt, (batch,)) > 0.5).astype(jnp.float32)

    params = init_params(kp, hid_dim)
    kparams = prep_kernel_params(params, hid_dim)

    y = net2_forward(x, t, kparams)
    jax.block_until_ready(y)
    assert y.shape == (batch,)

    # tight check vs. a pure-JAX reference with identical bf16/f32 numerics
    y_bf16 = net2_reference_bf16(x, t, params)
    assert jnp.allclose(y, y_bf16, atol=2e-5, rtol=1e-5), (y, y_bf16)

    # loose check vs. exact f32 torch semantics (bf16 rounding only)
    y_f32 = net2_reference_f32(x, t, params)
    assert jnp.allclose(y, y_f32, atol=2e-3, rtol=2e-2), (y, y_f32)


if __name__ == "__main__":
    key = jax.random.PRNGKey(0)
    hid_dim = 32

    _check(batch=8, hid_dim=hid_dim, key=key)        # single-tile path
    _check(batch=200, hid_dim=hid_dim, key=key)      # multi-step grid path

    print("KERNEL_OK")
</pallas_src>

<mosaic_0001>
module attributes {stable_mosaic.version = 11 : i64} {
  func.func @net2_kernel(%arg0: i32, %arg1: memref<48x128xbf16, #tpu.memory_space<vmem>>, %arg2: memref<1x128xf32, #tpu.memory_space<vmem>>, %arg3: memref<768x48xbf16, #tpu.memory_space<vmem>>, %arg4: memref<512x384xbf16, #tpu.memory_space<vmem>>, %arg5: memref<512x384xbf16, #tpu.memory_space<vmem>>, %arg6: memref<512x1xf32, #tpu.memory_space<vmem>>, %arg7: memref<1x1xf32, #tpu.memory_space<vmem>>, %arg8: memref<512x1xf32, #tpu.memory_space<vmem>>, %arg9: memref<1x1xf32, #tpu.memory_space<vmem>>, %arg10: memref<1x128xf32, #tpu.memory_space<vmem>>) attributes {dimension_semantics = [#tpu.dimension_semantics<parallel>], iteration_bounds = array<i64: 1>, scalar_prefetch = 0 : i64, scratch_operands = 0 : i64, tpu.core_type = #tpu.core_type<tc>, window_params = [{transform_indices = @transform_0, window_bounds = array<i64: 48, 128>}, {transform_indices = @transform_1, window_bounds = array<i64: 1, 128>}, {pipeline_mode = #tpu.pipeline_mode<synchronous>, transform_indices = @transform_2, window_bounds = array<i64: 768, 48>}, {pipeline_mode = #tpu.pipeline_mode<synchronous>, transform_indices = @transform_3, window_bounds = array<i64: 512, 384>}, {pipeline_mode = #tpu.pipeline_mode<synchronous>, transform_indices = @transform_4, window_bounds = array<i64: 512, 384>}, {pipeline_mode = #tpu.pipeline_mode<synchronous>, transform_indices = @transform_5, window_bounds = array<i64: 512, 1>}, {pipeline_mode = #tpu.pipeline_mode<synchronous>, transform_indices = @transform_6, window_bounds = array<i64: 1, 1>}, {pipeline_mode = #tpu.pipeline_mode<synchronous>, transform_indices = @transform_7, window_bounds = array<i64: 512, 1>}, {pipeline_mode = #tpu.pipeline_mode<synchronous>, transform_indices = @transform_8, window_bounds = array<i64: 1, 1>}, {transform_indices = @transform_9, window_bounds = array<i64: 1, 128>}]} {
    %c0 = arith.constant 0 : index
    %c0_0 = arith.constant 0 : index
    %0 = vector.load %arg1[%c0, %c0_0] : memref<48x128xbf16, #tpu.memory_space<vmem>>, vector<48x128xbf16>
    %c0_1 = arith.constant 0 : index
    %c0_2 = arith.constant 0 : index
    %1 = vector.load %arg3[%c0_1, %c0_2] : memref<768x48xbf16, #tpu.memory_space<vmem>>, vector<768x48xbf16>
    %cst = arith.constant dense<0.000000e+00> : vector<768x128xf32>
    %2 = tpu.matmul %1, %0, %cst {dimension_numbers = #tpu.dot_dimension_numbers<[1], [0], [0], [1], [0, 0, 1, 1], [], []>} : vector<768x48xbf16>, vector<48x128xbf16>, vector<768x128xf32> -> vector<768x128xf32>
    %cst_3 = arith.constant 0.000000e+00 : f32
    %3 = vector.broadcast %cst_3 : f32 to vector<768x128xf32>
    %4 = arith.maximumf %2, %3 : vector<768x128xf32>
    %5 = arith.truncf %4 : vector<768x128xf32> to vector<768x128xbf16>
    %6 = vector.extract_strided_slice %5 {offsets = [0, 0], sizes = [384, 128], strides = [1, 1]} : vector<768x128xbf16> to vector<384x128xbf16>
    %7 = vector.extract_strided_slice %5 {offsets = [384, 0], sizes = [384, 128], strides = [1, 1]} : vector<768x128xbf16> to vector<384x128xbf16>
    %c0_4 = arith.constant 0 : index
    %c0_5 = arith.constant 0 : index
    %8 = vector.load %arg4[%c0_4, %c0_5] : memref<512x384xbf16, #tpu.memory_space<vmem>>, vector<512x384xbf16>
    %cst_6 = arith.constant dense<0.000000e+00> : vector<512x128xf32>
    %9 = tpu.matmul %8, %6, %cst_6 {dimension_numbers = #tpu.dot_dimension_numbers<[1], [0], [0], [1], [0, 0, 1, 1], [], []>} : vector<512x384xbf16>, vector<384x128xbf16>, vector<512x128xf32> -> vector<512x128xf32>
    %cst_7 = arith.constant 0.000000e+00 : f32
    %10 = vector.broadcast %cst_7 : f32 to vector<512x128xf32>
    %11 = arith.maximumf %9, %10 : vector<512x128xf32>
    %c0_8 = arith.constant 0 : index
    %c0_9 = arith.constant 0 : index
    %12 = vector.load %arg5[%c0_8, %c0_9] : memref<512x384xbf16, #tpu.memory_space<vmem>>, vector<512x384xbf16>
    %cst_10 = arith.constant dense<0.000000e+00> : vector<512x128xf32>
    %13 = tpu.matmul %12, %7, %cst_10 {dimension_numbers = #tpu.dot_dimension_numbers<[1], [0], [0], [1], [0, 0, 1, 1], [], []>} : vector<512x384xbf16>, vector<384x128xbf16>, vector<512x128xf32> -> vector<512x128xf32>
    %cst_11 = arith.constant 0.000000e+00 : f32
    %14 = vector.broadcast %cst_11 : f32 to vector<512x128xf32>
    %15 = arith.maximumf %13, %14 : vector<512x128xf32>
    %c0_12 = arith.constant 0 : index
    %c0_13 = arith.constant 0 : index
    %16 = vector.load %arg6[%c0_12, %c0_13] : memref<512x1xf32, #tpu.memory_space<vmem>>, vector<512x1xf32>
    %17 = vector.broadcast %16 : vector<512x1xf32> to vector<512x128xf32>
    %18 = arith.mulf %11, %17 : vector<512x128xf32>
    %cst_14 = arith.constant dense<0.000000e+00> : vector<128xf32>
    %19 = vector.multi_reduction <add>, %18, %cst_14 [0] : vector<512x128xf32> to vector<128xf32>
    %20 = vector.shape_cast %19 : vector<128xf32> to vector<1x128xf32>
    %c0_15 = arith.constant 0 : index
    %c0_16 = arith.constant 0 : index
    %21 = vector.load %arg7[%c0_15, %c0_16] : memref<1x1xf32, #tpu.memory_space<vmem>>, vector<1x1xf32>
    %22 = vector.broadcast %21 : vector<1x1xf32> to vector<1x128xf32>
    %23 = arith.addf %20, %22 : vector<1x128xf32>
    %c0_17 = arith.constant 0 : index
    %c0_18 = arith.constant 0 : index
    %24 = vector.load %arg8[%c0_17, %c0_18] : memref<512x1xf32, #tpu.memory_space<vmem>>, vector<512x1xf32>
    %25 = vector.broadcast %24 : vector<512x1xf32> to vector<512x128xf32>
    %26 = arith.mulf %15, %25 : vector<512x128xf32>
    %cst_19 = arith.constant dense<0.000000e+00> : vector<128xf32>
    %27 = vector.multi_reduction <add>, %26, %cst_19 [0] : vector<512x128xf32> to vector<128xf32>
    %28 = vector.shape_cast %27 : vector<128xf32> to vector<1x128xf32>
    %c0_20 = arith.constant 0 : index
    %c0_21 = arith.constant 0 : index
    %29 = vector.load %arg9[%c0_20, %c0_21] : memref<1x1xf32, #tpu.memory_space<vmem>>, vector<1x1xf32>
    %30 = vector.broadcast %29 : vector<1x1xf32> to vector<1x128xf32>
    %31 = arith.addf %28, %30 : vector<1x128xf32>
    %c0_22 = arith.constant 0 : index
    %c0_23 = arith.constant 0 : index
    %32 = vector.load %arg2[%c0_22, %c0_23] : memref<1x128xf32, #tpu.memory_space<vmem>>, vector<1x128xf32>
    %cst_24 = arith.constant 0.000000e+00 : f32
    %33 = vector.broadcast %cst_24 : f32 to vector<1x128xf32>
    %34 = arith.cmpf ogt, %32, %33 : vector<1x128xf32>
    %35 = arith.select %34, %31, %23 : vector<1x128xi1>, vector<1x128xf32>
    %c0_25 = arith.constant 0 : index
    %c0_26 = arith.constant 0 : index
    %36 = vector.load %arg10[%c0_25, %c0_26] : memref<1x128xf32, #tpu.memory_space<vmem>>, vector<1x128xf32>
    tpu.vector_store %arg10[%c0_25, %c0_26], %35 {strides = array<i32>} : memref<1x128xf32, #tpu.memory_space<vmem>>, vector<1x128xf32>,
    return
  }
  func.func @transform_0(%arg0: i32) -> (i32, i32) {
    %c0_i32 = arith.constant 0 : i32
    %c0_i32_0 = arith.constant 0 : i32
    return %c0_i32, %arg0 : i32, i32
  }
  func.func @transform_1(%arg0: i32) -> (i32, i32) {
    %c0_i32 = arith.constant 0 : i32
    %c0_i32_0 = arith.constant 0 : i32
    return %c0_i32, %arg0 : i32, i32
  }
  func.func @transform_2(%arg0: i32) -> (i32, i32) {
    %c0_i32 = arith.constant 0 : i32
    %c0_i32_0 = arith.constant 0 : i32
    %c0_i32_1 = arith.constant 0 : i32
    return %c0_i32, %c0_i32_0 : i32, i32
  }
  func.func @transform_3(%arg0: i32) -> (i32, i32) {
    %c0_i32 = arith.constant 0 : i32
    %c0_i32_0 = arith.constant 0 : i32
    %c0_i32_1 = arith.constant 0 : i32
    return %c0_i32, %c0_i32_0 : i32, i32
  }
  func.func @transform_4(%arg0: i32) -> (i32, i32) {
    %c0_i32 = arith.constant 0 : i32
    %c0_i32_0 = arith.constant 0 : i32
    %c0_i32_1 = arith.constant 0 : i32
    return %c0_i32, %c0_i32_0 : i32, i32
  }
  func.func @transform_5(%arg0: i32) -> (i32, i32) {
    %c0_i32 = arith.constant 0 : i32
    %c0_i32_0 = arith.constant 0 : i32
    %c0_i32_1 = arith.constant 0 : i32
    return %c0_i32, %c0_i32_0 : i32, i32
  }
  func.func @transform_6(%arg0: i32) -> (i32, i32) {
    %c0_i32 = arith.constant 0 : i32
    %c0_i32_0 = arith.constant 0 : i32
    %c0_i32_1 = arith.constant 0 : i32
    return %c0_i32, %c0_i32_0 : i32, i32
  }
  func.func @transform_7(%arg0: i32) -> (i32, i32) {
    %c0_i32 = arith.constant 0 : i32
    %c0_i32_0 = arith.constant 0 : i32
    %c0_i32_1 = arith.constant 0 : i32
    return %c0_i32, %c0_i32_0 : i32, i32
  }
  func.func @transform_8(%arg0: i32) -> (i32, i32) {
    %c0_i32 = arith.constant 0 : i32
    %c0_i32_0 = arith.constant 0 : i32
    %c0_i32_1 = arith.constant 0 : i32
    return %c0_i32, %c0_i32_0 : i32, i32
  }
  func.func @transform_9(%arg0: i32) -> (i32, i32) {
    %c0_i32 = arith.constant 0 : i32
    %c0_i32_0 = arith.constant 0 : i32
    return %c0_i32, %arg0 : i32, i32
  }
}

</mosaic_0001>

<llo_original>
// kernel: tpu_custom_call.1
$region0: #{tpu_custom_call.1}
  #allocation0 [shape = 'u32[]', space=smem, size = 0x4, offset = 0x4, fixed_abs, tag = 'smem constant byte address 0x4 - core index']
  #allocation1 [shape = 'u32[144,128]{1,0:T(1,128)}', space=vmem, size = 0x12000, scoped, tag = 'internal scratch']
  #allocation2 [shape = 'f32[1,1]{1,0:T(1,128)S(1)}', space=vmem, size = 0x200, scoped, tag = 'scoped memory for tpu_custom_call.1']
  #allocation3 [shape = 'f32[1,1]{1,0:T(1,128)S(1)}', space=vmem, size = 0x200, scoped, tag = 'scoped memory for tpu_custom_call.1']
  %s0 = inlined_call_operand.hbm [shape: bf16[48,128], index: 0, kind: input, shape index: {}]
  %s1 = inlined_call_operand.vmem [shape: f32[1,128], index: 1, kind: input, shape index: {}]
  %s2 = inlined_call_operand.vmem [shape: bf16[768,48], index: 2, kind: input, shape index: {}]
  %s3 = inlined_call_operand.vmem [shape: bf16[512,384], index: 3, kind: input, shape index: {}]
  %s4 = inlined_call_operand.vmem [shape: bf16[512,384], index: 4, kind: input, shape index: {}]
  %s5 = inlined_call_operand.vmem [shape: f32[512,1], index: 5, kind: input, shape index: {}]
  %s6 = inlined_call_operand.<no memory space> [shape: f32[1,1], index: 6, kind: input, shape index: {}]
  %s7 = inlined_call_operand.vmem [shape: f32[512,1], index: 7, kind: input, shape index: {}]
  %s8 = inlined_call_operand.<no memory space> [shape: f32[1,1], index: 8, kind: input, shape index: {}]
  %s9 = inlined_call_operand.hbm [shape: f32[1,128], index: 9, kind: output, shape index: {}]
  %s10 = sld [smem:[#allocation0]]
  $region50: #{tpu_custom_call.1} parent=0
    _
  %s12 = ssub.s32 1, %s10
  %s13 = scalar_select 0, %s12, %s10
  %v14 = vstv %s6
  %15 = vst [vmem:[#allocation2] sm:$0x1] %v14
  %v16 = vstv %s8
  %17 = vst [vmem:[#allocation3] sm:$0x1] %v16
  $region1: #{tpu_custom_call.1} parent=0
    #allocation4 [shape = 'u8[12288]{0}', space=vmem, size = 0x3000, scoped, tag = 'input window, operand 0, single buffered']
    #allocation5 [shape = 's32[1]{0}', space=sflag, size = 0x4, scoped, tag = 'scoped memory for tpu_custom_call.1']
    #allocation6 [shape = 's32[1]{0}', space=sflag, size = 0x4, scoped, tag = 'scoped memory for tpu_custom_call.1']
    #allocation7 [shape = 'u8[512]{0}', space=vmem, size = 0x400, scoped, tag = 'output window, operand 0, single buffered']
    %18 = vsyncpa [#allocation5], 0
    %19 = vsyncpa [#allocation6], 0
    // Predicated region
    $region2: #{tpu_custom_call.1} parent=1 // pred_check
      _
    $region3: #{tpu_custom_call.1} parent=1 // pred_check_branch
      %21 = sbr.rel (0) target = $region5
    $region4: #{tpu_custom_call.1} parent=1 // pred_region
      %s23 = ssub.s32 384, 384
      %24 = vsyncadd [#allocation5], %s23
      %s25 = sshll.u32 [#allocation4], 4
      %s26 = int_to_ptr.vmem [resolvable:$true] %s25
      %31 = dma.hbm_to_vmem [thread:$0]  %s0, 384, %s26, [#allocation5], 64, 64, 4
    $region5: #{tpu_custom_call.1} parent=1 // pred_fallthru
      _
    // Predicated region
    $region6: #{tpu_custom_call.1} parent=1 // pred_check
      _
    $region7: #{tpu_custom_call.1} parent=1 // pred_check_branch
      %33 = sbr.rel (0) target = $region9
    $region8: #{tpu_custom_call.1} parent=1 // pred_region
      _
    $region9: #{tpu_custom_call.1} parent=1 // pred_fallthru
      _
    // Predicated region
    $region10: #{tpu_custom_call.1} parent=1 // pred_check
      _
    $region11: #{tpu_custom_call.1} parent=1 // pred_check_branch
      %35 = sbr.rel (0) target = $region13
    $region12: #{tpu_custom_call.1} parent=1 // pred_region
      _
    $region13: #{tpu_custom_call.1} parent=1 // pred_fallthru
      _
    // Predicated region
    $region14: #{tpu_custom_call.1} parent=1 // pred_check
      _
    $region15: #{tpu_custom_call.1} parent=1 // pred_check_branch
      %37 = sbr.rel (0) target = $region17
    $region16: #{tpu_custom_call.1} parent=1 // pred_region
      _
    $region17: #{tpu_custom_call.1} parent=1 // pred_fallthru
      _
    // Predicated region
    $region18: #{tpu_custom_call.1} parent=1 // pred_check
      _
    $region19: #{tpu_custom_call.1} parent=1 // pred_check_branch
      %39 = sbr.rel (0) target = $region21
    $region20: #{tpu_custom_call.1} parent=1 // pred_region
      _
    $region21: #{tpu_custom_call.1} parent=1 // pred_fallthru
      _
    // Predicated region
    $region22: #{tpu_custom_call.1} parent=1 // pred_check
      _
    $region23: #{tpu_custom_call.1} parent=1 // pred_check_branch
      %41 = sbr.rel (0) target = $region25
    $region24: #{tpu_custom_call.1} parent=1 // pred_region
      _
    $region25: #{tpu_custom_call.1} parent=1 // pred_fallthru
      _
    // Predicated region
    $region26: #{tpu_custom_call.1} parent=1 // pred_check
      _
    $region27: #{tpu_custom_call.1} parent=1 // pred_check_branch
      %43 = sbr.rel (0) target = $region29
    $region28: #{tpu_custom_call.1} parent=1 // pred_region
      _
    $region29: #{tpu_custom_call.1} parent=1 // pred_fallthru
      _
    // Predicated region
    $region30: #{tpu_custom_call.1} parent=1 // pred_check
      _
    $region31: #{tpu_custom_call.1} parent=1 // pred_check_branch
      %45 = sbr.rel (0) target = $region33
    $region32: #{tpu_custom_call.1} parent=1 // pred_region
      _
    $region33: #{tpu_custom_call.1} parent=1 // pred_fallthru
      _
    // Predicated region
    $region34: #{tpu_custom_call.1} parent=1 // pred_check
      _
    $region35: #{tpu_custom_call.1} parent=1 // pred_check_branch
      %47 = sbr.rel (0) target = $region37
    $region36: #{tpu_custom_call.1} parent=1 // pred_region
      _
    $region37: #{tpu_custom_call.1} parent=1 // pred_fallthru
      _
    // Predicated region
    $region38: #{tpu_custom_call.1} parent=1 // pred_check
      _
    $region39: #{tpu_custom_call.1} parent=1 // pred_check_branch
      %49 = sbr.rel (0) target = $region41
    $region40: #{tpu_custom_call.1} parent=1 // pred_region
      %50 = dma.done [#allocation5], 384
    $region41: #{tpu_custom_call.1} parent=1 // pred_fallthru
      _
    %v52 = vld [vmem:[#allocation4] sm:$0xf]
    %v53 = vld [vmem:[#allocation4 + $0x4] sm:$0xf]
    %v54 = vld [vmem:[#allocation4 + $0x8] sm:$0xf]
    %v55 = vld [vmem:[#allocation4 + $0xc] sm:$0xf]
    %v56 = vld [vmem:[#allocation4 + $0x10] sm:$0xf]
    %v57 = vld [vmem:[#allocation4 + $0x14] sm:$0xf]
    %v58 = vld [vmem:[%s2] sm:$0xf]
    %v59 = vld [vmem:[%s2 + $0x4] sm:$0xf]
    %v60 = vld [vmem:[%s2 + $0x8] sm:$0xf]
    %v61 = vld [vmem:[%s2 + $0xc] sm:$0xf]
    %v62 = vld [vmem:[%s2 + $0x10] sm:$0xf]
    %v63 = vld [vmem:[%s2 + $0x14] sm:$0xf]
    %v64 = vld [vmem:[%s2 + $0x18] sm:$0xf]
    %v65 = vld [vmem:[%s2 + $0x1c] sm:$0xf]
    %v66 = vld [vmem:[%s2 + $0x20] sm:$0xf]
    %v67 = vld [vmem:[%s2 + $0x24] sm:$0xf]
    %v68 = vld [vmem:[%s2 + $0x28] sm:$0xf]
    %v69 = vld [vmem:[%s2 + $0x2c] sm:$0xf]
    %v70 = vld [vmem:[%s2 + $0x30] sm:$0xf]
    %v71 = vld [vmem:[%s2 + $0x34] sm:$0xf]
    %v72 = vld [vmem:[%s2 + $0x38] sm:$0xf]
    %v73 = vld [vmem:[%s2 + $0x3c] sm:$0xf]
    %v74 = vld [vmem:[%s2 + $0x40] sm:$0xf]
    %v75 = vld [vmem:[%s2 + $0x44] sm:$0xf]
    %v76 = vld [vmem:[%s2 + $0x48] sm:$0xf]
    %v77 = vld [vmem:[%s2 + $0x4c] sm:$0xf]
    %v78 = vld [vmem:[%s2 + $0x50] sm:$0xf]
    %v79 = vld [vmem:[%s2 + $0x54] sm:$0xf]
    %v80 = vld [vmem:[%s2 + $0x58] sm:$0xf]
    %v81 = vld [vmem:[%s2 + $0x5c] sm:$0xf]
    %v82 = vld [vmem:[%s2 + $0x60] sm:$0xf]
    %v83 = vld [vmem:[%s2 + $0x64] sm:$0xf]
    %v84 = vld [vmem:[%s2 + $0x68] sm:$0xf]
    %v85 = vld [vmem:[%s2 + $0x6c] sm:$0xf]
    %v86 = vld [vmem:[%s2 + $0x70] sm:$0xf]
    %v87 = vld [vmem:[%s2 + $0x74] sm:$0xf]
    %v88 = vld [vmem:[%s2 + $0x78] sm:$0xf]
    %v89 = vld [vmem:[%s2 + $0x7c] sm:$0xf]
    %v90 = vld [vmem:[%s2 + $0x80] sm:$0xf]
    %v91 = vld [vmem:[%s2 + $0x84] sm:$0xf]
    %v92 = vld [vmem:[%s2 + $0x88] sm:$0xf]
    %v93 = vld [vmem:[%s2 + $0x8c] sm:$0xf]
    %v94 = vld [vmem:[%s2 + $0x90] sm:$0xf]
    %v95 = vld [vmem:[%s2 + $0x94] sm:$0xf]
    %v96 = vld [vmem:[%s2 + $0x98] sm:$0xf]
    %v97 = vld [vmem:[%s2 + $0x9c] sm:$0xf]
    %v98 = vld [vmem:[%s2 + $0xa0] sm:$0xf]
    %v99 = vld [vmem:[%s2 + $0xa4] sm:$0xf]
    %v100 = vld [vmem:[%s2 + $0xa8] sm:$0xf]
    %v101 = vld [vmem:[%s2 + $0xac] sm:$0xf]
    %v102 = vld [vmem:[%s2 + $0xb0] sm:$0xf]
    %v103 = vld [vmem:[%s2 + $0xb4] sm:$0xf]
    %v104 = vld [vmem:[%s2 + $0xb8] sm:$0xf]
    %v105 = vld [vmem:[%s2 + $0xbc] sm:$0xf]
    %v106 = vld [vmem:[%s2 + $0xc0] sm:$0xf]
    %v107 = vld [vmem:[%s2 + $0xc4] sm:$0xf]
    %v108 = vld [vmem:[%s2 + $0xc8] sm:$0xf]
    %v109 = vld [vmem:[%s2 + $0xcc] sm:$0xf]
    %v110 = vld [vmem:[%s2 + $0xd0] sm:$0xf]
    %v111 = vld [vmem:[%s2 + $0xd4] sm:$0xf]
    %v112 = vld [vmem:[%s2 + $0xd8] sm:$0xf]
    %v113 = vld [vmem:[%s2 + $0xdc] sm:$0xf]
    %v114 = vld [vmem:[%s2 + $0xe0] sm:$0xf]
    %v115 = vld [vmem:[%s2 + $0xe4] sm:$0xf]
    %v116 = vld [vmem:[%s2 + $0xe8] sm:$0xf]
    %v117 = vld [vmem:[%s2 + $0xec] sm:$0xf]
    %v118 = vld [vmem:[%s2 + $0xf0] sm:$0xf]
    %v119 = vld [vmem:[%s2 + $0xf4] sm:$0xf]
    %v120 = vld [vmem:[%s2 + $0xf8] sm:$0xf]
    %v121 = vld [vmem:[%s2 + $0xfc] sm:$0xf]
    %v122 = vld [vmem:[%s2 + $0x100] sm:$0xf]
    %v123 = vld [vmem:[%s2 + $0x104] sm:$0xf]
    %v124 = vld [vmem:[%s2 + $0x108] sm:$0xf]
    %v125 = vld [vmem:[%s2 + $0x10c] sm:$0xf]
    %v126 = vld [vmem:[%s2 + $0x110] sm:$0xf]
    %v127 = vld [vmem:[%s2 + $0x114] sm:$0xf]
    %v128 = vld [vmem:[%s2 + $0x118] sm:$0xf]
    %v129 = vld [vmem:[%s2 + $0x11c] sm:$0xf]
    %v130 = vld [vmem:[%s2 + $0x120] sm:$0xf]
    %v131 = vld [vmem:[%s2 + $0x124] sm:$0xf]
    %v132 = vld [vmem:[%s2 + $0x128] sm:$0xf]
    %v133 = vld [vmem:[%s2 + $0x12c] sm:$0xf]
    %v134 = vld [vmem:[%s2 + $0x130] sm:$0xf]
    %v135 = vld [vmem:[%s2 + $0x134] sm:$0xf]
    %v136 = vld [vmem:[%s2 + $0x138] sm:$0xf]
    %v137 = vld [vmem:[%s2 + $0x13c] sm:$0xf]
    %v138 = vld [vmem:[%s2 + $0x140] sm:$0xf]
    %v139 = vld [vmem:[%s2 + $0x144] sm:$0xf]
    %v140 = vld [vmem:[%s2 + $0x148] sm:$0xf]
    %v141 = vld [vmem:[%s2 + $0x14c] sm:$0xf]
    %v142 = vld [vmem:[%s2 + $0x150] sm:$0xf]
    %v143 = vld [vmem:[%s2 + $0x154] sm:$0xf]
    %v144 = vld [vmem:[%s2 + $0x158] sm:$0xf]
    %v145 = vld [vmem:[%s2 + $0x15c] sm:$0xf]
    %v146 = vld [vmem:[%s2 + $0x160] sm:$0xf]
    %v147 = vld [vmem:[%s2 + $0x164] sm:$0xf]
    %v148 = vld [vmem:[%s2 + $0x168] sm:$0xf]
    %v149 = vld [vmem:[%s2 + $0x16c] sm:$0xf]
    %v150 = vld [vmem:[%s2 + $0x170] sm:$0xf]
    %v151 = vld [vmem:[%s2 + $0x174] sm:$0xf]
    %v152 = vld [vmem:[%s2 + $0x178] sm:$0xf]
    %v153 = vld [vmem:[%s2 + $0x17c] sm:$0xf]
    %v250 = vunpack.c.l.b16 %v58
    %v251 = vunpack.c.l.b16 %v59
    %v252 = vunpack.c.l.b16 %v60
    %v253 = vunpack.c.l.b16 %v61
    %v254 = vunpack.c.l.b16 %v62
    %v255 = vunpack.c.l.b16 %v63
    %v256 = vunpack.c.l.b16 %v64
    %v257 = vunpack.c.l.b16 %v65
    %v258 = vunpack.c.l.b16 %v66
    %v259 = vunpack.c.l.b16 %v67
    %v260 = vunpack.c.l.b16 %v68
    %v261 = vunpack.c.l.b16 %v69
    %v262 = vunpack.c.l.b16 %v70
    %v263 = vunpack.c.l.b16 %v71
    %v264 = vunpack.c.l.b16 %v72
    %v265 = vunpack.c.l.b16 %v73
    %v266 = vunpack.c.l.b16 %v74
    %v267 = vunpack.c.l.b16 %v75
    %v268 = vunpack.c.l.b16 %v76
    %v269 = vunpack.c.l.b16 %v77
    %v270 = vunpack.c.l.b16 %v78
    %v271 = vunpack.c.l.b16 %v79
    %v272 = vunpack.c.l.b16 %v80
    %v273 = vunpack.c.l.b16 %v81
    %v274 = vunpack.c.l.b16 %v82
    %v275 = vunpack.c.l.b16 %v83
    %v276 = vunpack.c.l.b16 %v84
    %v277 = vunpack.c.l.b16 %v85
    %v278 = vunpack.c.l.b16 %v86
    %v279 = vunpack.c.l.b16 %v87
    %v280 = vunpack.c.l.b16 %v88
    %v281 = vunpack.c.l.b16 %v89
    %v282 = vunpack.c.l.b16 %v90
    %v283 = vunpack.c.l.b16 %v91
    %v284 = vunpack.c.l.b16 %v92
    %v285 = vunpack.c.l.b16 %v93
    %v286 = vunpack.c.l.b16 %v94
    %v287 = vunpack.c.l.b16 %v95
    %v288 = vunpack.c.l.b16 %v96
    %v289 = vunpack.c.l.b16 %v97
    %v290 = vunpack.c.l.b16 %v98
    %v291 = vunpack.c.l.b16 %v99
    %v292 = vunpack.c.l.b16 %v100
    %v293 = vunpack.c.l.b16 %v101
    %v294 = vunpack.c.l.b16 %v102
    %v295 = vunpack.c.l.b16 %v103
    %v296 = vunpack.c.l.b16 %v104
    %v297 = vunpack.c.l.b16 %v105
    %v298 = vunpack.c.l.b16 %v106
    %v299 = vunpack.c.l.b16 %v107
    %v300 = vunpack.c.l.b16 %v108
    %v301 = vunpack.c.l.b16 %v109
    %v302 = vunpack.c.l.b16 %v110
    %v303 = vunpack.c.l.b16 %v111
    %v304 = vunpack.c.l.b16 %v112
    %v305 = vunpack.c.l.b16 %v113
    %v306 = vunpack.c.l.b16 %v114
    %v307 = vunpack.c.l.b16 %v115
    %v308 = vunpack.c.l.b16 %v116
    %v309 = vunpack.c.l.b16 %v117
    %v310 = vunpack.c.l.b16 %v118
    %v311 = vunpack.c.l.b16 %v119
    %v312 = vunpack.c.l.b16 %v120
    %v313 = vunpack.c.l.b16 %v121
    %v314 = vunpack.c.l.b16 %v122
    %v315 = vunpack.c.l.b16 %v123
    %v316 = vunpack.c.l.b16 %v124
    %v317 = vunpack.c.l.b16 %v125
    %v318 = vunpack.c.l.b16 %v126
    %v319 = vunpack.c.l.b16 %v127
    %v320 = vunpack.c.l.b16 %v128
    %v321 = vunpack.c.l.b16 %v129
    %v322 = vunpack.c.l.b16 %v130
    %v323 = vunpack.c.l.b16 %v131
    %v324 = vunpack.c.l.b16 %v132
    %v325 = vunpack.c.l.b16 %v133
    %v326 = vunpack.c.l.b16 %v134
    %v327 = vunpack.c.l.b16 %v135
    %v328 = vunpack.c.l.b16 %v136
    %v329 = vunpack.c.l.b16 %v137
    %v330 = vunpack.c.l.b16 %v138
    %v331 = vunpack.c.l.b16 %v139
    %v332 = vunpack.c.l.b16 %v140
    %v333 = vunpack.c.l.b16 %v141
    %v334 = vunpack.c.l.b16 %v142
    %v335 = vunpack.c.l.b16 %v143
    %v336 = vunpack.c.l.b16 %v144
    %v337 = vunpack.c.l.b16 %v145
    %v338 = vunpack.c.l.b16 %v146
    %v339 = vunpack.c.l.b16 %v147
    %v340 = vunpack.c.l.b16 %v148
    %v341 = vunpack.c.l.b16 %v149
    %v342 = vunpack.c.l.b16 %v150
    %v343 = vunpack.c.l.b16 %v151
    %v344 = vunpack.c.l.b16 %v152
    %v345 = vunpack.c.l.b16 %v153
    %v346 = vpack.c.b16 %v251, %v250
    %v347 = vpack.c.b16 %v253, %v252
    %v348 = vpack.c.b16 %v255, %v254
    %v349 = vpack.c.b16 %v257, %v256
    %v350 = vpack.c.b16 %v259, %v258
    %v351 = vpack.c.b16 %v261, %v260
    %v352 = vpack.c.b16 %v263, %v262
    %v353 = vpack.c.b16 %v265, %v264
    %v354 = vpack.c.b16 %v267, %v266
    %v355 = vpack.c.b16 %v269, %v268
    %v356 = vpack.c.b16 %v271, %v270
    %v357 = vpack.c.b16 %v273, %v272
    %v358 = vpack.c.b16 %v275, %v274
    %v359 = vpack.c.b16 %v277, %v276
    %v360 = vpack.c.b16 %v279, %v278
    %v361 = vpack.c.b16 %v281, %v280
    %v362 = vpack.c.b16 %v283, %v282
    %v363 = vpack.c.b16 %v285, %v284
    %v364 = vpack.c.b16 %v287, %v286
    %v365 = vpack.c.b16 %v289, %v288
    %v366 = vpack.c.b16 %v291, %v290
    %v367 = vpack.c.b16 %v293, %v292
    %v368 = vpack.c.b16 %v295, %v294
    %v369 = vpack.c.b16 %v297, %v296
    %v370 = vpack.c.b16 %v299, %v298
    %v371 = vpack.c.b16 %v301, %v300
    %v372 = vpack.c.b16 %v303, %v302
    %v373 = vpack.c.b16 %v305, %v304
    %v374 = vpack.c.b16 %v307, %v306
    %v375 = vpack.c.b16 %v309, %v308
    %v376 = vpack.c.b16 %v311, %v310
    %v377 = vpack.c.b16 %v313, %v312
    %v378 = vpack.c.b16 %v315, %v314
    %v379 = vpack.c.b16 %v317, %v316
    %v380 = vpack.c.b16 %v319, %v318
    %v381 = vpack.c.b16 %v321, %v320
    %v382 = vpack.c.b16 %v323, %v322
    %v383 = vpack.c.b16 %v325, %v324
    %v384 = vpack.c.b16 %v327, %v326
    %v385 = vpack.c.b16 %v329, %v328
    %v386 = vpack.c.b16 %v331, %v330
    %v387 = vpack.c.b16 %v333, %v332
    %v388 = vpack.c.b16 %v335, %v334
    %v389 = vpack.c.b16 %v337, %v336
    %v390 = vpack.c.b16 %v339, %v338
    %v391 = vpack.c.b16 %v341, %v340
    %v392 = vpack.c.b16 %v343, %v342
    %v393 = vpack.c.b16 %v345, %v344
    %v400 = vunpack.c.l.b16 %v52
    %v401 = vunpack.c.l.b16 %v53
    %v402 = vunpack.c.l.b16 %v54
    %v403 = vunpack.c.l.b16 %v55
    %v404 = vunpack.c.l.b16 %v56
    %v405 = vunpack.c.l.b16 %v57
    %v406 = vpack.c.b16 %v401, %v400
    %v407 = vpack.c.b16 %v403, %v402
    %v408 = vpack.c.b16 %v405, %v404
    %vm412 = vcmask 392192
    %v414 = vsel %vm412, %v346, 0
    %v417 = vsel %vm412, %v347, 0
    %v420 = vsel %vm412, %v348, 0
    %v423 = vsel %vm412, %v349, 0
    %v426 = vsel %vm412, %v350, 0
    %v429 = vsel %vm412, %v351, 0
    %v432 = vsel %vm412, %v352, 0
    %v435 = vsel %vm412, %v353, 0
    %v438 = vsel %vm412, %v354, 0
    %v441 = vsel %vm412, %v355, 0
    %v444 = vsel %vm412, %v356, 0
    %v447 = vsel %vm412, %v357, 0
    %v450 = vsel %vm412, %v358, 0
    %v453 = vsel %vm412, %v359, 0
    %v456 = vsel %vm412, %v360, 0
    %v459 = vsel %vm412, %v361, 0
    %v462 = vsel %vm412, %v362, 0
    %v465 = vsel %vm412, %v363, 0
    %v468 = vsel %vm412, %v364, 0
    %v471 = vsel %vm412, %v365, 0
    %v474 = vsel %vm412, %v366, 0
    %v477 = vsel %vm412, %v367, 0
    %v480 = vsel %vm412, %v368, 0
    %v483 = vsel %vm412, %v369, 0
    %v486 = vsel %vm412, %v370, 0
    %v489 = vsel %vm412, %v371, 0
    %v492 = vsel %vm412, %v372, 0
    %v495 = vsel %vm412, %v373, 0
    %v498 = vsel %vm412, %v374, 0
    %v501 = vsel %vm412, %v375, 0
    %v504 = vsel %vm412, %v376, 0
    %v507 = vsel %vm412, %v377, 0
    %v510 = vsel %vm412, %v378, 0
    %v513 = vsel %vm412, %v379, 0
    %v516 = vsel %vm412, %v380, 0
    %v519 = vsel %vm412, %v381, 0
    %v522 = vsel %vm412, %v382, 0
    %v525 = vsel %vm412, %v383, 0
    %v528 = vsel %vm412, %v384, 0
    %v531 = vsel %vm412, %v385, 0
    %v534 = vsel %vm412, %v386, 0
    %v537 = vsel %vm412, %v387, 0
    %v540 = vsel %vm412, %v388, 0
    %v543 = vsel %vm412, %v389, 0
    %v546 = vsel %vm412, %v390, 0
    %v549 = vsel %vm412, %v391, 0
    %v552 = vsel %vm412, %v392, 0
    %v555 = vsel %vm412, %v393, 0
    %557 = vmatprep.subr.bf16.mxu0 0
    %558 = vmatpush1.bf16.msra.mxu0 0
    %559 = vmatprep.subr.bf16.mxu0 0
    %560 = vmatpush1.bf16.msra.mxu0 0
    %561 = vmatprep.subr.bf16.mxu0 0
    %562 = vmatpush1.bf16.msra.mxu0 0
    %563 = vmatprep.subr.bf16.mxu0 0
    %564 = vmatpush1.bf16.msra.mxu0 0
    %565 = vmatprep.subr.bf16.mxu0 0
    %566 = vmatpush1.bf16.msra.mxu0 0
    %567 = vmatprep.subr.bf16.mxu0 0
    %568 = vmatpush1.bf16.msra.mxu0 %v408
    %569 = vmatprep.subr.bf16.mxu0 0
    %570 = vmatpush1.bf16.msra.mxu0 %v407
    %571 = vmatprep.subr.bf16.mxu0 0
    %572 = vmatpush1.bf16.msra.mxu0 %v406
    %573 = vmatprep.subr.bf16.mxu0 0
    %574 = vmatpush2.bf16.msra.mxu0 0
    %575 = vmatprep.subr.bf16.mxu0 0
    %576 = vmatpush2.bf16.msra.mxu0 0
    %577 = vmatprep.subr.bf16.mxu0 0
    %578 = vmatpush2.bf16.msra.mxu0 0
    %579 = vmatprep.subr.bf16.mxu0 0
    %580 = vmatpush2.bf16.msra.mxu0 0
    %581 = vmatprep.subr.bf16.mxu0 0
    %582 = vmatpush2.bf16.msra.mxu0 0
    %583 = vmatprep.subr.bf16.mxu0 0
    %584 = vmatpush2.bf16.msra.mxu0 0
    %585 = vmatprep.subr.bf16.mxu0 0
    %586 = vmatpush2.bf16.msra.mxu0 0
    %587 = vmatprep.subr.bf16.mxu0 0
    %588 = vmatpush2.bf16.msra.mxu0 0
    %589 = vmatprep.mubr.bf16.mxu0 0
    %590 = vmatmul.mubr.bf16.gmra.mxu0 %v414
    %v591 = vpop.f32.mrf.mxu0
    %v592 = vadd.f32 0.0, %v591
    %v593 = vpop.f32.mrf.mxu0
    %v594 = vpop.f32.mrf.mxu0
    %v595 = vadd.f32 0.0, %v594
    %v596 = vpop.f32.mrf.mxu0
    %597 = vmatprep.mubr.bf16.mxu0 0
    %598 = vmatmul.mubr.bf16.gmra.mxu0 %v417
    %v599 = vpop.f32.mrf.mxu0
    %v600 = vadd.f32 0.0, %v599
    %v601 = vpop.f32.mrf.mxu0
    %v602 = vpop.f32.mrf.mxu0
    %v603 = vadd.f32 0.0, %v602
    %v604 = vpop.f32.mrf.mxu0
    %605 = vmatprep.mubr.bf16.mxu0 0
    %606 = vmatmul.mubr.bf16.gmra.mxu0 %v420
    %v607 = vpop.f32.mrf.mxu0
    %v608 = vadd.f32 0.0, %v607
    %v609 = vpop.f32.mrf.mxu0
    %v610 = vpop.f32.mrf.mxu0
    %v611 = vadd.f32 0.0, %v610
    %v612 = vpop.f32.mrf.mxu0
    %613 = vmatprep.mubr.bf16.mxu0 0
    %614 = vmatmul.mubr.bf16.gmra.mxu0 %v423
    %v615 = vpop.f32.mrf.mxu0
    %v616 = vadd.f32 0.0, %v615
    %v617 = vpop.f32.mrf.mxu0
    %v618 = vpop.f32.mrf.mxu0
    %v619 = vadd.f32 0.0, %v618
    %v620 = vpop.f32.mrf.mxu0
    %621 = vmatprep.mubr.bf16.mxu0 0
    %622 = vmatmul.mubr.bf16.gmra.mxu0 %v426
    %v623 = vpop.f32.mrf.mxu0
    %v624 = vadd.f32 0.0, %v623
    %v625 = vpop.f32.mrf.mxu0
    %v626 = vpop.f32.mrf.mxu0
    %v627 = vadd.f32 0.0, %v626
    %v628 = vpop.f32.mrf.mxu0
    %629 = vmatprep.mubr.bf16.mxu0 0
    %630 = vmatmul.mubr.bf16.gmra.mxu0 %v429
    %v631 = vpop.f32.mrf.mxu0
    %v632 = vadd.f32 0.0, %v631
    %v633 = vpop.f32.mrf.mxu0
    %v634 = vpop.f32.mrf.mxu0
    %v635 = vadd.f32 0.0, %v634
    %v636 = vpop.f32.mrf.mxu0
    %637 = vmatprep.mubr.bf16.mxu0 0
    %638 = vmatmul.mubr.bf16.gmra.mxu0 %v432
    %v639 = vpop.f32.mrf.mxu0
    %v640 = vadd.f32 0.0, %v639
    %v641 = vpop.f32.mrf.mxu0
    %v642 = vpop.f32.mrf.mxu0
    %v643 = vadd.f32 0.0, %v642
    %v644 = vpop.f32.mrf.mxu0
    %645 = vmatprep.mubr.bf16.mxu0 0
    %646 = vmatmul.mubr.bf16.gmra.mxu0 %v435
    %v647 = vpop.f32.mrf.mxu0
    %v648 = vadd.f32 0.0, %v647
    %v649 = vpop.f32.mrf.mxu0
    %v650 = vpop.f32.mrf.mxu0
    %v651 = vadd.f32 0.0, %v650
    %v652 = vpop.f32.mrf.mxu0
    %653 = vmatprep.mubr.bf16.mxu0 0
    %654 = vmatmul.mubr.bf16.gmra.mxu0 %v438
    %v655 = vpop.f32.mrf.mxu0
    %v656 = vadd.f32 0.0, %v655
    %v657 = vpop.f32.mrf.mxu0
    %v658 = vpop.f32.mrf.mxu0
    %v659 = vadd.f32 0.0, %v658
    %v660 = vpop.f32.mrf.mxu0
    %661 = vmatprep.mubr.bf16.mxu0 0
    %662 = vmatmul.mubr.bf16.gmra.mxu0 %v441
    %v663 = vpop.f32.mrf.mxu0
    %v664 = vadd.f32 0.0, %v663
    %v665 = vpop.f32.mrf.mxu0
    %v666 = vpop.f32.mrf.mxu0
    %v667 = vadd.f32 0.0, %v666
    %v668 = vpop.f32.mrf.mxu0
    %669 = vmatprep.mubr.bf16.mxu0 0
    %670 = vmatmul.mubr.bf16.gmra.mxu0 %v444
    %v671 = vpop.f32.mrf.mxu0
    %v672 = vadd.f32 0.0, %v671
    %v673 = vpop.f32.mrf.mxu0
    %v674 = vpop.f32.mrf.mxu0
    %v675 = vadd.f32 0.0, %v674
    %v676 = vpop.f32.mrf.mxu0
    %677 = vmatprep.mubr.bf16.mxu0 0
    %678 = vmatmul.mubr.bf16.gmra.mxu0 %v447
    %v679 = vpop.f32.mrf.mxu0
    %v680 = vadd.f32 0.0, %v679
    %v681 = vpop.f32.mrf.mxu0
    %v682 = vpop.f32.mrf.mxu0
    %v683 = vadd.f32 0.0, %v682
    %v684 = vpop.f32.mrf.mxu0
    %685 = vmatprep.mubr.bf16.mxu0 0
    %686 = vmatmul.mubr.bf16.gmra.mxu0 %v450
    %v687 = vpop.f32.mrf.mxu0
    %v688 = vadd.f32 0.0, %v687
    %v689 = vpop.f32.mrf.mxu0
    %v690 = vpop.f32.mrf.mxu0
    %v691 = vadd.f32 0.0, %v690
    %v692 = vpop.f32.mrf.mxu0
    %693 = vmatprep.mubr.bf16.mxu0 0
    %694 = vmatmul.mubr.bf16.gmra.mxu0 %v453
    %v695 = vpop.f32.mrf.mxu0
    %v696 = vadd.f32 0.0, %v695
    %v697 = vpop.f32.mrf.mxu0
    %v698 = vpop.f32.mrf.mxu0
    %v699 = vadd.f32 0.0, %v698
    %v700 = vpop.f32.mrf.mxu0
    %701 = vmatprep.mubr.bf16.mxu0 0
    %702 = vmatmul.mubr.bf16.gmra.mxu0 %v456
    %v703 = vpop.f32.mrf.mxu0
    %v704 = vadd.f32 0.0, %v703
    %v705 = vpop.f32.mrf.mxu0
    %v706 = vpop.f32.mrf.mxu0
    %v707 = vadd.f32 0.0, %v706
    %v708 = vpop.f32.mrf.mxu0
    %709 = vmatprep.mubr.bf16.mxu0 0
    %710 = vmatmul.mubr.bf16.gmra.mxu0 %v459
    %v711 = vpop.f32.mrf.mxu0
    %v712 = vadd.f32 0.0, %v711
    %v713 = vpop.f32.mrf.mxu0
    %v714 = vpop.f32.mrf.mxu0
    %v715 = vadd.f32 0.0, %v714
    %v716 = vpop.f32.mrf.mxu0
    %717 = vmatprep.mubr.bf16.mxu0 0
    %718 = vmatmul.mubr.bf16.gmra.mxu0 %v462
    %v719 = vpop.f32.mrf.mxu0
    %v720 = vadd.f32 0.0, %v719
    %v721 = vpop.f32.mrf.mxu0
    %v722 = vpop.f32.mrf.mxu0
    %v723 = vadd.f32 0.0, %v722
    %v724 = vpop.f32.mrf.mxu0
    %725 = vmatprep.mubr.bf16.mxu0 0
    %726 = vmatmul.mubr.bf16.gmra.mxu0 %v465
    %v727 = vpop.f32.mrf.mxu0
    %v728 = vadd.f32 0.0, %v727
    %v729 = vpop.f32.mrf.mxu0
    %v730 = vpop.f32.mrf.mxu0
    %v731 = vadd.f32 0.0, %v730
    %v732 = vpop.f32.mrf.mxu0
    %733 = vmatprep.mubr.bf16.mxu0 0
    %734 = vmatmul.mubr.bf16.gmra.mxu0 %v468
    %v735 = vpop.f32.mrf.mxu0
    %v736 = vadd.f32 0.0, %v735
    %v737 = vpop.f32.mrf.mxu0
    %v738 = vpop.f32.mrf.mxu0
    %v739 = vadd.f32 0.0, %v738
    %v740 = vpop.f32.mrf.mxu0
    %741 = vmatprep.mubr.bf16.mxu0 0
    %742 = vmatmul.mubr.bf16.gmra.mxu0 %v471
    %v743 = vpop.f32.mrf.mxu0
    %v744 = vadd.f32 0.0, %v743
    %v745 = vpop.f32.mrf.mxu0
    %v746 = vpop.f32.mrf.mxu0
    %v747 = vadd.f32 0.0, %v746
    %v748 = vpop.f32.mrf.mxu0
    %749 = vmatprep.mubr.bf16.mxu0 0
    %750 = vmatmul.mubr.bf16.gmra.mxu0 %v474
    %v751 = vpop.f32.mrf.mxu0
    %v752 = vadd.f32 0.0, %v751
    %v753 = vpop.f32.mrf.mxu0
    %v754 = vpop.f32.mrf.mxu0
    %v755 = vadd.f32 0.0, %v754
    %v756 = vpop.f32.mrf.mxu0
    %757 = vmatprep.mubr.bf16.mxu0 0
    %758 = vmatmul.mubr.bf16.gmra.mxu0 %v477
    %v759 = vpop.f32.mrf.mxu0
    %v760 = vadd.f32 0.0, %v759
    %v761 = vpop.f32.mrf.mxu0
    %v762 = vpop.f32.mrf.mxu0
    %v763 = vadd.f32 0.0, %v762
    %v764 = vpop.f32.mrf.mxu0
    %765 = vmatprep.mubr.bf16.mxu0 0
    %766 = vmatmul.mubr.bf16.gmra.mxu0 %v480
    %v767 = vpop.f32.mrf.mxu0
    %v768 = vadd.f32 0.0, %v767
    %v769 = vpop.f32.mrf.mxu0
    %v770 = vpop.f32.mrf.mxu0
    %v771 = vadd.f32 0.0, %v770
    %v772 = vpop.f32.mrf.mxu0
    %773 = vmatprep.mubr.bf16.mxu0 0
    %774 = vmatmul.mubr.bf16.gmra.mxu0 %v483
    %v775 = vpop.f32.mrf.mxu0
    %v776 = vadd.f32 0.0, %v775
    %v777 = vpop.f32.mrf.mxu0
    %v778 = vpop.f32.mrf.mxu0
    %v779 = vadd.f32 0.0, %v778
    %v780 = vpop.f32.mrf.mxu0
    %781 = vmatprep.mubr.bf16.mxu0 0
    %782 = vmatmul.mubr.bf16.gmra.mxu0 %v486
    %v783 = vpop.f32.mrf.mxu0
    %v784 = vadd.f32 0.0, %v783
    %v785 = vpop.f32.mrf.mxu0
    %v786 = vpop.f32.mrf.mxu0
    %v787 = vadd.f32 0.0, %v786
    %v788 = vpop.f32.mrf.mxu0
    %789 = vmatprep.mubr.bf16.mxu0 0
    %790 = vmatmul.mubr.bf16.gmra.mxu0 %v489
    %v791 = vpop.f32.mrf.mxu0
    %v792 = vadd.f32 0.0, %v791
    %v793 = vpop.f32.mrf.mxu0
    %v794 = vpop.f32.mrf.mxu0
    %v795 = vadd.f32 0.0, %v794
    %v796 = vpop.f32.mrf.mxu0
    %797 = vmatprep.mubr.bf16.mxu0 0
    %798 = vmatmul.mubr.bf16.gmra.mxu0 %v492
    %v799 = vpop.f32.mrf.mxu0
    %v800 = vadd.f32 0.0, %v799
    %v801 = vpop.f32.mrf.mxu0
    %v802 = vpop.f32.mrf.mxu0
    %v803 = vadd.f32 0.0, %v802
    %v804 = vpop.f32.mrf.mxu0
    %805 = vmatprep.mubr.bf16.mxu0 0
    %806 = vmatmul.mubr.bf16.gmra.mxu0 %v495
    %v807 = vpop.f32.mrf.mxu0
    %v808 = vadd.f32 0.0, %v807
    %v809 = vpop.f32.mrf.mxu0
    %v810 = vpop.f32.mrf.mxu0
    %v811 = vadd.f32 0.0, %v810
    %v812 = vpop.f32.mrf.mxu0
    %813 = vmatprep.mubr.bf16.mxu0 0
    %814 = vmatmul.mubr.bf16.gmra.mxu0 %v498
    %v815 = vpop.f32.mrf.mxu0
    %v816 = vadd.f32 0.0, %v815
    %v817 = vpop.f32.mrf.mxu0
    %v818 = vpop.f32.mrf.mxu0
    %v819 = vadd.f32 0.0, %v818
    %v820 = vpop.f32.mrf.mxu0
    %821 = vmatprep.mubr.bf16.mxu0 0
    %822 = vmatmul.mubr.bf16.gmra.mxu0 %v501
    %v823 = vpop.f32.mrf.mxu0
    %v824 = vadd.f32 0.0, %v823
    %v825 = vpop.f32.mrf.mxu0
    %v826 = vpop.f32.mrf.mxu0
    %v827 = vadd.f32 0.0, %v826
    %v828 = vpop.f32.mrf.mxu0
    %829 = vmatprep.mubr.bf16.mxu0 0
    %830 = vmatmul.mubr.bf16.gmra.mxu0 %v504
    %v831 = vpop.f32.mrf.mxu0
    %v832 = vadd.f32 0.0, %v831
    %v833 = vpop.f32.mrf.mxu0
    %v834 = vpop.f32.mrf.mxu0
    %v835 = vadd.f32 0.0, %v834
    %v836 = vpop.f32.mrf.mxu0
    %837 = vmatprep.mubr.bf16.mxu0 0
    %838 = vmatmul.mubr.bf16.gmra.mxu0 %v507
    %v839 = vpop.f32.mrf.mxu0
    %v840 = vadd.f32 0.0, %v839
    %v841 = vpop.f32.mrf.mxu0
    %v842 = vpop.f32.mrf.mxu0
    %v843 = vadd.f32 0.0, %v842
    %v844 = vpop.f32.mrf.mxu0
    %845 = vmatprep.mubr.bf16.mxu0 0
    %846 = vmatmul.mubr.bf16.gmra.mxu0 %v510
    %v847 = vpop.f32.mrf.mxu0
    %v848 = vadd.f32 0.0, %v847
    %v849 = vpop.f32.mrf.mxu0
    %v850 = vpop.f32.mrf.mxu0
    %v851 = vadd.f32 0.0, %v850
    %v852 = vpop.f32.mrf.mxu0
    %853 = vmatprep.mubr.bf16.mxu0 0
    %854 = vmatmul.mubr.bf16.gmra.mxu0 %v513
    %v855 = vpop.f32.mrf.mxu0
    %v856 = vadd.f32 0.0, %v855
    %v857 = vpop.f32.mrf.mxu0
    %v858 = vpop.f32.mrf.mxu0
    %v859 = vadd.f32 0.0, %v858
    %v860 = vpop.f32.mrf.mxu0
    %861 = vmatprep.mubr.bf16.mxu0 0
    %862 = vmatmul.mubr.bf16.gmra.mxu0 %v516
    %v863 = vpop.f32.mrf.mxu0
    %v864 = vadd.f32 0.0, %v863
    %v865 = vpop.f32.mrf.mxu0
    %v866 = vpop.f32.mrf.mxu0
    %v867 = vadd.f32 0.0, %v866
    %v868 = vpop.f32.mrf.mxu0
    %869 = vmatprep.mubr.bf16.mxu0 0
    %870 = vmatmul.mubr.bf16.gmra.mxu0 %v519
    %v871 = vpop.f32.mrf.mxu0
    %v872 = vadd.f32 0.0, %v871
    %v873 = vpop.f32.mrf.mxu0
    %v874 = vpop.f32.mrf.mxu0
    %v875 = vadd.f32 0.0, %v874
    %v876 = vpop.f32.mrf.mxu0
    %877 = vmatprep.mubr.bf16.mxu0 0
    %878 = vmatmul.mubr.bf16.gmra.mxu0 %v522
    %v879 = vpop.f32.mrf.mxu0
    %v880 = vadd.f32 0.0, %v879
    %v881 = vpop.f32.mrf.mxu0
    %v882 = vpop.f32.mrf.mxu0
    %v883 = vadd.f32 0.0, %v882
    %v884 = vpop.f32.mrf.mxu0
    %885 = vmatprep.mubr.bf16.mxu0 0
    %886 = vmatmul.mubr.bf16.gmra.mxu0 %v525
    %v887 = vpop.f32.mrf.mxu0
    %v888 = vadd.f32 0.0, %v887
    %v889 = vpop.f32.mrf.mxu0
    %v890 = vpop.f32.mrf.mxu0
    %v891 = vadd.f32 0.0, %v890
    %v892 = vpop.f32.mrf.mxu0
    %893 = vmatprep.mubr.bf16.mxu0 0
    %894 = vmatmul.mubr.bf16.gmra.mxu0 %v528
    %v895 = vpop.f32.mrf.mxu0
    %v896 = vadd.f32 0.0, %v895
    %v897 = vpop.f32.mrf.mxu0
    %v898 = vpop.f32.mrf.mxu0
    %v899 = vadd.f32 0.0, %v898
    %v900 = vpop.f32.mrf.mxu0
    %901 = vmatprep.mubr.bf16.mxu0 0
    %902 = vmatmul.mubr.bf16.gmra.mxu0 %v531
    %v903 = vpop.f32.mrf.mxu0
    %v904 = vadd.f32 0.0, %v903
    %v905 = vpop.f32.mrf.mxu0
    %v906 = vpop.f32.mrf.mxu0
    %v907 = vadd.f32 0.0, %v906
    %v908 = vpop.f32.mrf.mxu0
    %909 = vmatprep.mubr.bf16.mxu0 0
    %910 = vmatmul.mubr.bf16.gmra.mxu0 %v534
    %v911 = vpop.f32.mrf.mxu0
    %v912 = vadd.f32 0.0, %v911
    %v913 = vpop.f32.mrf.mxu0
    %v914 = vpop.f32.mrf.mxu0
    %v915 = vadd.f32 0.0, %v914
    %v916 = vpop.f32.mrf.mxu0
    %917 = vmatprep.mubr.bf16.mxu0 0
    %918 = vmatmul.mubr.bf16.gmra.mxu0 %v537
    %v919 = vpop.f32.mrf.mxu0
    %v920 = vadd.f32 0.0, %v919
    %v921 = vpop.f32.mrf.mxu0
    %v922 = vpop.f32.mrf.mxu0
    %v923 = vadd.f32 0.0, %v922
    %v924 = vpop.f32.mrf.mxu0
    %925 = vmatprep.mubr.bf16.mxu0 0
    %926 = vmatmul.mubr.bf16.gmra.mxu0 %v540
    %v927 = vpop.f32.mrf.mxu0
    %v928 = vadd.f32 0.0, %v927
    %v929 = vpop.f32.mrf.mxu0
    %v930 = vpop.f32.mrf.mxu0
    %v931 = vadd.f32 0.0, %v930
    %v932 = vpop.f32.mrf.mxu0
    %933 = vmatprep.mubr.bf16.mxu0 0
    %934 = vmatmul.mubr.bf16.gmra.mxu0 %v543
    %v935 = vpop.f32.mrf.mxu0
    %v936 = vadd.f32 0.0, %v935
    %v937 = vpop.f32.mrf.mxu0
    %v938 = vpop.f32.mrf.mxu0
    %v939 = vadd.f32 0.0, %v938
    %v940 = vpop.f32.mrf.mxu0
    %941 = vmatprep.mubr.bf16.mxu0 0
    %942 = vmatmul.mubr.bf16.gmra.mxu0 %v546
    %v943 = vpop.f32.mrf.mxu0
    %v944 = vadd.f32 0.0, %v943
    %v945 = vpop.f32.mrf.mxu0
    %v946 = vpop.f32.mrf.mxu0
    %v947 = vadd.f32 0.0, %v946
    %v948 = vpop.f32.mrf.mxu0
    %949 = vmatprep.mubr.bf16.mxu0 0
    %950 = vmatmul.mubr.bf16.gmra.mxu0 %v549
    %v951 = vpop.f32.mrf.mxu0
    %v952 = vadd.f32 0.0, %v951
    %v953 = vpop.f32.mrf.mxu0
    %v954 = vpop.f32.mrf.mxu0
    %v955 = vadd.f32 0.0, %v954
    %v956 = vpop.f32.mrf.mxu0
    %957 = vmatprep.mubr.bf16.mxu0 0
    %958 = vmatmul.mubr.bf16.gmra.mxu0 %v552
    %v959 = vpop.f32.mrf.mxu0
    %v960 = vadd.f32 0.0, %v959
    %v961 = vpop.f32.mrf.mxu0
    %v962 = vpop.f32.mrf.mxu0
    %v963 = vadd.f32 0.0, %v962
    %v964 = vpop.f32.mrf.mxu0
    %965 = vmatprep.mubr.bf16.mxu0 0
    %966 = vmatmul.mubr.bf16.gmra.mxu0 %v555
    %v967 = vpop.f32.mrf.mxu0
    %v968 = vadd.f32 0.0, %v967
    %v969 = vpop.f32.mrf.mxu0
    %v970 = vpop.f32.mrf.mxu0
    %v971 = vadd.f32 0.0, %v970
    %v972 = vpop.f32.mrf.mxu0
    %973 = vdwg.mxu0
    %v974 = vmax.f32 %v592, 0.0
    %v975 = vmax.f32 %v595, 0.0
    %v976 = vmax.f32 %v600, 0.0
    %v977 = vmax.f32 %v603, 0.0
    %v978 = vmax.f32 %v608, 0.0
    %v979 = vmax.f32 %v611, 0.0
    %v980 = vmax.f32 %v616, 0.0
    %v981 = vmax.f32 %v619, 0.0
    %v982 = vmax.f32 %v624, 0.0
    %v983 = vmax.f32 %v627, 0.0
    %v984 = vmax.f32 %v632, 0.0
    %v985 = vmax.f32 %v635, 0.0
    %v986 = vmax.f32 %v640, 0.0
    %v987 = vmax.f32 %v643, 0.0
    %v988 = vmax.f32 %v648, 0.0
    %v989 = vmax.f32 %v651, 0.0
    %v990 = vmax.f32 %v656, 0.0
    %v991 = vmax.f32 %v659, 0.0
    %v992 = vmax.f32 %v664, 0.0
    %v993 = vmax.f32 %v667, 0.0
    %v994 = vmax.f32 %v672, 0.0
    %v995 = vmax.f32 %v675, 0.0
    %v996 = vmax.f32 %v680, 0.0
    %v997 = vmax.f32 %v683, 0.0
    %v998 = vmax.f32 %v688, 0.0
    %v999 = vmax.f32 %v691, 0.0
    %v1000 = vmax.f32 %v696, 0.0
    %v1001 = vmax.f32 %v699, 0.0
    %v1002 = vmax.f32 %v704, 0.0
    %v1003 = vmax.f32 %v707, 0.0
    %v1004 = vmax.f32 %v712, 0.0
    %v1005 = vmax.f32 %v715, 0.0
    %v1006 = vmax.f32 %v720, 0.0
    %v1007 = vmax.f32 %v723, 0.0
    %v1008 = vmax.f32 %v728, 0.0
    %v1009 = vmax.f32 %v731, 0.0
    %v1010 = vmax.f32 %v736, 0.0
    %v1011 = vmax.f32 %v739, 0.0
    %v1012 = vmax.f32 %v744, 0.0
    %v1013 = vmax.f32 %v747, 0.0
    %v1014 = vmax.f32 %v752, 0.0
    %v1015 = vmax.f32 %v755, 0.0
    %v1016 = vmax.f32 %v760, 0.0
    %v1017 = vmax.f32 %v763, 0.0
    %v1018 = vmax.f32 %v768, 0.0
    %v1019 = vmax.f32 %v771, 0.0
    %v1020 = vmax.f32 %v776, 0.0
    %v1021 = vmax.f32 %v779, 0.0
    %v1022 = vmax.f32 %v784, 0.0
    %v1023 = vmax.f32 %v787, 0.0
    %v1024 = vmax.f32 %v792, 0.0
    %v1025 = vmax.f32 %v795, 0.0
    %v1026 = vmax.f32 %v800, 0.0
    %v1027 = vmax.f32 %v803, 0.0
    %v1028 = vmax.f32 %v808, 0.0
    %v1029 = vmax.f32 %v811, 0.0
    %v1030 = vmax.f32 %v816, 0.0
    %v1031 = vmax.f32 %v819, 0.0
    %v1032 = vmax.f32 %v824, 0.0
    %v1033 = vmax.f32 %v827, 0.0
    %v1034 = vmax.f32 %v832, 0.0
    %v1035 = vmax.f32 %v835, 0.0
    %v1036 = vmax.f32 %v840, 0.0
    %v1037 = vmax.f32 %v843, 0.0
    %v1038 = vmax.f32 %v848, 0.0
    %v1039 = vmax.f32 %v851, 0.0
    %v1040 = vmax.f32 %v856, 0.0
    %v1041 = vmax.f32 %v859, 0.0
    %v1042 = vmax.f32 %v864, 0.0
    %v1043 = vmax.f32 %v867, 0.0
    %v1044 = vmax.f32 %v872, 0.0
    %v1045 = vmax.f32 %v875, 0.0
    %v1046 = vmax.f32 %v880, 0.0
    %v1047 = vmax.f32 %v883, 0.0
    %v1048 = vmax.f32 %v888, 0.0
    %v1049 = vmax.f32 %v891, 0.0
    %v1050 = vmax.f32 %v896, 0.0
    %v1051 = vmax.f32 %v899, 0.0
    %v1052 = vmax.f32 %v904, 0.0
    %v1053 = vmax.f32 %v907, 0.0
    %v1054 = vmax.f32 %v912, 0.0
    %v1055 = vmax.f32 %v915, 0.0
    %v1056 = vmax.f32 %v920, 0.0
    %v1057 = vmax.f32 %v923, 0.0
    %v1058 = vmax.f32 %v928, 0.0
    %v1059 = vmax.f32 %v931, 0.0
    %v1060 = vmax.f32 %v936, 0.0
    %v1061 = vmax.f32 %v939, 0.0
    %v1062 = vmax.f32 %v944, 0.0
    %v1063 = vmax.f32 %v947, 0.0
    %v1064 = vmax.f32 %v952, 0.0
    %v1065 = vmax.f32 %v955, 0.0
    %v1066 = vmax.f32 %v960, 0.0
    %v1067 = vmax.f32 %v963, 0.0
    %v1068 = vmax.f32 %v968, 0.0
    %v1069 = vmax.f32 %v971, 0.0
    %v1070 = vpack.c.bf16 %v975, %v974
    %v1071 = vpack.c.bf16 %v977, %v976
    %v1072 = vpack.c.bf16 %v979, %v978
    %v1073 = vpack.c.bf16 %v981, %v980
    %v1074 = vpack.c.bf16 %v983, %v982
    %v1075 = vpack.c.bf16 %v985, %v984
    %v1076 = vpack.c.bf16 %v987, %v986
    %v1077 = vpack.c.bf16 %v989, %v988
    %v1078 = vpack.c.bf16 %v991, %v990
    %v1079 = vpack.c.bf16 %v993, %v992
    %v1080 = vpack.c.bf16 %v995, %v994
    %v1081 = vpack.c.bf16 %v997, %v996
    %v1082 = vpack.c.bf16 %v999, %v998
    %v1083 = vpack.c.bf16 %v1001, %v1000
    %v1084 = vpack.c.bf16 %v1003, %v1002
    %v1085 = vpack.c.bf16 %v1005, %v1004
    %v1086 = vpack.c.bf16 %v1007, %v1006
    %v1087 = vpack.c.bf16 %v1009, %v1008
    %v1088 = vpack.c.bf16 %v1011, %v1010
    %v1089 = vpack.c.bf16 %v1013, %v1012
    %v1090 = vpack.c.bf16 %v1015, %v1014
    %v1091 = vpack.c.bf16 %v1017, %v1016
    %v1092 = vpack.c.bf16 %v1019, %v1018
    %v1093 = vpack.c.bf16 %v1021, %v1020
    %v1094 = vpack.c.bf16 %v1023, %v1022
    %v1095 = vpack.c.bf16 %v1025, %v1024
    %v1096 = vpack.c.bf16 %v1027, %v1026
    %v1097 = vpack.c.bf16 %v1029, %v1028
    %v1098 = vpack.c.bf16 %v1031, %v1030
    %v1099 = vpack.c.bf16 %v1033, %v1032
    %v1100 = vpack.c.bf16 %v1035, %v1034
    %v1101 = vpack.c.bf16 %v1037, %v1036
    %v1102 = vpack.c.bf16 %v1039, %v1038
    %v1103 = vpack.c.bf16 %v1041, %v1040
    %v1104 = vpack.c.bf16 %v1043, %v1042
    %v1105 = vpack.c.bf16 %v1045, %v1044
    %v1106 = vpack.c.bf16 %v1047, %v1046
    %v1107 = vpack.c.bf16 %v1049, %v1048
    %v1108 = vpack.c.bf16 %v1051, %v1050
    %v1109 = vpack.c.bf16 %v1053, %v1052
    %v1110 = vpack.c.bf16 %v1055, %v1054
    %v1111 = vpack.c.bf16 %v1057, %v1056
    %v1112 = vpack.c.bf16 %v1059, %v1058
    %v1113 = vpack.c.bf16 %v1061, %v1060
    %v1114 = vpack.c.bf16 %v1063, %v1062
    %v1115 = vpack.c.bf16 %v1065, %v1064
    %v1116 = vpack.c.bf16 %v1067, %v1066
    %v1117 = vpack.c.bf16 %v1069, %v1068
    %v1118 = vld [vmem:[%s3] sm:$0xff]
    %v1119 = vld [vmem:[%s3 + $0x8] sm:$0xf]
    %v1120 = vld [vmem:[%s3 + $0xc] sm:$0xff]
    %v1121 = vld [vmem:[%s3 + $0x14] sm:$0xf]
    %v1122 = vld [vmem:[%s3 + $0x18] sm:$0xff]
    %v1123 = vld [vmem:[%s3 + $0x20] sm:$0xf]
    %v1124 = vld [vmem:[%s3 + $0x24] sm:$0xff]
    %v1125 = vld [vmem:[%s3 + $0x2c] sm:$0xf]
    %v1126 = vld [vmem:[%s3 + $0x30] sm:$0xff]
    %v1127 = vld [vmem:[%s3 + $0x38] sm:$0xf]
    %v1128 = vld [vmem:[%s3 + $0x3c] sm:$0xff]
    %v1129 = vld [vmem:[%s3 + $0x44] sm:$0xf]
    %v1130 = vld [vmem:[%s3 + $0x48] sm:$0xff]
    %v1131 = vld [vmem:[%s3 + $0x50] sm:$0xf]
    %v1132 = vld [vmem:[%s3 + $0x54] sm:$0xff]
    %v1133 = vld [vmem:[%s3 + $0x5c] sm:$0xf]
    %v1134 = vld [vmem:[%s3 + $0x60] sm:$0xff]
    %v1135 = vld [vmem:[%s3 + $0x68] sm:$0xf]
    %v1136 = vld [vmem:[%s3 + $0x6c] sm:$0xff]
    %v1137 = vld [vmem:[%s3 + $0x74] sm:$0xf]
    %v1138 = vld [vmem:[%s3 + $0x78] sm:$0xff]
    %v1139 = vld [vmem:[%s3 + $0x80] sm:$0xf]
    %v1140 = vld [vmem:[%s3 + $0x84] sm:$0xff]
    %v1141 = vld [vmem:[%s3 + $0x8c] sm:$0xf]
    %v1142 = vld [vmem:[%s3 + $0x90] sm:$0xff]
    %v1143 = vld [vmem:[%s3 + $0x98] sm:$0xf]
    %v1144 = vld [vmem:[%s3 + $0x9c] sm:$0xff]
    %v1145 = vld [vmem:[%s3 + $0xa4] sm:$0xf]
    %v1146 = vld [vmem:[%s3 + $0xa8] sm:$0xff]
    %v1147 = vld [vmem:[%s3 + $0xb0] sm:$0xf]
    %v1148 = vld [vmem:[%s3 + $0xb4] sm:$0xff]
    %v1149 = vld [vmem:[%s3 + $0xbc] sm:$0xf]
    %v1150 = vld [vmem:[%s3 + $0xc0] sm:$0xff]
    %v1151 = vld [vmem:[%s3 + $0xc8] sm:$0xf]
    %v1152 = vld [vmem:[%s3 + $0xcc] sm:$0xff]
    %v1153 = vld [vmem:[%s3 + $0xd4] sm:$0xf]
    %v1154 = vld [vmem:[%s3 + $0xd8] sm:$0xff]
    %v1155 = vld [vmem:[%s3 + $0xe0] sm:$0xf]
    %v1156 = vld [vmem:[%s3 + $0xe4] sm:$0xff]
    %v1157 = vld [vmem:[%s3 + $0xec] sm:$0xf]
    %v1158 = vld [vmem:[%s3 + $0xf0] sm:$0xff]
    %v1159 = vld [vmem:[%s3 + $0xf8] sm:$0xf]
    %v1160 = vld [vmem:[%s3 + $0xfc] sm:$0xff]
    %v1161 = vld [vmem:[%s3 + $0x104] sm:$0xf]
    %v1162 = vld [vmem:[%s3 + $0x108] sm:$0xff]
    %v1163 = vld [vmem:[%s3 + $0x110] sm:$0xf]
    %v1164 = vld [vmem:[%s3 + $0x114] sm:$0xff]
    %v1165 = vld [vmem:[%s3 + $0x11c] sm:$0xf]
    %v1166 = vld [vmem:[%s3 + $0x120] sm:$0xff]
    %v1167 = vld [vmem:[%s3 + $0x128] sm:$0xf]
    %v1168 = vld [vmem:[%s3 + $0x12c] sm:$0xff]
    %v1169 = vld [vmem:[%s3 + $0x134] sm:$0xf]
    %v1170 = vld [vmem:[%s3 + $0x138] sm:$0xff]
    %v1171 = vld [vmem:[%s3 + $0x140] sm:$0xf]
    %v1172 = vld [vmem:[%s3 + $0x144] sm:$0xff]
    %v1173 = vld [vmem:[%s3 + $0x14c] sm:$0xf]
    %v1174 = vld [vmem:[%s3 + $0x150] sm:$0xff]
    %v1175 = vld [vmem:[%s3 + $0x158] sm:$0xf]
    %v1176 = vld [vmem:[%s3 + $0x15c] sm:$0xff]
    %v1177 = vld [vmem:[%s3 + $0x164] sm:$0xf]
    %v1178 = vld [vmem:[%s3 + $0x168] sm:$0xff]
    %v1179 = vld [vmem:[%s3 + $0x170] sm:$0xf]
    %v1180 = vld [vmem:[%s3 + $0x174] sm:$0xff]
    %v1181 = vld [vmem:[%s3 + $0x17c] sm:$0xf]
    %v1182 = vld [vmem:[%s3 + $0x180] sm:$0xff]
    %v1183 = vld [vmem:[%s3 + $0x188] sm:$0xf]
    %v1184 = vld [vmem:[%s3 + $0x18c] sm:$0xff]
    %v1185 = vld [vmem:[%s3 + $0x194] sm:$0xf]
    %v1186 = vld [vmem:[%s3 + $0x198] sm:$0xff]
    %v1187 = vld [vmem:[%s3 + $0x1a0] sm:$0xf]
    %v1188 = vld [vmem:[%s3 + $0x1a4] sm:$0xff]
    %v1189 = vld [vmem:[%s3 + $0x1ac] sm:$0xf]
    %v1190 = vld [vmem:[%s3 + $0x1b0] sm:$0xff]
    %v1191 = vld [vmem:[%s3 + $0x1b8] sm:$0xf]
    %v1192 = vld [vmem:[%s3 + $0x1bc] sm:$0xff]
    %v1193 = vld [vmem:[%s3 + $0x1c4] sm:$0xf]
    %v1194 = vld [vmem:[%s3 + $0x1c8] sm:$0xff]
    %v1195 = vld [vmem:[%s3 + $0x1d0] sm:$0xf]
    %v1196 = vld [vmem:[%s3 + $0x1d4] sm:$0xff]
    %v1197 = vld [vmem:[%s3 + $0x1dc] sm:$0xf]
    %v1198 = vld [vmem:[%s3 + $0x1e0] sm:$0xff]
    %v1199 = vld [vmem:[%s3 + $0x1e8] sm:$0xf]
    %v1200 = vld [vmem:[%s3 + $0x1ec] sm:$0xff]
    %v1201 = vld [vmem:[%s3 + $0x1f4] sm:$0xf]
    %v1202 = vld [vmem:[%s3 + $0x1f8] sm:$0xff]
    %v1203 = vld [vmem:[%s3 + $0x200] sm:$0xf]
    %v1204 = vld [vmem:[%s3 + $0x204] sm:$0xff]
    %v1205 = vld [vmem:[%s3 + $0x20c] sm:$0xf]
    %v1206 = vld [vmem:[%s3 + $0x210] sm:$0xff]
    %v1207 = vld [vmem:[%s3 + $0x218] sm:$0xf]
    %v1208 = vld [vmem:[%s3 + $0x21c] sm:$0xff]
    %v1209 = vld [vmem:[%s3 + $0x224] sm:$0xf]
    %v1210 = vld [vmem:[%s3 + $0x228] sm:$0xff]
    %v1211 = vld [vmem:[%s3 + $0x230] sm:$0xf]
    %v1212 = vld [vmem:[%s3 + $0x234] sm:$0xff]
    %v1213 = vld [vmem:[%s3 + $0x23c] sm:$0xf]
    %v1214 = vld [vmem:[%s3 + $0x240] sm:$0xff]
    %v1215 = vld [vmem:[%s3 + $0x248] sm:$0xf]
    %v1216 = vld [vmem:[%s3 + $0x24c] sm:$0xff]
    %v1217 = vld [vmem:[%s3 + $0x254] sm:$0xf]
    %v1218 = vld [vmem:[%s3 + $0x258] sm:$0xff]
    %v1219 = vld [vmem:[%s3 + $0x260] sm:$0xf]
    %v1220 = vld [vmem:[%s3 + $0x264] sm:$0xff]
    %v1221 = vld [vmem:[%s3 + $0x26c] sm:$0xf]
    %v1222 = vld [vmem:[%s3 + $0x270] sm:$0xff]
    %v1223 = vld [vmem:[%s3 + $0x278] sm:$0xf]
    %v1224 = vld [vmem:[%s3 + $0x27c] sm:$0xff]
    %v1225 = vld [vmem:[%s3 + $0x284] sm:$0xf]
    %v1226 = vld [vmem:[%s3 + $0x288] sm:$0xff]
    %v1227 = vld [vmem:[%s3 + $0x290] sm:$0xf]
    %v1228 = vld [vmem:[%s3 + $0x294] sm:$0xff]
    %v1229 = vld [vmem:[%s3 + $0x29c] sm:$0xf]
    %v1230 = vld [vmem:[%s3 + $0x2a0] sm:$0xff]
    %v1231 = vld [vmem:[%s3 + $0x2a8] sm:$0xf]
    %v1232 = vld [vmem:[%s3 + $0x2ac] sm:$0xff]
    %v1233 = vld [vmem:[%s3 + $0x2b4] sm:$0xf]
    %v1234 = vld [vmem:[%s3 + $0x2b8] sm:$0xff]
    %v1235 = vld [vmem:[%s3 + $0x2c0] sm:$0xf]
    %v1236 = vld [vmem:[%s3 + $0x2c4] sm:$0xff]
    %v1237 = vld [vmem:[%s3 + $0x2cc] sm:$0xf]
    %v1238 = vld [vmem:[%s3 + $0x2d0] sm:$0xff]
    %v1239 = vld [vmem:[%s3 + $0x2d8] sm:$0xf]
    %v1240 = vld [vmem:[%s3 + $0x2dc] sm:$0xff]
    %v1241 = vld [vmem:[%s3 + $0x2e4] sm:$0xf]
    %v1242 = vld [vmem:[%s3 + $0x2e8] sm:$0xff]
    %v1243 = vld [vmem:[%s3 + $0x2f0] sm:$0xf]
    %v1244 = vld [vmem:[%s3 + $0x2f4] sm:$0xff]
    %v1245 = vld [vmem:[%s3 + $0x2fc] sm:$0xf]
    %v1374 = vunpack.c.l.b16 %v1118
    %v1375 = vunpack.c.h.b16 %v1118
    %v1376 = vunpack.c.l.b16 %v1119
    %v1377 = vunpack.c.l.b16 %v1120
    %v1378 = vunpack.c.h.b16 %v1120
    %v1379 = vunpack.c.l.b16 %v1121
    %v1380 = vunpack.c.l.b16 %v1122
    %v1381 = vunpack.c.h.b16 %v1122
    %v1382 = vunpack.c.l.b16 %v1123
    %v1383 = vunpack.c.l.b16 %v1124
    %v1384 = vunpack.c.h.b16 %v1124
    %v1385 = vunpack.c.l.b16 %v1125
    %v1386 = vunpack.c.l.b16 %v1126
    %v1387 = vunpack.c.h.b16 %v1126
    %v1388 = vunpack.c.l.b16 %v1127
    %v1389 = vunpack.c.l.b16 %v1128
    %v1390 = vunpack.c.h.b16 %v1128
    %v1391 = vunpack.c.l.b16 %v1129
    %v1392 = vunpack.c.l.b16 %v1130
    %v1393 = vunpack.c.h.b16 %v1130
    %v1394 = vunpack.c.l.b16 %v1131
    %v1395 = vunpack.c.l.b16 %v1132
    %v1396 = vunpack.c.h.b16 %v1132
    %v1397 = vunpack.c.l.b16 %v1133
    %v1398 = vunpack.c.l.b16 %v1134
    %v1399 = vunpack.c.h.b16 %v1134
    %v1400 = vunpack.c.l.b16 %v1135
    %v1401 = vunpack.c.l.b16 %v1136
    %v1402 = vunpack.c.h.b16 %v1136
    %v1403 = vunpack.c.l.b16 %v1137
    %v1404 = vunpack.c.l.b16 %v1138
    %v1405 = vunpack.c.h.b16 %v1138
    %v1406 = vunpack.c.l.b16 %v1139
    %v1407 = vunpack.c.l.b16 %v1140
    %v1408 = vunpack.c.h.b16 %v1140
    %v1409 = vunpack.c.l.b16 %v1141
    %v1410 = vunpack.c.l.b16 %v1142
    %v1411 = vunpack.c.h.b16 %v1142
    %v1412 = vunpack.c.l.b16 %v1143
    %v1413 = vunpack.c.l.b16 %v1144
    %v1414 = vunpack.c.h.b16 %v1144
    %v1415 = vunpack.c.l.b16 %v1145
    %v1416 = vunpack.c.l.b16 %v1146
    %v1417 = vunpack.c.h.b16 %v1146
    %v1418 = vunpack.c.l.b16 %v1147
    %v1419 = vunpack.c.l.b16 %v1148
    %v1420 = vunpack.c.h.b16 %v1148
    %v1421 = vunpack.c.l.b16 %v1149
    %v1422 = vunpack.c.l.b16 %v1150
    %v1423 = vunpack.c.h.b16 %v1150
    %v1424 = vunpack.c.l.b16 %v1151
    %v1425 = vunpack.c.l.b16 %v1152
    %v1426 = vunpack.c.h.b16 %v1152
    %v1427 = vunpack.c.l.b16 %v1153
    %v1428 = vunpack.c.l.b16 %v1154
    %v1429 = vunpack.c.h.b16 %v1154
    %v1430 = vunpack.c.l.b16 %v1155
    %v1431 = vunpack.c.l.b16 %v1156
    %v1432 = vunpack.c.h.b16 %v1156
    %v1433 = vunpack.c.l.b16 %v1157
    %v1434 = vunpack.c.l.b16 %v1158
    %v1435 = vunpack.c.h.b16 %v1158
    %v1436 = vunpack.c.l.b16 %v1159
    %v1437 = vunpack.c.l.b16 %v1160
    %v1438 = vunpack.c.h.b16 %v1160
    %v1439 = vunpack.c.l.b16 %v1161
    %v1440 = vunpack.c.l.b16 %v1162
    %v1441 = vunpack.c.h.b16 %v1162
    %v1442 = vunpack.c.l.b16 %v1163
    %v1443 = vunpack.c.l.b16 %v1164
    %v1444 = vunpack.c.h.b16 %v1164
    %v1445 = vunpack.c.l.b16 %v1165
    %v1446 = vunpack.c.l.b16 %v1166
    %v1447 = vunpack.c.h.b16 %v1166
    %v1448 = vunpack.c.l.b16 %v1167
    %v1449 = vunpack.c.l.b16 %v1168
    %v1450 = vunpack.c.h.b16 %v1168
    %v1451 = vunpack.c.l.b16 %v1169
    %v1452 = vunpack.c.l.b16 %v1170
    %v1453 = vunpack.c.h.b16 %v1170
    %v1454 = vunpack.c.l.b16 %v1171
    %v1455 = vunpack.c.l.b16 %v1172
    %v1456 = vunpack.c.h.b16 %v1172
    %v1457 = vunpack.c.l.b16 %v1173
    %v1458 = vunpack.c.l.b16 %v1174
    %v1459 = vunpack.c.h.b16 %v1174
    %v1460 = vunpack.c.l.b16 %v1175
    %v1461 = vunpack.c.l.b16 %v1176
    %v1462 = vunpack.c.h.b16 %v1176
    %v1463 = vunpack.c.l.b16 %v1177
    %v1464 = vunpack.c.l.b16 %v1178
    %v1465 = vunpack.c.h.b16 %v1178
    %v1466 = vunpack.c.l.b16 %v1179
    %v1467 = vunpack.c.l.b16 %v1180
    %v1468 = vunpack.c.h.b16 %v1180
    %v1469 = vunpack.c.l.b16 %v1181
    %v1470 = vunpack.c.l.b16 %v1182
    %v1471 = vunpack.c.h.b16 %v1182
    %v1472 = vunpack.c.l.b16 %v1183
    %v1473 = vunpack.c.l.b16 %v1184
    %v1474 = vunpack.c.h.b16 %v1184
    %v1475 = vunpack.c.l.b16 %v1185
    %v1476 = vunpack.c.l.b16 %v1186
    %v1477 = vunpack.c.h.b16 %v1186
    %v1478 = vunpack.c.l.b16 %v1187
    %v1479 = vunpack.c.l.b16 %v1188
    %v1480 = vunpack.c.h.b16 %v1188
    %v1481 = vunpack.c.l.b16 %v1189
    %v1482 = vunpack.c.l.b16 %v1190
    %v1483 = vunpack.c.h.b16 %v1190
    %v1484 = vunpack.c.l.b16 %v1191
    %v1485 = vunpack.c.l.b16 %v1192
    %v1486 = vunpack.c.h.b16 %v1192
    %v1487 = vunpack.c.l.b16 %v1193
    %v1488 = vunpack.c.l.b16 %v1194
    %v1489 = vunpack.c.h.b16 %v1194
    %v1490 = vunpack.c.l.b16 %v1195
    %v1491 = vunpack.c.l.b16 %v1196
    %v1492 = vunpack.c.h.b16 %v1196
    %v1493 = vunpack.c.l.b16 %v1197
    %v1494 = vunpack.c.l.b16 %v1198
    %v1495 = vunpack.c.h.b16 %v1198
    %v1496 = vunpack.c.l.b16 %v1199
    %v1497 = vunpack.c.l.b16 %v1200
    %v1498 = vunpack.c.h.b16 %v1200
    %v1499 = vunpack.c.l.b16 %v1201
    %v1500 = vunpack.c.l.b16 %v1202
    %v1501 = vunpack.c.h.b16 %v1202
    %v1502 = vunpack.c.l.b16 %v1203
    %v1503 = vunpack.c.l.b16 %v1204
    %v1504 = vunpack.c.h.b16 %v1204
    %v1505 = vunpack.c.l.b16 %v1205
    %v1506 = vunpack.c.l.b16 %v1206
    %v1507 = vunpack.c.h.b16 %v1206
    %v1508 = vunpack.c.l.b16 %v1207
    %v1509 = vunpack.c.l.b16 %v1208
    %v1510 = vunpack.c.h.b16 %v1208
    %v1511 = vunpack.c.l.b16 %v1209
    %v1512 = vunpack.c.l.b16 %v1210
    %v1513 = vunpack.c.h.b16 %v1210
    %v1514 = vunpack.c.l.b16 %v1211
    %v1515 = vunpack.c.l.b16 %v1212
    %v1516 = vunpack.c.h.b16 %v1212
    %v1517 = vunpack.c.l.b16 %v1213
    %v1518 = vunpack.c.l.b16 %v1214
    %v1519 = vunpack.c.h.b16 %v1214
    %v1520 = vunpack.c.l.b16 %v1215
    %v1521 = vunpack.c.l.b16 %v1216
    %v1522 = vunpack.c.h.b16 %v1216
    %v1523 = vunpack.c.l.b16 %v1217
    %v1524 = vunpack.c.l.b16 %v1218
    %v1525 = vunpack.c.h.b16 %v1218
    %v1526 = vunpack.c.l.b16 %v1219
    %v1527 = vunpack.c.l.b16 %v1220
    %v1528 = vunpack.c.h.b16 %v1220
    %v1529 = vunpack.c.l.b16 %v1221
    %v1530 = vunpack.c.l.b16 %v1222
    %v1531 = vunpack.c.h.b16 %v1222
    %v1532 = vunpack.c.l.b16 %v1223
    %v1533 = vunpack.c.l.b16 %v1224
    %v1534 = vunpack.c.h.b16 %v1224
    %v1535 = vunpack.c.l.b16 %v1225
    %v1536 = vunpack.c.l.b16 %v1226
    %v1537 = vunpack.c.h.b16 %v1226
    %v1538 = vunpack.c.l.b16 %v1227
    %v1539 = vunpack.c.l.b16 %v1228
    %v1540 = vunpack.c.h.b16 %v1228
    %v1541 = vunpack.c.l.b16 %v1229
    %v1542 = vunpack.c.l.b16 %v1230
    %v1543 = vunpack.c.h.b16 %v1230
    %v1544 = vunpack.c.l.b16 %v1231
    %v1545 = vunpack.c.l.b16 %v1232
    %v1546 = vunpack.c.h.b16 %v1232
    %v1547 = vunpack.c.l.b16 %v1233
    %v1548 = vunpack.c.l.b16 %v1234
    %v1549 = vunpack.c.h.b16 %v1234
    %v1550 = vunpack.c.l.b16 %v1235
    %v1551 = vunpack.c.l.b16 %v1236
    %v1552 = vunpack.c.h.b16 %v1236
    %v1553 = vunpack.c.l.b16 %v1237
    %v1554 = vunpack.c.l.b16 %v1238
    %v1555 = vunpack.c.h.b16 %v1238
    %v1556 = vunpack.c.l.b16 %v1239
    %v1557 = vunpack.c.l.b16 %v1240
    %v1558 = vunpack.c.h.b16 %v1240
    %v1559 = vunpack.c.l.b16 %v1241
    %v1560 = vunpack.c.l.b16 %v1242
    %v1561 = vunpack.c.h.b16 %v1242
    %v1562 = vunpack.c.l.b16 %v1243
    %v1563 = vunpack.c.l.b16 %v1244
    %v1564 = vunpack.c.h.b16 %v1244
    %v1565 = vunpack.c.l.b16 %v1245
    %v1566 = vpack.c.b16 %v1377, %v1374
    %v1567 = vpack.c.b16 %v1378, %v1375
    %v1568 = vpack.c.b16 %v1379, %v1376
    %v1569 = vpack.c.b16 %v1383, %v1380
    %v1570 = vpack.c.b16 %v1384, %v1381
    %v1571 = vpack.c.b16 %v1385, %v1382
    %v1572 = vpack.c.b16 %v1389, %v1386
    %v1573 = vpack.c.b16 %v1390, %v1387
    %v1574 = vpack.c.b16 %v1391, %v1388
    %v1575 = vpack.c.b16 %v1395, %v1392
    %v1576 = vpack.c.b16 %v1396, %v1393
    %v1577 = vpack.c.b16 %v1397, %v1394
    %v1578 = vpack.c.b16 %v1401, %v1398
    %v1579 = vpack.c.b16 %v1402, %v1399
    %v1580 = vpack.c.b16 %v1403, %v1400
    %v1581 = vpack.c.b16 %v1407, %v1404
    %v1582 = vpack.c.b16 %v1408, %v1405
    %v1583 = vpack.c.b16 %v1409, %v1406
    %v1584 = vpack.c.b16 %v1413, %v1410
    %v1585 = vpack.c.b16 %v1414, %v1411
    %v1586 = vpack.c.b16 %v1415, %v1412
    %v1587 = vpack.c.b16 %v1419, %v1416
    %v1588 = vpack.c.b16 %v1420, %v1417
    %v1589 = vpack.c.b16 %v1421, %v1418
    %v1590 = vpack.c.b16 %v1425, %v1422
    %v1591 = vpack.c.b16 %v1426, %v1423
    %v1592 = vpack.c.b16 %v1427, %v1424
    %v1593 = vpack.c.b16 %v1431, %v1428
    %v1594 = vpack.c.b16 %v1432, %v1429
    %v1595 = vpack.c.b16 %v1433, %v1430
    %v1596 = vpack.c.b16 %v1437, %v1434
    %v1597 = vpack.c.b16 %v1438, %v1435
    %v1598 = vpack.c.b16 %v1439, %v1436
    %v1599 = vpack.c.b16 %v1443, %v1440
    %v1600 = vpack.c.b16 %v1444, %v1441
    %v1601 = vpack.c.b16 %v1445, %v1442
    %v1602 = vpack.c.b16 %v1449, %v1446
    %v1603 = vpack.c.b16 %v1450, %v1447
    %v1604 = vpack.c.b16 %v1451, %v1448
    %v1605 = vpack.c.b16 %v1455, %v1452
    %v1606 = vpack.c.b16 %v1456, %v1453
    %v1607 = vpack.c.b16 %v1457, %v1454
    %v1608 = vpack.c.b16 %v1461, %v1458
    %v1609 = vpack.c.b16 %v1462, %v1459
    %v1610 = vpack.c.b16 %v1463, %v1460
    %v1611 = vpack.c.b16 %v1467, %v1464
    %v1612 = vpack.c.b16 %v1468, %v1465
    %v1613 = vpack.c.b16 %v1469, %v1466
    %v1614 = vpack.c.b16 %v1473, %v1470
    %v1615 = vpack.c.b16 %v1474, %v1471
    %v1616 = vpack.c.b16 %v1475, %v1472
    %v1617 = vpack.c.b16 %v1479, %v1476
    %v1618 = vpack.c.b16 %v1480, %v1477
    %v1619 = vpack.c.b16 %v1481, %v1478
    %v1620 = vpack.c.b16 %v1485, %v1482
    %v1621 = vpack.c.b16 %v1486, %v1483
    %v1622 = vpack.c.b16 %v1487, %v1484
    %v1623 = vpack.c.b16 %v1491, %v1488
    %v1624 = vpack.c.b16 %v1492, %v1489
    %v1625 = vpack.c.b16 %v1493, %v1490
    %v1626 = vpack.c.b16 %v1497, %v1494
    %v1627 = vpack.c.b16 %v1498, %v1495
    %v1628 = vpack.c.b16 %v1499, %v1496
    %v1629 = vpack.c.b16 %v1503, %v1500
    %v1630 = vpack.c.b16 %v1504, %v1501
    %v1631 = vpack.c.b16 %v1505, %v1502
    %v1632 = vpack.c.b16 %v1509, %v1506
    %v1633 = vpack.c.b16 %v1510, %v1507
    %v1634 = vpack.c.b16 %v1511, %v1508
    %v1635 = vpack.c.b16 %v1515, %v1512
    %v1636 = vpack.c.b16 %v1516, %v1513
    %v1637 = vpack.c.b16 %v1517, %v1514
    %v1638 = vpack.c.b16 %v1521, %v1518
    %v1639 = vpack.c.b16 %v1522, %v1519
    %v1640 = vpack.c.b16 %v1523, %v1520
    %v1641 = vpack.c.b16 %v1527, %v1524
    %v1642 = vpack.c.b16 %v1528, %v1525
    %v1643 = vpack.c.b16 %v1529, %v1526
    %v1644 = vpack.c.b16 %v1533, %v1530
    %v1645 = vpack.c.b16 %v1534, %v1531
    %v1646 = vpack.c.b16 %v1535, %v1532
    %v1647 = vpack.c.b16 %v1539, %v1536
    %v1648 = vpack.c.b16 %v1540, %v1537
    %v1649 = vpack.c.b16 %v1541, %v1538
    %v1650 = vpack.c.b16 %v1545, %v1542
    %v1651 = vpack.c.b16 %v1546, %v1543
    %v1652 = vpack.c.b16 %v1547, %v1544
    %v1653 = vpack.c.b16 %v1551, %v1548
    %v1654 = vpack.c.b16 %v1552, %v1549
    %v1655 = vpack.c.b16 %v1553, %v1550
    %v1656 = vpack.c.b16 %v1557, %v1554
    %v1657 = vpack.c.b16 %v1558, %v1555
    %v1658 = vpack.c.b16 %v1559, %v1556
    %v1659 = vpack.c.b16 %v1563, %v1560
    %v1660 = vpack.c.b16 %v1564, %v1561
    %v1661 = vpack.c.b16 %v1565, %v1562
    %1758 = vmatprep.subr.bf16.mxu0 0
    %1759 = vmatpush1.bf16.msra.mxu0 %v1077
    %1760 = vmatprep.subr.bf16.mxu0 0
    %1761 = vmatpush1.bf16.msra.mxu0 %v1076
    %1762 = vmatprep.subr.bf16.mxu0 0
    %1763 = vmatpush1.bf16.msra.mxu0 %v1075
    %1764 = vmatprep.subr.bf16.mxu0 0
    %1765 = vmatpush1.bf16.msra.mxu0 %v1074
    %1766 = vmatprep.subr.bf16.mxu0 0
    %1767 = vmatpush1.bf16.msra.mxu0 %v1073
    %1768 = vmatprep.subr.bf16.mxu0 0
    %1769 = vmatpush1.bf16.msra.mxu0 %v1072
    %1770 = vmatprep.subr.bf16.mxu0 0
    %1771 = vmatpush1.bf16.msra.mxu0 %v1071
    %1772 = vmatprep.subr.bf16.mxu0 0
    %1773 = vmatpush1.bf16.msra.mxu0 %v1070
    %1774 = vmatprep.subr.bf16.mxu0 0
    %1775 = vmatpush2.bf16.msra.mxu0 %v1085
    %1776 = vmatprep.subr.bf16.mxu0 0
    %1777 = vmatpush2.bf16.msra.mxu0 %v1084
    %1778 = vmatprep.subr.bf16.mxu0 0
    %1779 = vmatpush2.bf16.msra.mxu0 %v1083
    %1780 = vmatprep.subr.bf16.mxu0 0
    %1781 = vmatpush2.bf16.msra.mxu0 %v1082
    %1782 = vmatprep.subr.bf16.mxu0 0
    %1783 = vmatpush2.bf16.msra.mxu0 %v1081
    %1784 = vmatprep.subr.bf16.mxu0 0
    %1785 = vmatpush2.bf16.msra.mxu0 %v1080
    %1786 = vmatprep.subr.bf16.mxu0 0
    %1787 = vmatpush2.bf16.msra.mxu0 %v1079
    %1788 = vmatprep.subr.bf16.mxu0 0
    %1789 = vmatpush2.bf16.msra.mxu0 %v1078
    %1790 = vmatprep.mubr.bf16.mxu0 %v1567
    %1791 = vmatmul.mubr.bf16.gmra.mxu0 %v1566
    %v1792 = vpop.f32.mrf.mxu0
    %v1793 = vadd.f32 0.0, %v1792
    %v1794 = vpop.f32.mrf.mxu0
    %v1795 = vpop.f32.mrf.mxu0
    %v1796 = vadd.f32 0.0, %v1795
    %v1797 = vpop.f32.mrf.mxu0
    %1798 = vmatprep.mubr.bf16.mxu0 %v1570
    %1799 = vmatmul.mubr.bf16.gmra.mxu0 %v1569
    %v1800 = vpop.f32.mrf.mxu0
    %v1801 = vadd.f32 0.0, %v1800
    %v1802 = vpop.f32.mrf.mxu0
    %v1803 = vpop.f32.mrf.mxu0
    %v1804 = vadd.f32 0.0, %v1803
    %v1805 = vpop.f32.mrf.mxu0
    %1806 = vmatprep.mubr.bf16.mxu0 %v1573
    %1807 = vmatmul.mubr.bf16.gmra.mxu0 %v1572
    %v1808 = vpop.f32.mrf.mxu0
    %v1809 = vadd.f32 0.0, %v1808
    %v1810 = vpop.f32.mrf.mxu0
    %v1811 = vpop.f32.mrf.mxu0
    %v1812 = vadd.f32 0.0, %v1811
    %v1813 = vpop.f32.mrf.mxu0
    %1814 = vmatprep.mubr.bf16.mxu0 %v1576
    %1815 = vmatmul.mubr.bf16.gmra.mxu0 %v1575
    %v1816 = vpop.f32.mrf.mxu0
    %v1817 = vadd.f32 0.0, %v1816
    %v1818 = vpop.f32.mrf.mxu0
    %v1819 = vpop.f32.mrf.mxu0
    %v1820 = vadd.f32 0.0, %v1819
    %v1821 = vpop.f32.mrf.mxu0
    %1822 = vmatprep.mubr.bf16.mxu0 %v1579
    %1823 = vmatmul.mubr.bf16.gmra.mxu0 %v1578
    %v1824 = vpop.f32.mrf.mxu0
    %v1825 = vadd.f32 0.0, %v1824
    %v1826 = vpop.f32.mrf.mxu0
    %v1827 = vpop.f32.mrf.mxu0
    %v1828 = vadd.f32 0.0, %v1827
    %v1829 = vpop.f32.mrf.mxu0
    %1830 = vmatprep.mubr.bf16.mxu0 %v1582
    %1831 = vmatmul.mubr.bf16.gmra.mxu0 %v1581
    %v1832 = vpop.f32.mrf.mxu0
    %v1833 = vadd.f32 0.0, %v1832
    %v1834 = vpop.f32.mrf.mxu0
    %v1835 = vpop.f32.mrf.mxu0
    %v1836 = vadd.f32 0.0, %v1835
    %v1837 = vpop.f32.mrf.mxu0
    %1838 = vmatprep.mubr.bf16.mxu0 %v1585
    %1839 = vmatmul.mubr.bf16.gmra.mxu0 %v1584
    %v1840 = vpop.f32.mrf.mxu0
    %v1841 = vadd.f32 0.0, %v1840
    %v1842 = vpop.f32.mrf.mxu0
    %v1843 = vpop.f32.mrf.mxu0
    %v1844 = vadd.f32 0.0, %v1843
    %v1845 = vpop.f32.mrf.mxu0
    %1846 = vmatprep.mubr.bf16.mxu0 %v1588
    %1847 = vmatmul.mubr.bf16.gmra.mxu0 %v1587
    %v1848 = vpop.f32.mrf.mxu0
    %v1849 = vadd.f32 0.0, %v1848
    %v1850 = vpop.f32.mrf.mxu0
    %v1851 = vpop.f32.mrf.mxu0
    %v1852 = vadd.f32 0.0, %v1851
    %v1853 = vpop.f32.mrf.mxu0
    %1854 = vmatprep.mubr.bf16.mxu0 %v1591
    %1855 = vmatmul.mubr.bf16.gmra.mxu0 %v1590
    %v1856 = vpop.f32.mrf.mxu0
    %v1857 = vadd.f32 0.0, %v1856
    %v1858 = vpop.f32.mrf.mxu0
    %v1859 = vpop.f32.mrf.mxu0
    %v1860 = vadd.f32 0.0, %v1859
    %v1861 = vpop.f32.mrf.mxu0
    %1862 = vmatprep.mubr.bf16.mxu0 %v1594
    %1863 = vmatmul.mubr.bf16.gmra.mxu0 %v1593
    %v1864 = vpop.f32.mrf.mxu0
    %v1865 = vadd.f32 0.0, %v1864
    %v1866 = vpop.f32.mrf.mxu0
    %v1867 = vpop.f32.mrf.mxu0
    %v1868 = vadd.f32 0.0, %v1867
    %v1869 = vpop.f32.mrf.mxu0
    %1870 = vmatprep.mubr.bf16.mxu0 %v1597
    %1871 = vmatmul.mubr.bf16.gmra.mxu0 %v1596
    %v1872 = vpop.f32.mrf.mxu0
    %v1873 = vadd.f32 0.0, %v1872
    %v1874 = vpop.f32.mrf.mxu0
    %v1875 = vpop.f32.mrf.mxu0
    %v1876 = vadd.f32 0.0, %v1875
    %v1877 = vpop.f32.mrf.mxu0
    %1878 = vmatprep.mubr.bf16.mxu0 %v1600
    %1879 = vmatmul.mubr.bf16.gmra.mxu0 %v1599
    %v1880 = vpop.f32.mrf.mxu0
    %v1881 = vadd.f32 0.0, %v1880
    %v1882 = vpop.f32.mrf.mxu0
    %v1883 = vpop.f32.mrf.mxu0
    %v1884 = vadd.f32 0.0, %v1883
    %v1885 = vpop.f32.mrf.mxu0
    %1886 = vmatprep.mubr.bf16.mxu0 %v1603
    %1887 = vmatmul.mubr.bf16.gmra.mxu0 %v1602
    %v1888 = vpop.f32.mrf.mxu0
    %v1889 = vadd.f32 0.0, %v1888
    %v1890 = vpop.f32.mrf.mxu0
    %v1891 = vpop.f32.mrf.mxu0
    %v1892 = vadd.f32 0.0, %v1891
    %v1893 = vpop.f32.mrf.mxu0
    %1894 = vmatprep.mubr.bf16.mxu0 %v1606
    %1895 = vmatmul.mubr.bf16.gmra.mxu0 %v1605
    %v1896 = vpop.f32.mrf.mxu0
    %v1897 = vadd.f32 0.0, %v1896
    %v1898 = vpop.f32.mrf.mxu0
    %v1899 = vpop.f32.mrf.mxu0
    %v1900 = vadd.f32 0.0, %v1899
    %v1901 = vpop.f32.mrf.mxu0
    %1902 = vmatprep.mubr.bf16.mxu0 %v1609
    %1903 = vmatmul.mubr.bf16.gmra.mxu0 %v1608
    %v1904 = vpop.f32.mrf.mxu0
    %v1905 = vadd.f32 0.0, %v1904
    %v1906 = vpop.f32.mrf.mxu0
    %v1907 = vpop.f32.mrf.mxu0
    %v1908 = vadd.f32 0.0, %v1907
    %v1909 = vpop.f32.mrf.mxu0
    %1910 = vmatprep.mubr.bf16.mxu0 %v1612
    %1911 = vmatmul.mubr.bf16.gmra.mxu0 %v1611
    %v1912 = vpop.f32.mrf.mxu0
    %v1913 = vadd.f32 0.0, %v1912
    %v1914 = vpop.f32.mrf.mxu0
    %v1915 = vpop.f32.mrf.mxu0
    %v1916 = vadd.f32 0.0, %v1915
    %v1917 = vpop.f32.mrf.mxu0
    %1918 = vmatprep.mubr.bf16.mxu0 %v1615
    %1919 = vmatmul.mubr.bf16.gmra.mxu0 %v1614
    %v1920 = vpop.f32.mrf.mxu0
    %v1921 = vadd.f32 0.0, %v1920
    %v1922 = vpop.f32.mrf.mxu0
    %v1923 = vpop.f32.mrf.mxu0
    %v1924 = vadd.f32 0.0, %v1923
    %v1925 = vpop.f32.mrf.mxu0
    %1926 = vmatprep.mubr.bf16.mxu0 %v1618
    %1927 = vmatmul.mubr.bf16.gmra.mxu0 %v1617
    %v1928 = vpop.f32.mrf.mxu0
    %v1929 = vadd.f32 0.0, %v1928
    %v1930 = vpop.f32.mrf.mxu0
    %v1931 = vpop.f32.mrf.mxu0
    %v1932 = vadd.f32 0.0, %v1931
    %v1933 = vpop.f32.mrf.mxu0
    %1934 = vmatprep.mubr.bf16.mxu0 %v1621
    %1935 = vmatmul.mubr.bf16.gmra.mxu0 %v1620
    %v1936 = vpop.f32.mrf.mxu0
    %v1937 = vadd.f32 0.0, %v1936
    %v1938 = vpop.f32.mrf.mxu0
    %v1939 = vpop.f32.mrf.mxu0
    %v1940 = vadd.f32 0.0, %v1939
    %v1941 = vpop.f32.mrf.mxu0
    %1942 = vmatprep.mubr.bf16.mxu0 %v1624
    %1943 = vmatmul.mubr.bf16.gmra.mxu0 %v1623
    %v1944 = vpop.f32.mrf.mxu0
    %v1945 = vadd.f32 0.0, %v1944
    %v1946 = vpop.f32.mrf.mxu0
    %v1947 = vpop.f32.mrf.mxu0
    %v1948 = vadd.f32 0.0, %v1947
    %v1949 = vpop.f32.mrf.mxu0
    %1950 = vmatprep.mubr.bf16.mxu0 %v1627
    %1951 = vmatmul.mubr.bf16.gmra.mxu0 %v1626
    %v1952 = vpop.f32.mrf.mxu0
    %v1953 = vadd.f32 0.0, %v1952
    %v1954 = vpop.f32.mrf.mxu0
    %v1955 = vpop.f32.mrf.mxu0
    %v1956 = vadd.f32 0.0, %v1955
    %v1957 = vpop.f32.mrf.mxu0
    %1958 = vmatprep.mubr.bf16.mxu0 %v1630
    %1959 = vmatmul.mubr.bf16.gmra.mxu0 %v1629
    %v1960 = vpop.f32.mrf.mxu0
    %v1961 = vadd.f32 0.0, %v1960
    %v1962 = vpop.f32.mrf.mxu0
    %v1963 = vpop.f32.mrf.mxu0
    %v1964 = vadd.f32 0.0, %v1963
    %v1965 = vpop.f32.mrf.mxu0
    %1966 = vmatprep.mubr.bf16.mxu0 %v1633
    %1967 = vmatmul.mubr.bf16.gmra.mxu0 %v1632
    %v1968 = vpop.f32.mrf.mxu0
    %v1969 = vadd.f32 0.0, %v1968
    %v1970 = vpop.f32.mrf.mxu0
    %v1971 = vpop.f32.mrf.mxu0
    %v1972 = vadd.f32 0.0, %v1971
    %v1973 = vpop.f32.mrf.mxu0
    %1974 = vmatprep.mubr.bf16.mxu0 %v1636
    %1975 = vmatmul.mubr.bf16.gmra.mxu0 %v1635
    %v1976 = vpop.f32.mrf.mxu0
    %v1977 = vadd.f32 0.0, %v1976
    %v1978 = vpop.f32.mrf.mxu0
    %v1979 = vpop.f32.mrf.mxu0
    %v1980 = vadd.f32 0.0, %v1979
    %v1981 = vpop.f32.mrf.mxu0
    %1982 = vmatprep.mubr.bf16.mxu0 %v1639
    %1983 = vmatmul.mubr.bf16.gmra.mxu0 %v1638
    %v1984 = vpop.f32.mrf.mxu0
    %v1985 = vadd.f32 0.0, %v1984
    %v1986 = vpop.f32.mrf.mxu0
    %v1987 = vpop.f32.mrf.mxu0
    %v1988 = vadd.f32 0.0, %v1987
    %v1989 = vpop.f32.mrf.mxu0
    %1990 = vmatprep.mubr.bf16.mxu0 %v1642
    %1991 = vmatmul.mubr.bf16.gmra.mxu0 %v1641
    %v1992 = vpop.f32.mrf.mxu0
    %v1993 = vadd.f32 0.0, %v1992
    %v1994 = vpop.f32.mrf.mxu0
    %v1995 = vpop.f32.mrf.mxu0
    %v1996 = vadd.f32 0.0, %v1995
    %v1997 = vpop.f32.mrf.mxu0
    %1998 = vmatprep.mubr.bf16.mxu0 %v1645
    %1999 = vmatmul.mubr.bf16.gmra.mxu0 %v1644
    %v2000 = vpop.f32.mrf.mxu0
    %v2001 = vadd.f32 0.0, %v2000
    %v2002 = vpop.f32.mrf.mxu0
    %v2003 = vpop.f32.mrf.mxu0
    %v2004 = vadd.f32 0.0, %v2003
    %v2005 = vpop.f32.mrf.mxu0
    %2006 = vmatprep.mubr.bf16.mxu0 %v1648
    %2007 = vmatmul.mubr.bf16.gmra.mxu0 %v1647
    %v2008 = vpop.f32.mrf.mxu0
    %v2009 = vadd.f32 0.0, %v2008
    %v2010 = vpop.f32.mrf.mxu0
    %v2011 = vpop.f32.mrf.mxu0
    %v2012 = vadd.f32 0.0, %v2011
    %v2013 = vpop.f32.mrf.mxu0
    %2014 = vmatprep.mubr.bf16.mxu0 %v1651
    %2015 = vmatmul.mubr.bf16.gmra.mxu0 %v1650
    %v2016 = vpop.f32.mrf.mxu0
    %v2017 = vadd.f32 0.0, %v2016
    %v2018 = vpop.f32.mrf.mxu0
    %v2019 = vpop.f32.mrf.mxu0
    %v2020 = vadd.f32 0.0, %v2019
    %v2021 = vpop.f32.mrf.mxu0
    %2022 = vmatprep.mubr.bf16.mxu0 %v1654
    %2023 = vmatmul.mubr.bf16.gmra.mxu0 %v1653
    %v2024 = vpop.f32.mrf.mxu0
    %v2025 = vadd.f32 0.0, %v2024
    %v2026 = vpop.f32.mrf.mxu0
    %v2027 = vpop.f32.mrf.mxu0
    %v2028 = vadd.f32 0.0, %v2027
    %v2029 = vpop.f32.mrf.mxu0
    %2030 = vmatprep.mubr.bf16.mxu0 %v1657
    %2031 = vmatmul.mubr.bf16.gmra.mxu0 %v1656
    %v2032 = vpop.f32.mrf.mxu0
    %v2033 = vadd.f32 0.0, %v2032
    %v2034 = vpop.f32.mrf.mxu0
    %v2035 = vpop.f32.mrf.mxu0
    %v2036 = vadd.f32 0.0, %v2035
    %v2037 = vpop.f32.mrf.mxu0
    %2038 = vmatprep.mubr.bf16.mxu0 %v1660
    %2039 = vmatmul.mubr.bf16.gmra.mxu0 %v1659
    %v2040 = vpop.f32.mrf.mxu0
    %v2041 = vadd.f32 0.0, %v2040
    %v2042 = vpop.f32.mrf.mxu0
    %v2043 = vpop.f32.mrf.mxu0
    %v2044 = vadd.f32 0.0, %v2043
    %v2045 = vpop.f32.mrf.mxu0
    %2046 = vdwg.mxu0
    %2047 = vmatprep.subr.bf16.mxu0 0
    %2048 = vmatpush1.bf16.msra.mxu0 %v1093
    %2049 = vmatprep.subr.bf16.mxu0 0
    %2050 = vmatpush1.bf16.msra.mxu0 %v1092
    %2051 = vmatprep.subr.bf16.mxu0 0
    %2052 = vmatpush1.bf16.msra.mxu0 %v1091
    %2053 = vmatprep.subr.bf16.mxu0 0
    %2054 = vmatpush1.bf16.msra.mxu0 %v1090
    %2055 = vmatprep.subr.bf16.mxu0 0
    %2056 = vmatpush1.bf16.msra.mxu0 %v1089
    %2057 = vmatprep.subr.bf16.mxu0 0
    %2058 = vmatpush1.bf16.msra.mxu0 %v1088
    %2059 = vmatprep.subr.bf16.mxu0 0
    %2060 = vmatpush1.bf16.msra.mxu0 %v1087
    %2061 = vmatprep.subr.bf16.mxu0 0
    %2062 = vmatpush1.bf16.msra.mxu0 %v1086
    %2063 = vmatprep.subr.bf16.mxu0 0
    %2064 = vmatpush2.bf16.msra.mxu0 0
    %2065 = vmatprep.subr.bf16.mxu0 0
    %2066 = vmatpush2.bf16.msra.mxu0 0
    %2067 = vmatprep.subr.bf16.mxu0 0
    %2068 = vmatpush2.bf16.msra.mxu0 0
    %2069 = vmatprep.subr.bf16.mxu0 0
    %2070 = vmatpush2.bf16.msra.mxu0 0
    %2071 = vmatprep.subr.bf16.mxu0 0
    %2072 = vmatpush2.bf16.msra.mxu0 0
    %2073 = vmatprep.subr.bf16.mxu0 0
    %2074 = vmatpush2.bf16.msra.mxu0 0
    %2075 = vmatprep.subr.bf16.mxu0 0
    %2076 = vmatpush2.bf16.msra.mxu0 0
    %2077 = vmatprep.subr.bf16.mxu0 0
    %2078 = vmatpush2.bf16.msra.mxu0 0
    %2079 = vmatprep.mubr.bf16.mxu0 0
    %2080 = vmatmul.mubr.bf16.gmra.mxu0 %v1568
    %v2081 = vpop.f32.mrf.mxu0
    %v2082 = vadd.f32 %v1793, %v2081
    %v2083 = vpop.f32.mrf.mxu0
    %v2084 = vpop.f32.mrf.mxu0
    %v2085 = vadd.f32 %v1796, %v2084
    %v2086 = vpop.f32.mrf.mxu0
    %2087 = vmatprep.mubr.bf16.mxu0 0
    %2088 = vmatmul.mubr.bf16.gmra.mxu0 %v1571
    %v2089 = vpop.f32.mrf.mxu0
    %v2090 = vadd.f32 %v1801, %v2089
    %v2091 = vpop.f32.mrf.mxu0
    %v2092 = vpop.f32.mrf.mxu0
    %v2093 = vadd.f32 %v1804, %v2092
    %v2094 = vpop.f32.mrf.mxu0
    %2095 = vmatprep.mubr.bf16.mxu0 0
    %2096 = vmatmul.mubr.bf16.gmra.mxu0 %v1574
    %v2097 = vpop.f32.mrf.mxu0
    %v2098 = vadd.f32 %v1809, %v2097
    %v2099 = vpop.f32.mrf.mxu0
    %v2100 = vpop.f32.mrf.mxu0
    %v2101 = vadd.f32 %v1812, %v2100
    %v2102 = vpop.f32.mrf.mxu0
    %2103 = vmatprep.mubr.bf16.mxu0 0
    %2104 = vmatmul.mubr.bf16.gmra.mxu0 %v1577
    %v2105 = vpop.f32.mrf.mxu0
    %v2106 = vadd.f32 %v1817, %v2105
    %v2107 = vpop.f32.mrf.mxu0
    %v2108 = vpop.f32.mrf.mxu0
    %v2109 = vadd.f32 %v1820, %v2108
    %v2110 = vpop.f32.mrf.mxu0
    %2111 = vmatprep.mubr.bf16.mxu0 0
    %2112 = vmatmul.mubr.bf16.gmra.mxu0 %v1580
    %v2113 = vpop.f32.mrf.mxu0
    %v2114 = vadd.f32 %v1825, %v2113
    %v2115 = vpop.f32.mrf.mxu0
    %v2116 = vpop.f32.mrf.mxu0
    %v2117 = vadd.f32 %v1828, %v2116
    %v2118 = vpop.f32.mrf.mxu0
    %2119 = vmatprep.mubr.bf16.mxu0 0
    %2120 = vmatmul.mubr.bf16.gmra.mxu0 %v1583
    %v2121 = vpop.f32.mrf.mxu0
    %v2122 = vadd.f32 %v1833, %v2121
    %v2123 = vpop.f32.mrf.mxu0
    %v2124 = vpop.f32.mrf.mxu0
    %v2125 = vadd.f32 %v1836, %v2124
    %v2126 = vpop.f32.mrf.mxu0
    %2127 = vmatprep.mubr.bf16.mxu0 0
    %2128 = vmatmul.mubr.bf16.gmra.mxu0 %v1586
    %v2129 = vpop.f32.mrf.mxu0
    %v2130 = vadd.f32 %v1841, %v2129
    %v2131 = vpop.f32.mrf.mxu0
    %v2132 = vpop.f32.mrf.mxu0
    %v2133 = vadd.f32 %v1844, %v2132
    %v2134 = vpop.f32.mrf.mxu0
    %2135 = vmatprep.mubr.bf16.mxu0 0
    %2136 = vmatmul.mubr.bf16.gmra.mxu0 %v1589
    %v2137 = vpop.f32.mrf.mxu0
    %v2138 = vadd.f32 %v1849, %v2137
    %v2139 = vpop.f32.mrf.mxu0
    %v2140 = vpop.f32.mrf.mxu0
    %v2141 = vadd.f32 %v1852, %v2140
    %v2142 = vpop.f32.mrf.mxu0
    %2143 = vmatprep.mubr.bf16.mxu0 0
    %2144 = vmatmul.mubr.bf16.gmra.mxu0 %v1592
    %v2145 = vpop.f32.mrf.mxu0
    %v2146 = vadd.f32 %v1857, %v2145
    %v2147 = vpop.f32.mrf.mxu0
    %v2148 = vpop.f32.mrf.mxu0
    %v2149 = vadd.f32 %v1860, %v2148
    %v2150 = vpop.f32.mrf.mxu0
    %2151 = vmatprep.mubr.bf16.mxu0 0
    %2152 = vmatmul.mubr.bf16.gmra.mxu0 %v1595
    %v2153 = vpop.f32.mrf.mxu0
    %v2154 = vadd.f32 %v1865, %v2153
    %v2155 = vpop.f32.mrf.mxu0
    %v2156 = vpop.f32.mrf.mxu0
    %v2157 = vadd.f32 %v1868, %v2156
    %v2158 = vpop.f32.mrf.mxu0
    %2159 = vmatprep.mubr.bf16.mxu0 0
    %2160 = vmatmul.mubr.bf16.gmra.mxu0 %v1598
    %v2161 = vpop.f32.mrf.mxu0
    %v2162 = vadd.f32 %v1873, %v2161
    %v2163 = vpop.f32.mrf.mxu0
    %v2164 = vpop.f32.mrf.mxu0
    %v2165 = vadd.f32 %v1876, %v2164
    %v2166 = vpop.f32.mrf.mxu0
    %2167 = vmatprep.mubr.bf16.mxu0 0
    %2168 = vmatmul.mubr.bf16.gmra.mxu0 %v1601
    %v2169 = vpop.f32.mrf.mxu0
    %v2170 = vadd.f32 %v1881, %v2169
    %v2171 = vpop.f32.mrf.mxu0
    %v2172 = vpop.f32.mrf.mxu0
    %v2173 = vadd.f32 %v1884, %v2172
    %v2174 = vpop.f32.mrf.mxu0
    %2175 = vmatprep.mubr.bf16.mxu0 0
    %2176 = vmatmul.mubr.bf16.gmra.mxu0 %v1604
    %v2177 = vpop.f32.mrf.mxu0
    %v2178 = vadd.f32 %v1889, %v2177
    %v2179 = vpop.f32.mrf.mxu0
    %v2180 = vpop.f32.mrf.mxu0
    %v2181 = vadd.f32 %v1892, %v2180
    %v2182 = vpop.f32.mrf.mxu0
    %2183 = vmatprep.mubr.bf16.mxu0 0
    %2184 = vmatmul.mubr.bf16.gmra.mxu0 %v1607
    %v2185 = vpop.f32.mrf.mxu0
    %v2186 = vadd.f32 %v1897, %v2185
    %v2187 = vpop.f32.mrf.mxu0
    %v2188 = vpop.f32.mrf.mxu0
    %v2189 = vadd.f32 %v1900, %v2188
    %v2190 = vpop.f32.mrf.mxu0
    %2191 = vmatprep.mubr.bf16.mxu0 0
    %2192 = vmatmul.mubr.bf16.gmra.mxu0 %v1610
    %v2193 = vpop.f32.mrf.mxu0
    %v2194 = vadd.f32 %v1905, %v2193
    %v2195 = vpop.f32.mrf.mxu0
    %v2196 = vpop.f32.mrf.mxu0
    %v2197 = vadd.f32 %v1908, %v2196
    %v2198 = vpop.f32.mrf.mxu0
    %2199 = vmatprep.mubr.bf16.mxu0 0
    %2200 = vmatmul.mubr.bf16.gmra.mxu0 %v1613
    %v2201 = vpop.f32.mrf.mxu0
    %v2202 = vadd.f32 %v1913, %v2201
    %v2203 = vpop.f32.mrf.mxu0
    %v2204 = vpop.f32.mrf.mxu0
    %v2205 = vadd.f32 %v1916, %v2204
    %v2206 = vpop.f32.mrf.mxu0
    %2207 = vmatprep.mubr.bf16.mxu0 0
    %2208 = vmatmul.mubr.bf16.gmra.mxu0 %v1616
    %v2209 = vpop.f32.mrf.mxu0
    %v2210 = vadd.f32 %v1921, %v2209
    %v2211 = vpop.f32.mrf.mxu0
    %v2212 = vpop.f32.mrf.mxu0
    %v2213 = vadd.f32 %v1924, %v2212
    %v2214 = vpop.f32.mrf.mxu0
    %2215 = vmatprep.mubr.bf16.mxu0 0
    %2216 = vmatmul.mubr.bf16.gmra.mxu0 %v1619
    %v2217 = vpop.f32.mrf.mxu0
    %v2218 = vadd.f32 %v1929, %v2217
    %v2219 = vpop.f32.mrf.mxu0
    %v2220 = vpop.f32.mrf.mxu0
    %v2221 = vadd.f32 %v1932, %v2220
    %v2222 = vpop.f32.mrf.mxu0
    %2223 = vmatprep.mubr.bf16.mxu0 0
    %2224 = vmatmul.mubr.bf16.gmra.mxu0 %v1622
    %v2225 = vpop.f32.mrf.mxu0
    %v2226 = vadd.f32 %v1937, %v2225
    %v2227 = vpop.f32.mrf.mxu0
    %v2228 = vpop.f32.mrf.mxu0
    %v2229 = vadd.f32 %v1940, %v2228
    %v2230 = vpop.f32.mrf.mxu0
    %2231 = vmatprep.mubr.bf16.mxu0 0
    %2232 = vmatmul.mubr.bf16.gmra.mxu0 %v1625
    %v2233 = vpop.f32.mrf.mxu0
    %v2234 = vadd.f32 %v1945, %v2233
    %v2235 = vpop.f32.mrf.mxu0
    %v2236 = vpop.f32.mrf.mxu0
    %v2237 = vadd.f32 %v1948, %v2236
    %v2238 = vpop.f32.mrf.mxu0
    %2239 = vmatprep.mubr.bf16.mxu0 0
    %2240 = vmatmul.mubr.bf16.gmra.mxu0 %v1628
    %v2241 = vpop.f32.mrf.mxu0
    %v2242 = vadd.f32 %v1953, %v2241
    %v2243 = vpop.f32.mrf.mxu0
    %v2244 = vpop.f32.mrf.mxu0
    %v2245 = vadd.f32 %v1956, %v2244
    %v2246 = vpop.f32.mrf.mxu0
    %2247 = vmatprep.mubr.bf16.mxu0 0
    %2248 = vmatmul.mubr.bf16.gmra.mxu0 %v1631
    %v2249 = vpop.f32.mrf.mxu0
    %v2250 = vadd.f32 %v1961, %v2249
    %v2251 = vpop.f32.mrf.mxu0
    %v2252 = vpop.f32.mrf.mxu0
    %v2253 = vadd.f32 %v1964, %v2252
    %v2254 = vpop.f32.mrf.mxu0
    %2255 = vmatprep.mubr.bf16.mxu0 0
    %2256 = vmatmul.mubr.bf16.gmra.mxu0 %v1634
    %v2257 = vpop.f32.mrf.mxu0
    %v2258 = vadd.f32 %v1969, %v2257
    %v2259 = vpop.f32.mrf.mxu0
    %v2260 = vpop.f32.mrf.mxu0
    %v2261 = vadd.f32 %v1972, %v2260
    %v2262 = vpop.f32.mrf.mxu0
    %2263 = vmatprep.mubr.bf16.mxu0 0
    %2264 = vmatmul.mubr.bf16.gmra.mxu0 %v1637
    %v2265 = vpop.f32.mrf.mxu0
    %v2266 = vadd.f32 %v1977, %v2265
    %v2267 = vpop.f32.mrf.mxu0
    %v2268 = vpop.f32.mrf.mxu0
    %v2269 = vadd.f32 %v1980, %v2268
    %v2270 = vpop.f32.mrf.mxu0
    %2271 = vmatprep.mubr.bf16.mxu0 0
    %2272 = vmatmul.mubr.bf16.gmra.mxu0 %v1640
    %v2273 = vpop.f32.mrf.mxu0
    %v2274 = vadd.f32 %v1985, %v2273
    %v2275 = vpop.f32.mrf.mxu0
    %v2276 = vpop.f32.mrf.mxu0
    %v2277 = vadd.f32 %v1988, %v2276
    %v2278 = vpop.f32.mrf.mxu0
    %2279 = vmatprep.mubr.bf16.mxu0 0
    %2280 = vmatmul.mubr.bf16.gmra.mxu0 %v1643
    %v2281 = vpop.f32.mrf.mxu0
    %v2282 = vadd.f32 %v1993, %v2281
    %v2283 = vpop.f32.mrf.mxu0
    %v2284 = vpop.f32.mrf.mxu0
    %v2285 = vadd.f32 %v1996, %v2284
    %v2286 = vpop.f32.mrf.mxu0
    %2287 = vmatprep.mubr.bf16.mxu0 0
    %2288 = vmatmul.mubr.bf16.gmra.mxu0 %v1646
    %v2289 = vpop.f32.mrf.mxu0
    %v2290 = vadd.f32 %v2001, %v2289
    %v2291 = vpop.f32.mrf.mxu0
    %v2292 = vpop.f32.mrf.mxu0
    %v2293 = vadd.f32 %v2004, %v2292
    %v2294 = vpop.f32.mrf.mxu0
    %2295 = vmatprep.mubr.bf16.mxu0 0
    %2296 = vmatmul.mubr.bf16.gmra.mxu0 %v1649
    %v2297 = vpop.f32.mrf.mxu0
    %v2298 = vadd.f32 %v2009, %v2297
    %v2299 = vpop.f32.mrf.mxu0
    %v2300 = vpop.f32.mrf.mxu0
    %v2301 = vadd.f32 %v2012, %v2300
    %v2302 = vpop.f32.mrf.mxu0
    %2303 = vmatprep.mubr.bf16.mxu0 0
    %2304 = vmatmul.mubr.bf16.gmra.mxu0 %v1652
    %v2305 = vpop.f32.mrf.mxu0
    %v2306 = vadd.f32 %v2017, %v2305
    %v2307 = vpop.f32.mrf.mxu0
    %v2308 = vpop.f32.mrf.mxu0
    %v2309 = vadd.f32 %v2020, %v2308
    %v2310 = vpop.f32.mrf.mxu0
    %2311 = vmatprep.mubr.bf16.mxu0 0
    %2312 = vmatmul.mubr.bf16.gmra.mxu0 %v1655
    %v2313 = vpop.f32.mrf.mxu0
    %v2314 = vadd.f32 %v2025, %v2313
    %v2315 = vpop.f32.mrf.mxu0
    %v2316 = vpop.f32.mrf.mxu0
    %v2317 = vadd.f32 %v2028, %v2316
    %v2318 = vpop.f32.mrf.mxu0
    %2319 = vmatprep.mubr.bf16.mxu0 0
    %2320 = vmatmul.mubr.bf16.gmra.mxu0 %v1658
    %v2321 = vpop.f32.mrf.mxu0
    %v2322 = vadd.f32 %v2033, %v2321
    %v2323 = vpop.f32.mrf.mxu0
    %v2324 = vpop.f32.mrf.mxu0
    %v2325 = vadd.f32 %v2036, %v2324
    %v2326 = vpop.f32.mrf.mxu0
    %2327 = vmatprep.mubr.bf16.mxu0 0
    %2328 = vmatmul.mubr.bf16.gmra.mxu0 %v1661
    %v2329 = vpop.f32.mrf.mxu0
    %v2330 = vadd.f32 %v2041, %v2329
    %v2331 = vpop.f32.mrf.mxu0
    %v2332 = vpop.f32.mrf.mxu0
    %v2333 = vadd.f32 %v2044, %v2332
    %v2334 = vpop.f32.mrf.mxu0
    %2335 = vdwg.mxu0
    %v2336 = vmax.f32 %v2082, 0.0
    %v2337 = vmax.f32 %v2085, 0.0
    %v2338 = vmax.f32 %v2090, 0.0
    %v2339 = vmax.f32 %v2093, 0.0
    %v2340 = vmax.f32 %v2098, 0.0
    %v2341 = vmax.f32 %v2101, 0.0
    %v2342 = vmax.f32 %v2106, 0.0
    %v2343 = vmax.f32 %v2109, 0.0
    %v2344 = vmax.f32 %v2114, 0.0
    %v2345 = vmax.f32 %v2117, 0.0
    %v2346 = vmax.f32 %v2122, 0.0
    %v2347 = vmax.f32 %v2125, 0.0
    %v2348 = vmax.f32 %v2130, 0.0
    %v2349 = vmax.f32 %v2133, 0.0
    %v2350 = vmax.f32 %v2138, 0.0
    %v2351 = vmax.f32 %v2141, 0.0
    %v2352 = vmax.f32 %v2146, 0.0
    %v2353 = vmax.f32 %v2149, 0.0
    %v2354 = vmax.f32 %v2154, 0.0
    %v2355 = vmax.f32 %v2157, 0.0
    %v2356 = vmax.f32 %v2162, 0.0
    %v2357 = vmax.f32 %v2165, 0.0
    %v2358 = vmax.f32 %v2170, 0.0
    %v2359 = vmax.f32 %v2173, 0.0
    %v2360 = vmax.f32 %v2178, 0.0
    %v2361 = vmax.f32 %v2181, 0.0
    %v2362 = vmax.f32 %v2186, 0.0
    %v2363 = vmax.f32 %v2189, 0.0
    %v2364 = vmax.f32 %v2194, 0.0
    %v2365 = vmax.f32 %v2197, 0.0
    %v2366 = vmax.f32 %v2202, 0.0
    %v2367 = vmax.f32 %v2205, 0.0
    %v2368 = vmax.f32 %v2210, 0.0
    %v2369 = vmax.f32 %v2213, 0.0
    %v2370 = vmax.f32 %v2218, 0.0
    %v2371 = vmax.f32 %v2221, 0.0
    %v2372 = vmax.f32 %v2226, 0.0
    %v2373 = vmax.f32 %v2229, 0.0
    %v2374 = vmax.f32 %v2234, 0.0
    %v2375 = vmax.f32 %v2237, 0.0
    %v2376 = vmax.f32 %v2242, 0.0
    %v2377 = vmax.f32 %v2245, 0.0
    %v2378 = vmax.f32 %v2250, 0.0
    %v2379 = vmax.f32 %v2253, 0.0
    %v2380 = vmax.f32 %v2258, 0.0
    %v2381 = vmax.f32 %v2261, 0.0
    %v2382 = vmax.f32 %v2266, 0.0
    %v2383 = vmax.f32 %v2269, 0.0
    %v2384 = vmax.f32 %v2274, 0.0
    %v2385 = vmax.f32 %v2277, 0.0
    %v2386 = vmax.f32 %v2282, 0.0
    %v2387 = vmax.f32 %v2285, 0.0
    %v2388 = vmax.f32 %v2290, 0.0
    %v2389 = vmax.f32 %v2293, 0.0
    %v2390 = vmax.f32 %v2298, 0.0
    %v2391 = vmax.f32 %v2301, 0.0
    %v2392 = vmax.f32 %v2306, 0.0
    %v2393 = vmax.f32 %v2309, 0.0
    %v2394 = vmax.f32 %v2314, 0.0
    %v2395 = vmax.f32 %v2317, 0.0
    %v2396 = vmax.f32 %v2322, 0.0
    %v2397 = vmax.f32 %v2325, 0.0
    %v2398 = vmax.f32 %v2330, 0.0
    %v2399 = vmax.f32 %v2333, 0.0
    %v2400 = vld [vmem:[%s4] sm:$0xff]
    %v2401 = vld [vmem:[%s4 + $0x8] sm:$0xf]
    %v2402 = vld [vmem:[%s4 + $0xc] sm:$0xff]
    %v2403 = vld [vmem:[%s4 + $0x14] sm:$0xf]
    %v2404 = vld [vmem:[%s4 + $0x18] sm:$0xff]
    %v2405 = vld [vmem:[%s4 + $0x20] sm:$0xf]
    %v2406 = vld [vmem:[%s4 + $0x24] sm:$0xff]
    %v2407 = vld [vmem:[%s4 + $0x2c] sm:$0xf]
    %v2408 = vld [vmem:[%s4 + $0x30] sm:$0xff]
    %v2409 = vld [vmem:[%s4 + $0x38] sm:$0xf]
    %v2410 = vld [vmem:[%s4 + $0x3c] sm:$0xff]
    %v2411 = vld [vmem:[%s4 + $0x44] sm:$0xf]
    %v2412 = vld [vmem:[%s4 + $0x48] sm:$0xff]
    %v2413 = vld [vmem:[%s4 + $0x50] sm:$0xf]
    %v2414 = vld [vmem:[%s4 + $0x54] sm:$0xff]
    %v2415 = vld [vmem:[%s4 + $0x5c] sm:$0xf]
    %v2416 = vld [vmem:[%s4 + $0x60] sm:$0xff]
    %v2417 = vld [vmem:[%s4 + $0x68] sm:$0xf]
    %v2418 = vld [vmem:[%s4 + $0x6c] sm:$0xff]
    %v2419 = vld [vmem:[%s4 + $0x74] sm:$0xf]
    %v2420 = vld [vmem:[%s4 + $0x78] sm:$0xff]
    %v2421 = vld [vmem:[%s4 + $0x80] sm:$0xf]
    %v2422 = vld [vmem:[%s4 + $0x84] sm:$0xff]
    %v2423 = vld [vmem:[%s4 + $0x8c] sm:$0xf]
    %v2424 = vld [vmem:[%s4 + $0x90] sm:$0xff]
    %v2425 = vld [vmem:[%s4 + $0x98] sm:$0xf]
    %v2426 = vld [vmem:[%s4 + $0x9c] sm:$0xff]
    %v2427 = vld [vmem:[%s4 + $0xa4] sm:$0xf]
    %v2428 = vld [vmem:[%s4 + $0xa8] sm:$0xff]
    %v2429 = vld [vmem:[%s4 + $0xb0] sm:$0xf]
    %v2430 = vld [vmem:[%s4 + $0xb4] sm:$0xff]
    %v2431 = vld [vmem:[%s4 + $0xbc] sm:$0xf]
    %v2432 = vld [vmem:[%s4 + $0xc0] sm:$0xff]
    %v2433 = vld [vmem:[%s4 + $0xc8] sm:$0xf]
    %v2434 = vld [vmem:[%s4 + $0xcc] sm:$0xff]
    %v2435 = vld [vmem:[%s4 + $0xd4] sm:$0xf]
    %v2436 = vld [vmem:[%s4 + $0xd8] sm:$0xff]
    %v2437 = vld [vmem:[%s4 + $0xe0] sm:$0xf]
    %v2438 = vld [vmem:[%s4 + $0xe4] sm:$0xff]
    %v2439 = vld [vmem:[%s4 + $0xec] sm:$0xf]
    %v2440 = vld [vmem:[%s4 + $0xf0] sm:$0xff]
    %v2441 = vld [vmem:[%s4 + $0xf8] sm:$0xf]
    %v2442 = vld [vmem:[%s4 + $0xfc] sm:$0xff]
    %v2443 = vld [vmem:[%s4 + $0x104] sm:$0xf]
    %v2444 = vld [vmem:[%s4 + $0x108] sm:$0xff]
    %v2445 = vld [vmem:[%s4 + $0x110] sm:$0xf]
    %v2446 = vld [vmem:[%s4 + $0x114] sm:$0xff]
    %v2447 = vld [vmem:[%s4 + $0x11c] sm:$0xf]
    %v2448 = vld [vmem:[%s4 + $0x120] sm:$0xff]
    %v2449 = vld [vmem:[%s4 + $0x128] sm:$0xf]
    %v2450 = vld [vmem:[%s4 + $0x12c] sm:$0xff]
    %v2451 = vld [vmem:[%s4 + $0x134] sm:$0xf]
    %v2452 = vld [vmem:[%s4 + $0x138] sm:$0xff]
    %v2453 = vld [vmem:[%s4 + $0x140] sm:$0xf]
    %v2454 = vld [vmem:[%s4 + $0x144] sm:$0xff]
    %v2455 = vld [vmem:[%s4 + $0x14c] sm:$0xf]
    %v2456 = vld [vmem:[%s4 + $0x150] sm:$0xff]
    %v2457 = vld [vmem:[%s4 + $0x158] sm:$0xf]
    %v2458 = vld [vmem:[%s4 + $0x15c] sm:$0xff]
    %v2459 = vld [vmem:[%s4 + $0x164] sm:$0xf]
    %v2460 = vld [vmem:[%s4 + $0x168] sm:$0xff]
    %v2461 = vld [vmem:[%s4 + $0x170] sm:$0xf]
    %v2462 = vld [vmem:[%s4 + $0x174] sm:$0xff]
    %v2463 = vld [vmem:[%s4 + $0x17c] sm:$0xf]
    %v2464 = vld [vmem:[%s4 + $0x180] sm:$0xff]
    %v2465 = vld [vmem:[%s4 + $0x188] sm:$0xf]
    %v2466 = vld [vmem:[%s4 + $0x18c] sm:$0xff]
    %v2467 = vld [vmem:[%s4 + $0x194] sm:$0xf]
    %v2468 = vld [vmem:[%s4 + $0x198] sm:$0xff]
    %v2469 = vld [vmem:[%s4 + $0x1a0] sm:$0xf]
    %v2470 = vld [vmem:[%s4 + $0x1a4] sm:$0xff]
    %v2471 = vld [vmem:[%s4 + $0x1ac] sm:$0xf]
    %v2472 = vld [vmem:[%s4 + $0x1b0] sm:$0xff]
    %v2473 = vld [vmem:[%s4 + $0x1b8] sm:$0xf]
    %v2474 = vld [vmem:[%s4 + $0x1bc] sm:$0xff]
    %v2475 = vld [vmem:[%s4 + $0x1c4] sm:$0xf]
    %v2476 = vld [vmem:[%s4 + $0x1c8] sm:$0xff]
    %v2477 = vld [vmem:[%s4 + $0x1d0] sm:$0xf]
    %v2478 = vld [vmem:[%s4 + $0x1d4] sm:$0xff]
    %v2479 = vld [vmem:[%s4 + $0x1dc] sm:$0xf]
    %v2480 = vld [vmem:[%s4 + $0x1e0] sm:$0xff]
    %v2481 = vld [vmem:[%s4 + $0x1e8] sm:$0xf]
    %v2482 = vld [vmem:[%s4 + $0x1ec] sm:$0xff]
    %v2483 = vld [vmem:[%s4 + $0x1f4] sm:$0xf]
    %v2484 = vld [vmem:[%s4 + $0x1f8] sm:$0xff]
    %v2485 = vld [vmem:[%s4 + $0x200] sm:$0xf]
    %v2486 = vld [vmem:[%s4 + $0x204] sm:$0xff]
    %v2487 = vld [vmem:[%s4 + $0x20c] sm:$0xf]
    %v2488 = vld [vmem:[%s4 + $0x210] sm:$0xff]
    %v2489 = vld [vmem:[%s4 + $0x218] sm:$0xf]
    %v2490 = vld [vmem:[%s4 + $0x21c] sm:$0xff]
    %v2491 = vld [vmem:[%s4 + $0x224] sm:$0xf]
    %v2492 = vld [vmem:[%s4 + $0x228] sm:$0xff]
    %v2493 = vld [vmem:[%s4 + $0x230] sm:$0xf]
    %v2494 = vld [vmem:[%s4 + $0x234] sm:$0xff]
    %v2495 = vld [vmem:[%s4 + $0x23c] sm:$0xf]
    %v2496 = vld [vmem:[%s4 + $0x240] sm:$0xff]
    %v2497 = vld [vmem:[%s4 + $0x248] sm:$0xf]
    %v2498 = vld [vmem:[%s4 + $0x24c] sm:$0xff]
    %v2499 = vld [vmem:[%s4 + $0x254] sm:$0xf]
    %v2500 = vld [vmem:[%s4 + $0x258] sm:$0xff]
    %v2501 = vld [vmem:[%s4 + $0x260] sm:$0xf]
    %v2502 = vld [vmem:[%s4 + $0x264] sm:$0xff]
    %v2503 = vld [vmem:[%s4 + $0x26c] sm:$0xf]
    %v2504 = vld [vmem:[%s4 + $0x270] sm:$0xff]
    %v2505 = vld [vmem:[%s4 + $0x278] sm:$0xf]
    %v2506 = vld [vmem:[%s4 + $0x27c] sm:$0xff]
    %v2507 = vld [vmem:[%s4 + $0x284] sm:$0xf]
    %v2508 = vld [vmem:[%s4 + $0x288] sm:$0xff]
    %v2509 = vld [vmem:[%s4 + $0x290] sm:$0xf]
    %v2510 = vld [vmem:[%s4 + $0x294] sm:$0xff]
    %v2511 = vld [vmem:[%s4 + $0x29c] sm:$0xf]
    %v2512 = vld [vmem:[%s4 + $0x2a0] sm:$0xff]
    %v2513 = vld [vmem:[%s4 + $0x2a8] sm:$0xf]
    %v2514 = vld [vmem:[%s4 + $0x2ac] sm:$0xff]
    %v2515 = vld [vmem:[%s4 + $0x2b4] sm:$0xf]
    %v2516 = vld [vmem:[%s4 + $0x2b8] sm:$0xff]
    %v2517 = vld [vmem:[%s4 + $0x2c0] sm:$0xf]
    %v2518 = vld [vmem:[%s4 + $0x2c4] sm:$0xff]
    %v2519 = vld [vmem:[%s4 + $0x2cc] sm:$0xf]
    %v2520 = vld [vmem:[%s4 + $0x2d0] sm:$0xff]
    %v2521 = vld [vmem:[%s4 + $0x2d8] sm:$0xf]
    %v2522 = vld [vmem:[%s4 + $0x2dc] sm:$0xff]
    %v2523 = vld [vmem:[%s4 + $0x2e4] sm:$0xf]
    %v2524 = vld [vmem:[%s4 + $0x2e8] sm:$0xff]
    %v2525 = vld [vmem:[%s4 + $0x2f0] sm:$0xf]
    %v2526 = vld [vmem:[%s4 + $0x2f4] sm:$0xff]
    %v2527 = vld [vmem:[%s4 + $0x2fc] sm:$0xf]
    %v2656 = vunpack.c.l.b16 %v2400
    %v2657 = vunpack.c.h.b16 %v2400
    %v2658 = vunpack.c.l.b16 %v2401
    %v2659 = vunpack.c.l.b16 %v2402
    %v2660 = vunpack.c.h.b16 %v2402
    %v2661 = vunpack.c.l.b16 %v2403
    %v2662 = vunpack.c.l.b16 %v2404
    %v2663 = vunpack.c.h.b16 %v2404
    %v2664 = vunpack.c.l.b16 %v2405
    %v2665 = vunpack.c.l.b16 %v2406
    %v2666 = vunpack.c.h.b16 %v2406
    %v2667 = vunpack.c.l.b16 %v2407
    %v2668 = vunpack.c.l.b16 %v2408
    %v2669 = vunpack.c.h.b16 %v2408
    %v2670 = vunpack.c.l.b16 %v2409
    %v2671 = vunpack.c.l.b16 %v2410
    %v2672 = vunpack.c.h.b16 %v2410
    %v2673 = vunpack.c.l.b16 %v2411
    %v2674 = vunpack.c.l.b16 %v2412
    %v2675 = vunpack.c.h.b16 %v2412
    %v2676 = vunpack.c.l.b16 %v2413
    %v2677 = vunpack.c.l.b16 %v2414
    %v2678 = vunpack.c.h.b16 %v2414
    %v2679 = vunpack.c.l.b16 %v2415
    %v2680 = vunpack.c.l.b16 %v2416
    %v2681 = vunpack.c.h.b16 %v2416
    %v2682 = vunpack.c.l.b16 %v2417
    %v2683 = vunpack.c.l.b16 %v2418
    %v2684 = vunpack.c.h.b16 %v2418
    %v2685 = vunpack.c.l.b16 %v2419
    %v2686 = vunpack.c.l.b16 %v2420
    %v2687 = vunpack.c.h.b16 %v2420
    %v2688 = vunpack.c.l.b16 %v2421
    %v2689 = vunpack.c.l.b16 %v2422
    %v2690 = vunpack.c.h.b16 %v2422
    %v2691 = vunpack.c.l.b16 %v2423
    %v2692 = vunpack.c.l.b16 %v2424
    %v2693 = vunpack.c.h.b16 %v2424
    %v2694 = vunpack.c.l.b16 %v2425
    %v2695 = vunpack.c.l.b16 %v2426
    %v2696 = vunpack.c.h.b16 %v2426
    %v2697 = vunpack.c.l.b16 %v2427
    %v2698 = vunpack.c.l.b16 %v2428
    %v2699 = vunpack.c.h.b16 %v2428
    %v2700 = vunpack.c.l.b16 %v2429
    %v2701 = vunpack.c.l.b16 %v2430
    %v2702 = vunpack.c.h.b16 %v2430
    %v2703 = vunpack.c.l.b16 %v2431
    %v2704 = vunpack.c.l.b16 %v2432
    %v2705 = vunpack.c.h.b16 %v2432
    %v2706 = vunpack.c.l.b16 %v2433
    %v2707 = vunpack.c.l.b16 %v2434
    %v2708 = vunpack.c.h.b16 %v2434
    %v2709 = vunpack.c.l.b16 %v2435
    %v2710 = vunpack.c.l.b16 %v2436
    %v2711 = vunpack.c.h.b16 %v2436
    %v2712 = vunpack.c.l.b16 %v2437
    %v2713 = vunpack.c.l.b16 %v2438
    %v2714 = vunpack.c.h.b16 %v2438
    %v2715 = vunpack.c.l.b16 %v2439
    %v2716 = vunpack.c.l.b16 %v2440
    %v2717 = vunpack.c.h.b16 %v2440
    %v2718 = vunpack.c.l.b16 %v2441
    %v2719 = vunpack.c.l.b16 %v2442
    %v2720 = vunpack.c.h.b16 %v2442
    %v2721 = vunpack.c.l.b16 %v2443
    %v2722 = vunpack.c.l.b16 %v2444
    %v2723 = vunpack.c.h.b16 %v2444
    %v2724 = vunpack.c.l.b16 %v2445
    %v2725 = vunpack.c.l.b16 %v2446
    %v2726 = vunpack.c.h.b16 %v2446
    %v2727 = vunpack.c.l.b16 %v2447
    %v2728 = vunpack.c.l.b16 %v2448
    %v2729 = vunpack.c.h.b16 %v2448
    %v2730 = vunpack.c.l.b16 %v2449
    %v2731 = vunpack.c.l.b16 %v2450
    %v2732 = vunpack.c.h.b16 %v2450
    %v2733 = vunpack.c.l.b16 %v2451
    %v2734 = vunpack.c.l.b16 %v2452
    %v2735 = vunpack.c.h.b16 %v2452
    %v2736 = vunpack.c.l.b16 %v2453
    %v2737 = vunpack.c.l.b16 %v2454
    %v2738 = vunpack.c.h.b16 %v2454
    %v2739 = vunpack.c.l.b16 %v2455
    %v2740 = vunpack.c.l.b16 %v2456
    %v2741 = vunpack.c.h.b16 %v2456
    %v2742 = vunpack.c.l.b16 %v2457
    %v2743 = vunpack.c.l.b16 %v2458
    %v2744 = vunpack.c.h.b16 %v2458
    %v2745 = vunpack.c.l.b16 %v2459
    %v2746 = vunpack.c.l.b16 %v2460
    %v2747 = vunpack.c.h.b16 %v2460
    %v2748 = vunpack.c.l.b16 %v2461
    %v2749 = vunpack.c.l.b16 %v2462
    %v2750 = vunpack.c.h.b16 %v2462
    %v2751 = vunpack.c.l.b16 %v2463
    %v2752 = vunpack.c.l.b16 %v2464
    %v2753 = vunpack.c.h.b16 %v2464
    %v2754 = vunpack.c.l.b16 %v2465
    %v2755 = vunpack.c.l.b16 %v2466
    %v2756 = vunpack.c.h.b16 %v2466
    %v2757 = vunpack.c.l.b16 %v2467
    %v2758 = vunpack.c.l.b16 %v2468
    %v2759 = vunpack.c.h.b16 %v2468
    %v2760 = vunpack.c.l.b16 %v2469
    %v2761 = vunpack.c.l.b16 %v2470
    %v2762 = vunpack.c.h.b16 %v2470
    %v2763 = vunpack.c.l.b16 %v2471
    %v2764 = vunpack.c.l.b16 %v2472
    %v2765 = vunpack.c.h.b16 %v2472
    %v2766 = vunpack.c.l.b16 %v2473
    %v2767 = vunpack.c.l.b16 %v2474
    %v2768 = vunpack.c.h.b16 %v2474
    %v2769 = vunpack.c.l.b16 %v2475
    %v2770 = vunpack.c.l.b16 %v2476
    %v2771 = vunpack.c.h.b16 %v2476
    %v2772 = vunpack.c.l.b16 %v2477
    %v2773 = vunpack.c.l.b16 %v2478
    %v2774 = vunpack.c.h.b16 %v2478
    %v2775 = vunpack.c.l.b16 %v2479
    %v2776 = vunpack.c.l.b16 %v2480
    %v2777 = vunpack.c.h.b16 %v2480
    %v2778 = vunpack.c.l.b16 %v2481
    %v2779 = vunpack.c.l.b16 %v2482
    %v2780 = vunpack.c.h.b16 %v2482
    %v2781 = vunpack.c.l.b16 %v2483
    %v2782 = vunpack.c.l.b16 %v2484
    %v2783 = vunpack.c.h.b16 %v2484
    %v2784 = vunpack.c.l.b16 %v2485
    %v2785 = vunpack.c.l.b16 %v2486
    %v2786 = vunpack.c.h.b16 %v2486
    %v2787 = vunpack.c.l.b16 %v2487
    %v2788 = vunpack.c.l.b16 %v2488
    %v2789 = vunpack.c.h.b16 %v2488
    %v2790 = vunpack.c.l.b16 %v2489
    %v2791 = vunpack.c.l.b16 %v2490
    %v2792 = vunpack.c.h.b16 %v2490
    %v2793 = vunpack.c.l.b16 %v2491
    %v2794 = vunpack.c.l.b16 %v2492
    %v2795 = vunpack.c.h.b16 %v2492
    %v2796 = vunpack.c.l.b16 %v2493
    %v2797 = vunpack.c.l.b16 %v2494
    %v2798 = vunpack.c.h.b16 %v2494
    %v2799 = vunpack.c.l.b16 %v2495
    %v2800 = vunpack.c.l.b16 %v2496
    %v2801 = vunpack.c.h.b16 %v2496
    %v2802 = vunpack.c.l.b16 %v2497
    %v2803 = vunpack.c.l.b16 %v2498
    %v2804 = vunpack.c.h.b16 %v2498
    %v2805 = vunpack.c.l.b16 %v2499
    %v2806 = vunpack.c.l.b16 %v2500
    %v2807 = vunpack.c.h.b16 %v2500
    %v2808 = vunpack.c.l.b16 %v2501
    %v2809 = vunpack.c.l.b16 %v2502
    %v2810 = vunpack.c.h.b16 %v2502
    %v2811 = vunpack.c.l.b16 %v2503
    %v2812 = vunpack.c.l.b16 %v2504
    %v2813 = vunpack.c.h.b16 %v2504
    %v2814 = vunpack.c.l.b16 %v2505
    %v2815 = vunpack.c.l.b16 %v2506
    %v2816 = vunpack.c.h.b16 %v2506
    %v2817 = vunpack.c.l.b16 %v2507
    %v2818 = vunpack.c.l.b16 %v2508
    %v2819 = vunpack.c.h.b16 %v2508
    %v2820 = vunpack.c.l.b16 %v2509
    %v2821 = vunpack.c.l.b16 %v2510
    %v2822 = vunpack.c.h.b16 %v2510
    %v2823 = vunpack.c.l.b16 %v2511
    %v2824 = vunpack.c.l.b16 %v2512
    %v2825 = vunpack.c.h.b16 %v2512
    %v2826 = vunpack.c.l.b16 %v2513
    %v2827 = vunpack.c.l.b16 %v2514
    %v2828 = vunpack.c.h.b16 %v2514
    %v2829 = vunpack.c.l.b16 %v2515
    %v2830 = vunpack.c.l.b16 %v2516
    %v2831 = vunpack.c.h.b16 %v2516
    %v2832 = vunpack.c.l.b16 %v2517
    %v2833 = vunpack.c.l.b16 %v2518
    %v2834 = vunpack.c.h.b16 %v2518
    %v2835 = vunpack.c.l.b16 %v2519
    %v2836 = vunpack.c.l.b16 %v2520
    %v2837 = vunpack.c.h.b16 %v2520
    %v2838 = vunpack.c.l.b16 %v2521
    %v2839 = vunpack.c.l.b16 %v2522
    %v2840 = vunpack.c.h.b16 %v2522
    %v2841 = vunpack.c.l.b16 %v2523
    %v2842 = vunpack.c.l.b16 %v2524
    %v2843 = vunpack.c.h.b16 %v2524
    %v2844 = vunpack.c.l.b16 %v2525
    %v2845 = vunpack.c.l.b16 %v2526
    %v2846 = vunpack.c.h.b16 %v2526
    %v2847 = vunpack.c.l.b16 %v2527
    %v2848 = vpack.c.b16 %v2659, %v2656
    %v2849 = vpack.c.b16 %v2660, %v2657
    %v2850 = vpack.c.b16 %v2661, %v2658
    %v2851 = vpack.c.b16 %v2665, %v2662
    %v2852 = vpack.c.b16 %v2666, %v2663
    %v2853 = vpack.c.b16 %v2667, %v2664
    %v2854 = vpack.c.b16 %v2671, %v2668
    %v2855 = vpack.c.b16 %v2672, %v2669
    %v2856 = vpack.c.b16 %v2673, %v2670
    %v2857 = vpack.c.b16 %v2677, %v2674
    %v2858 = vpack.c.b16 %v2678, %v2675
    %v2859 = vpack.c.b16 %v2679, %v2676
    %v2860 = vpack.c.b16 %v2683, %v2680
    %v2861 = vpack.c.b16 %v2684, %v2681
    %v2862 = vpack.c.b16 %v2685, %v2682
    %v2863 = vpack.c.b16 %v2689, %v2686
    %v2864 = vpack.c.b16 %v2690, %v2687
    %v2865 = vpack.c.b16 %v2691, %v2688
    %v2866 = vpack.c.b16 %v2695, %v2692
    %v2867 = vpack.c.b16 %v2696, %v2693
    %v2868 = vpack.c.b16 %v2697, %v2694
    %v2869 = vpack.c.b16 %v2701, %v2698
    %v2870 = vpack.c.b16 %v2702, %v2699
    %v2871 = vpack.c.b16 %v2703, %v2700
    %v2872 = vpack.c.b16 %v2707, %v2704
    %v2873 = vpack.c.b16 %v2708, %v2705
    %v2874 = vpack.c.b16 %v2709, %v2706
    %v2875 = vpack.c.b16 %v2713, %v2710
    %v2876 = vpack.c.b16 %v2714, %v2711
    %v2877 = vpack.c.b16 %v2715, %v2712
    %v2878 = vpack.c.b16 %v2719, %v2716
    %v2879 = vpack.c.b16 %v2720, %v2717
    %v2880 = vpack.c.b16 %v2721, %v2718
    %v2881 = vpack.c.b16 %v2725, %v2722
    %v2882 = vpack.c.b16 %v2726, %v2723
    %v2883 = vpack.c.b16 %v2727, %v2724
    %v2884 = vpack.c.b16 %v2731, %v2728
    %v2885 = vpack.c.b16 %v2732, %v2729
    %v2886 = vpack.c.b16 %v2733, %v2730
    %v2887 = vpack.c.b16 %v2737, %v2734
    %v2888 = vpack.c.b16 %v2738, %v2735
    %v2889 = vpack.c.b16 %v2739, %v2736
    %v2890 = vpack.c.b16 %v2743, %v2740
    %v2891 = vpack.c.b16 %v2744, %v2741
    %v2892 = vpack.c.b16 %v2745, %v2742
    %v2893 = vpack.c.b16 %v2749, %v2746
    %v2894 = vpack.c.b16 %v2750, %v2747
    %v2895 = vpack.c.b16 %v2751, %v2748
    %v2896 = vpack.c.b16 %v2755, %v2752
    %v2897 = vpack.c.b16 %v2756, %v2753
    %v2898 = vpack.c.b16 %v2757, %v2754
    %v2899 = vpack.c.b16 %v2761, %v2758
    %v2900 = vpack.c.b16 %v2762, %v2759
    %v2901 = vpack.c.b16 %v2763, %v2760
    %v2902 = vpack.c.b16 %v2767, %v2764
    %v2903 = vpack.c.b16 %v2768, %v2765
    %v2904 = vpack.c.b16 %v2769, %v2766
    %v2905 = vpack.c.b16 %v2773, %v2770
    %v2906 = vpack.c.b16 %v2774, %v2771
    %v2907 = vpack.c.b16 %v2775, %v2772
    %v2908 = vpack.c.b16 %v2779, %v2776
    %v2909 = vpack.c.b16 %v2780, %v2777
    %v2910 = vpack.c.b16 %v2781, %v2778
    %v2911 = vpack.c.b16 %v2785, %v2782
    %v2912 = vpack.c.b16 %v2786, %v2783
    %v2913 = vpack.c.b16 %v2787, %v2784
    %v2914 = vpack.c.b16 %v2791, %v2788
    %v2915 = vpack.c.b16 %v2792, %v2789
    %v2916 = vpack.c.b16 %v2793, %v2790
    %v2917 = vpack.c.b16 %v2797, %v2794
    %v2918 = vpack.c.b16 %v2798, %v2795
    %v2919 = vpack.c.b16 %v2799, %v2796
    %v2920 = vpack.c.b16 %v2803, %v2800
    %v2921 = vpack.c.b16 %v2804, %v2801
    %v2922 = vpack.c.b16 %v2805, %v2802
    %v2923 = vpack.c.b16 %v2809, %v2806
    %v2924 = vpack.c.b16 %v2810, %v2807
    %v2925 = vpack.c.b16 %v2811, %v2808
    %v2926 = vpack.c.b16 %v2815, %v2812
    %v2927 = vpack.c.b16 %v2816, %v2813
    %v2928 = vpack.c.b16 %v2817, %v2814
    %v2929 = vpack.c.b16 %v2821, %v2818
    %v2930 = vpack.c.b16 %v2822, %v2819
    %v2931 = vpack.c.b16 %v2823, %v2820
    %v2932 = vpack.c.b16 %v2827, %v2824
    %v2933 = vpack.c.b16 %v2828, %v2825
    %v2934 = vpack.c.b16 %v2829, %v2826
    %v2935 = vpack.c.b16 %v2833, %v2830
    %v2936 = vpack.c.b16 %v2834, %v2831
    %v2937 = vpack.c.b16 %v2835, %v2832
    %v2938 = vpack.c.b16 %v2839, %v2836
    %v2939 = vpack.c.b16 %v2840, %v2837
    %v2940 = vpack.c.b16 %v2841, %v2838
    %v2941 = vpack.c.b16 %v2845, %v2842
    %v2942 = vpack.c.b16 %v2846, %v2843
    %v2943 = vpack.c.b16 %v2847, %v2844
    %3040 = vmatprep.subr.bf16.mxu0 0
    %3041 = vmatpush1.bf16.msra.mxu0 %v1101
    %3042 = vmatprep.subr.bf16.mxu0 0
    %3043 = vmatpush1.bf16.msra.mxu0 %v1100
    %3044 = vmatprep.subr.bf16.mxu0 0
    %3045 = vmatpush1.bf16.msra.mxu0 %v1099
    %3046 = vmatprep.subr.bf16.mxu0 0
    %3047 = vmatpush1.bf16.msra.mxu0 %v1098
    %3048 = vmatprep.subr.bf16.mxu0 0
    %3049 = vmatpush1.bf16.msra.mxu0 %v1097
    %3050 = vmatprep.subr.bf16.mxu0 0
    %3051 = vmatpush1.bf16.msra.mxu0 %v1096
    %3052 = vmatprep.subr.bf16.mxu0 0
    %3053 = vmatpush1.bf16.msra.mxu0 %v1095
    %3054 = vmatprep.subr.bf16.mxu0 0
    %3055 = vmatpush1.bf16.msra.mxu0 %v1094
    %3056 = vmatprep.subr.bf16.mxu0 0
    %3057 = vmatpush2.bf16.msra.mxu0 %v1109
    %3058 = vmatprep.subr.bf16.mxu0 0
    %3059 = vmatpush2.bf16.msra.mxu0 %v1108
    %3060 = vmatprep.subr.bf16.mxu0 0
    %3061 = vmatpush2.bf16.msra.mxu0 %v1107
    %3062 = vmatprep.subr.bf16.mxu0 0
    %3063 = vmatpush2.bf16.msra.mxu0 %v1106
    %3064 = vmatprep.subr.bf16.mxu0 0
    %3065 = vmatpush2.bf16.msra.mxu0 %v1105
    %3066 = vmatprep.subr.bf16.mxu0 0
    %3067 = vmatpush2.bf16.msra.mxu0 %v1104
    %3068 = vmatprep.subr.bf16.mxu0 0
    %3069 = vmatpush2.bf16.msra.mxu0 %v1103
    %3070 = vmatprep.subr.bf16.mxu0 0
    %3071 = vmatpush2.bf16.msra.mxu0 %v1102
    %3072 = vmatprep.mubr.bf16.mxu0 %v2849
    %3073 = vmatmul.mubr.bf16.gmra.mxu0 %v2848
    %v3074 = vpop.f32.mrf.mxu0
    %v3075 = vadd.f32 0.0, %v3074
    %v3076 = vpop.f32.mrf.mxu0
    %v3077 = vpop.f32.mrf.mxu0
    %v3078 = vadd.f32 0.0, %v3077
    %v3079 = vpop.f32.mrf.mxu0
    %3080 = vmatprep.mubr.bf16.mxu0 %v2852
    %3081 = vmatmul.mubr.bf16.gmra.mxu0 %v2851
    %v3082 = vpop.f32.mrf.mxu0
    %v3083 = vadd.f32 0.0, %v3082
    %v3084 = vpop.f32.mrf.mxu0
    %v3085 = vpop.f32.mrf.mxu0
    %v3086 = vadd.f32 0.0, %v3085
    %v3087 = vpop.f32.mrf.mxu0
    %3088 = vmatprep.mubr.bf16.mxu0 %v2855
    %3089 = vmatmul.mubr.bf16.gmra.mxu0 %v2854
    %v3090 = vpop.f32.mrf.mxu0
    %v3091 = vadd.f32 0.0, %v3090
    %v3092 = vpop.f32.mrf.mxu0
    %v3093 = vpop.f32.mrf.mxu0
    %v3094 = vadd.f32 0.0, %v3093
    %v3095 = vpop.f32.mrf.mxu0
    %3096 = vmatprep.mubr.bf16.mxu0 %v2858
    %3097 = vmatmul.mubr.bf16.gmra.mxu0 %v2857
    %v3098 = vpop.f32.mrf.mxu0
    %v3099 = vadd.f32 0.0, %v3098
    %v3100 = vpop.f32.mrf.mxu0
    %v3101 = vpop.f32.mrf.mxu0
    %v3102 = vadd.f32 0.0, %v3101
    %v3103 = vpop.f32.mrf.mxu0
    %3104 = vmatprep.mubr.bf16.mxu0 %v2861
    %3105 = vmatmul.mubr.bf16.gmra.mxu0 %v2860
    %v3106 = vpop.f32.mrf.mxu0
    %v3107 = vadd.f32 0.0, %v3106
    %v3108 = vpop.f32.mrf.mxu0
    %v3109 = vpop.f32.mrf.mxu0
    %v3110 = vadd.f32 0.0, %v3109
    %v3111 = vpop.f32.mrf.mxu0
    %3112 = vmatprep.mubr.bf16.mxu0 %v2864
    %3113 = vmatmul.mubr.bf16.gmra.mxu0 %v2863
    %v3114 = vpop.f32.mrf.mxu0
    %v3115 = vadd.f32 0.0, %v3114
    %v3116 = vpop.f32.mrf.mxu0
    %v3117 = vpop.f32.mrf.mxu0
    %v3118 = vadd.f32 0.0, %v3117
    %v3119 = vpop.f32.mrf.mxu0
    %3120 = vmatprep.mubr.bf16.mxu0 %v2867
    %3121 = vmatmul.mubr.bf16.gmra.mxu0 %v2866
    %v3122 = vpop.f32.mrf.mxu0
    %v3123 = vadd.f32 0.0, %v3122
    %v3124 = vpop.f32.mrf.mxu0
    %v3125 = vpop.f32.mrf.mxu0
    %v3126 = vadd.f32 0.0, %v3125
    %v3127 = vpop.f32.mrf.mxu0
    %3128 = vmatprep.mubr.bf16.mxu0 %v2870
    %3129 = vmatmul.mubr.bf16.gmra.mxu0 %v2869
    %v3130 = vpop.f32.mrf.mxu0
    %v3131 = vadd.f32 0.0, %v3130
    %v3132 = vpop.f32.mrf.mxu0
    %v3133 = vpop.f32.mrf.mxu0
    %v3134 = vadd.f32 0.0, %v3133
    %v3135 = vpop.f32.mrf.mxu0
    %3136 = vmatprep.mubr.bf16.mxu0 %v2873
    %3137 = vmatmul.mubr.bf16.gmra.mxu0 %v2872
    %v3138 = vpop.f32.mrf.mxu0
    %v3139 = vadd.f32 0.0, %v3138
    %v3140 = vpop.f32.mrf.mxu0
    %v3141 = vpop.f32.mrf.mxu0
    %v3142 = vadd.f32 0.0, %v3141
    %v3143 = vpop.f32.mrf.mxu0
    %3144 = vmatprep.mubr.bf16.mxu0 %v2876
    %3145 = vmatmul.mubr.bf16.gmra.mxu0 %v2875
    %v3146 = vpop.f32.mrf.mxu0
    %v3147 = vadd.f32 0.0, %v3146
    %v3148 = vpop.f32.mrf.mxu0
    %v3149 = vpop.f32.mrf.mxu0
    %v3150 = vadd.f32 0.0, %v3149
    %v3151 = vpop.f32.mrf.mxu0
    %3152 = vmatprep.mubr.bf16.mxu0 %v2879
    %3153 = vmatmul.mubr.bf16.gmra.mxu0 %v2878
    %v3154 = vpop.f32.mrf.mxu0
    %v3155 = vadd.f32 0.0, %v3154
    %v3156 = vpop.f32.mrf.mxu0
    %v3157 = vpop.f32.mrf.mxu0
    %v3158 = vadd.f32 0.0, %v3157
    %v3159 = vpop.f32.mrf.mxu0
    %3160 = vmatprep.mubr.bf16.mxu0 %v2882
    %3161 = vmatmul.mubr.bf16.gmra.mxu0 %v2881
    %v3162 = vpop.f32.mrf.mxu0
    %v3163 = vadd.f32 0.0, %v3162
    %v3164 = vpop.f32.mrf.mxu0
    %v3165 = vpop.f32.mrf.mxu0
    %v3166 = vadd.f32 0.0, %v3165
    %v3167 = vpop.f32.mrf.mxu0
    %3168 = vmatprep.mubr.bf16.mxu0 %v2885
    %3169 = vmatmul.mubr.bf16.gmra.mxu0 %v2884
    %v3170 = vpop.f32.mrf.mxu0
    %v3171 = vadd.f32 0.0, %v3170
    %v3172 = vpop.f32.mrf.mxu0
    %v3173 = vpop.f32.mrf.mxu0
    %v3174 = vadd.f32 0.0, %v3173
    %v3175 = vpop.f32.mrf.mxu0
    %3176 = vmatprep.mubr.bf16.mxu0 %v2888
    %3177 = vmatmul.mubr.bf16.gmra.mxu0 %v2887
    %v3178 = vpop.f32.mrf.mxu0
    %v3179 = vadd.f32 0.0, %v3178
    %v3180 = vpop.f32.mrf.mxu0
    %v3181 = vpop.f32.mrf.mxu0
    %v3182 = vadd.f32 0.0, %v3181
    %v3183 = vpop.f32.mrf.mxu0
    %3184 = vmatprep.mubr.bf16.mxu0 %v2891
    %3185 = vmatmul.mubr.bf16.gmra.mxu0 %v2890
    %v3186 = vpop.f32.mrf.mxu0
    %v3187 = vadd.f32 0.0, %v3186
    %v3188 = vpop.f32.mrf.mxu0
    %v3189 = vpop.f32.mrf.mxu0
    %v3190 = vadd.f32 0.0, %v3189
    %v3191 = vpop.f32.mrf.mxu0
    %3192 = vmatprep.mubr.bf16.mxu0 %v2894
    %3193 = vmatmul.mubr.bf16.gmra.mxu0 %v2893
    %v3194 = vpop.f32.mrf.mxu0
    %v3195 = vadd.f32 0.0, %v3194
    %v3196 = vpop.f32.mrf.mxu0
    %v3197 = vpop.f32.mrf.mxu0
    %v3198 = vadd.f32 0.0, %v3197
    %v3199 = vpop.f32.mrf.mxu0
    %3200 = vmatprep.mubr.bf16.mxu0 %v2897
    %3201 = vmatmul.mubr.bf16.gmra.mxu0 %v2896
    %v3202 = vpop.f32.mrf.mxu0
    %v3203 = vadd.f32 0.0, %v3202
    %v3204 = vpop.f32.mrf.mxu0
    %v3205 = vpop.f32.mrf.mxu0
    %v3206 = vadd.f32 0.0, %v3205
    %v3207 = vpop.f32.mrf.mxu0
    %3208 = vmatprep.mubr.bf16.mxu0 %v2900
    %3209 = vmatmul.mubr.bf16.gmra.mxu0 %v2899
    %v3210 = vpop.f32.mrf.mxu0
    %v3211 = vadd.f32 0.0, %v3210
    %v3212 = vpop.f32.mrf.mxu0
    %v3213 = vpop.f32.mrf.mxu0
    %v3214 = vadd.f32 0.0, %v3213
    %v3215 = vpop.f32.mrf.mxu0
    %3216 = vmatprep.mubr.bf16.mxu0 %v2903
    %3217 = vmatmul.mubr.bf16.gmra.mxu0 %v2902
    %v3218 = vpop.f32.mrf.mxu0
    %v3219 = vadd.f32 0.0, %v3218
    %v3220 = vpop.f32.mrf.mxu0
    %v3221 = vpop.f32.mrf.mxu0
    %v3222 = vadd.f32 0.0, %v3221
    %v3223 = vpop.f32.mrf.mxu0
    %3224 = vmatprep.mubr.bf16.mxu0 %v2906
    %3225 = vmatmul.mubr.bf16.gmra.mxu0 %v2905
    %v3226 = vpop.f32.mrf.mxu0
    %v3227 = vadd.f32 0.0, %v3226
    %v3228 = vpop.f32.mrf.mxu0
    %v3229 = vpop.f32.mrf.mxu0
    %v3230 = vadd.f32 0.0, %v3229
    %v3231 = vpop.f32.mrf.mxu0
    %3232 = vmatprep.mubr.bf16.mxu0 %v2909
    %3233 = vmatmul.mubr.bf16.gmra.mxu0 %v2908
    %v3234 = vpop.f32.mrf.mxu0
    %v3235 = vadd.f32 0.0, %v3234
    %v3236 = vpop.f32.mrf.mxu0
    %v3237 = vpop.f32.mrf.mxu0
    %v3238 = vadd.f32 0.0, %v3237
    %v3239 = vpop.f32.mrf.mxu0
    %3240 = vmatprep.mubr.bf16.mxu0 %v2912
    %3241 = vmatmul.mubr.bf16.gmra.mxu0 %v2911
    %v3242 = vpop.f32.mrf.mxu0
    %v3243 = vadd.f32 0.0, %v3242
    %v3244 = vpop.f32.mrf.mxu0
    %v3245 = vpop.f32.mrf.mxu0
    %v3246 = vadd.f32 0.0, %v3245
    %v3247 = vpop.f32.mrf.mxu0
    %3248 = vmatprep.mubr.bf16.mxu0 %v2915
    %3249 = vmatmul.mubr.bf16.gmra.mxu0 %v2914
    %v3250 = vpop.f32.mrf.mxu0
    %v3251 = vadd.f32 0.0, %v3250
    %v3252 = vpop.f32.mrf.mxu0
    %v3253 = vpop.f32.mrf.mxu0
    %v3254 = vadd.f32 0.0, %v3253
    %v3255 = vpop.f32.mrf.mxu0
    %3256 = vmatprep.mubr.bf16.mxu0 %v2918
    %3257 = vmatmul.mubr.bf16.gmra.mxu0 %v2917
    %v3258 = vpop.f32.mrf.mxu0
    %v3259 = vadd.f32 0.0, %v3258
    %v3260 = vpop.f32.mrf.mxu0
    %v3261 = vpop.f32.mrf.mxu0
    %v3262 = vadd.f32 0.0, %v3261
    %v3263 = vpop.f32.mrf.mxu0
    %3264 = vmatprep.mubr.bf16.mxu0 %v2921
    %3265 = vmatmul.mubr.bf16.gmra.mxu0 %v2920
    %v3266 = vpop.f32.mrf.mxu0
    %v3267 = vadd.f32 0.0, %v3266
    %v3268 = vpop.f32.mrf.mxu0
    %v3269 = vpop.f32.mrf.mxu0
    %v3270 = vadd.f32 0.0, %v3269
    %v3271 = vpop.f32.mrf.mxu0
    %3272 = vmatprep.mubr.bf16.mxu0 %v2924
    %3273 = vmatmul.mubr.bf16.gmra.mxu0 %v2923
    %v3274 = vpop.f32.mrf.mxu0
    %v3275 = vadd.f32 0.0, %v3274
    %v3276 = vpop.f32.mrf.mxu0
    %v3277 = vpop.f32.mrf.mxu0
    %v3278 = vadd.f32 0.0, %v3277
    %v3279 = vpop.f32.mrf.mxu0
    %3280 = vmatprep.mubr.bf16.mxu0 %v2927
    %3281 = vmatmul.mubr.bf16.gmra.mxu0 %v2926
    %v3282 = vpop.f32.mrf.mxu0
    %v3283 = vadd.f32 0.0, %v3282
    %v3284 = vpop.f32.mrf.mxu0
    %v3285 = vpop.f32.mrf.mxu0
    %v3286 = vadd.f32 0.0, %v3285
    %v3287 = vpop.f32.mrf.mxu0
    %3288 = vmatprep.mubr.bf16.mxu0 %v2930
    %3289 = vmatmul.mubr.bf16.gmra.mxu0 %v2929
    %v3290 = vpop.f32.mrf.mxu0
    %v3291 = vadd.f32 0.0, %v3290
    %v3292 = vpop.f32.mrf.mxu0
    %v3293 = vpop.f32.mrf.mxu0
    %v3294 = vadd.f32 0.0, %v3293
    %v3295 = vpop.f32.mrf.mxu0
    %3296 = vmatprep.mubr.bf16.mxu0 %v2933
    %3297 = vmatmul.mubr.bf16.gmra.mxu0 %v2932
    %v3298 = vpop.f32.mrf.mxu0
    %v3299 = vadd.f32 0.0, %v3298
    %v3300 = vpop.f32.mrf.mxu0
    %v3301 = vpop.f32.mrf.mxu0
    %v3302 = vadd.f32 0.0, %v3301
    %v3303 = vpop.f32.mrf.mxu0
    %3304 = vmatprep.mubr.bf16.mxu0 %v2936
    %3305 = vmatmul.mubr.bf16.gmra.mxu0 %v2935
    %v3306 = vpop.f32.mrf.mxu0
    %v3307 = vadd.f32 0.0, %v3306
    %v3308 = vpop.f32.mrf.mxu0
    %v3309 = vpop.f32.mrf.mxu0
    %v3310 = vadd.f32 0.0, %v3309
    %v3311 = vpop.f32.mrf.mxu0
    %3312 = vmatprep.mubr.bf16.mxu0 %v2939
    %3313 = vmatmul.mubr.bf16.gmra.mxu0 %v2938
    %v3314 = vpop.f32.mrf.mxu0
    %v3315 = vadd.f32 0.0, %v3314
    %v3316 = vpop.f32.mrf.mxu0
    %v3317 = vpop.f32.mrf.mxu0
    %v3318 = vadd.f32 0.0, %v3317
    %v3319 = vpop.f32.mrf.mxu0
    %3320 = vmatprep.mubr.bf16.mxu0 %v2942
    %3321 = vmatmul.mubr.bf16.gmra.mxu0 %v2941
    %v3322 = vpop.f32.mrf.mxu0
    %v3323 = vadd.f32 0.0, %v3322
    %v3324 = vpop.f32.mrf.mxu0
    %v3325 = vpop.f32.mrf.mxu0
    %v3326 = vadd.f32 0.0, %v3325
    %v3327 = vpop.f32.mrf.mxu0
    %3328 = vdwg.mxu0
    %3329 = vmatprep.subr.bf16.mxu0 0
    %3330 = vmatpush1.bf16.msra.mxu0 %v1117
    %3331 = vmatprep.subr.bf16.mxu0 0
    %3332 = vmatpush1.bf16.msra.mxu0 %v1116
    %3333 = vmatprep.subr.bf16.mxu0 0
    %3334 = vmatpush1.bf16.msra.mxu0 %v1115
    %3335 = vmatprep.subr.bf16.mxu0 0
    %3336 = vmatpush1.bf16.msra.mxu0 %v1114
    %3337 = vmatprep.subr.bf16.mxu0 0
    %3338 = vmatpush1.bf16.msra.mxu0 %v1113
    %3339 = vmatprep.subr.bf16.mxu0 0
    %3340 = vmatpush1.bf16.msra.mxu0 %v1112
    %3341 = vmatprep.subr.bf16.mxu0 0
    %3342 = vmatpush1.bf16.msra.mxu0 %v1111
    %3343 = vmatprep.subr.bf16.mxu0 0
    %3344 = vmatpush1.bf16.msra.mxu0 %v1110
    %3345 = vmatprep.subr.bf16.mxu0 0
    %3346 = vmatpush2.bf16.msra.mxu0 0
    %3347 = vmatprep.subr.bf16.mxu0 0
    %3348 = vmatpush2.bf16.msra.mxu0 0
    %3349 = vmatprep.subr.bf16.mxu0 0
    %3350 = vmatpush2.bf16.msra.mxu0 0
    %3351 = vmatprep.subr.bf16.mxu0 0
    %3352 = vmatpush2.bf16.msra.mxu0 0
    %3353 = vmatprep.subr.bf16.mxu0 0
    %3354 = vmatpush2.bf16.msra.mxu0 0
    %3355 = vmatprep.subr.bf16.mxu0 0
    %3356 = vmatpush2.bf16.msra.mxu0 0
    %3357 = vmatprep.subr.bf16.mxu0 0
    %3358 = vmatpush2.bf16.msra.mxu0 0
    %3359 = vmatprep.subr.bf16.mxu0 0
    %3360 = vmatpush2.bf16.msra.mxu0 0
    %3361 = vmatprep.mubr.bf16.mxu0 0
    %3362 = vmatmul.mubr.bf16.gmra.mxu0 %v2850
    %v3363 = vpop.f32.mrf.mxu0
    %v3364 = vadd.f32 %v3075, %v3363
    %v3365 = vpop.f32.mrf.mxu0
    %v3366 = vpop.f32.mrf.mxu0
    %v3367 = vadd.f32 %v3078, %v3366
    %v3368 = vpop.f32.mrf.mxu0
    %3369 = vmatprep.mubr.bf16.mxu0 0
    %3370 = vmatmul.mubr.bf16.gmra.mxu0 %v2853
    %v3371 = vpop.f32.mrf.mxu0
    %v3372 = vadd.f32 %v3083, %v3371
    %v3373 = vpop.f32.mrf.mxu0
    %v3374 = vpop.f32.mrf.mxu0
    %v3375 = vadd.f32 %v3086, %v3374
    %v3376 = vpop.f32.mrf.mxu0
    %3377 = vmatprep.mubr.bf16.mxu0 0
    %3378 = vmatmul.mubr.bf16.gmra.mxu0 %v2856
    %v3379 = vpop.f32.mrf.mxu0
    %v3380 = vadd.f32 %v3091, %v3379
    %v3381 = vpop.f32.mrf.mxu0
    %v3382 = vpop.f32.mrf.mxu0
    %v3383 = vadd.f32 %v3094, %v3382
    %v3384 = vpop.f32.mrf.mxu0
    %3385 = vmatprep.mubr.bf16.mxu0 0
    %3386 = vmatmul.mubr.bf16.gmra.mxu0 %v2859
    %v3387 = vpop.f32.mrf.mxu0
    %v3388 = vadd.f32 %v3099, %v3387
    %v3389 = vpop.f32.mrf.mxu0
    %v3390 = vpop.f32.mrf.mxu0
    %v3391 = vadd.f32 %v3102, %v3390
    %v3392 = vpop.f32.mrf.mxu0
    %3393 = vmatprep.mubr.bf16.mxu0 0
    %3394 = vmatmul.mubr.bf16.gmra.mxu0 %v2862
    %v3395 = vpop.f32.mrf.mxu0
    %v3396 = vadd.f32 %v3107, %v3395
    %v3397 = vpop.f32.mrf.mxu0
    %v3398 = vpop.f32.mrf.mxu0
    %v3399 = vadd.f32 %v3110, %v3398
    %v3400 = vpop.f32.mrf.mxu0
    %3401 = vmatprep.mubr.bf16.mxu0 0
    %3402 = vmatmul.mubr.bf16.gmra.mxu0 %v2865
    %v3403 = vpop.f32.mrf.mxu0
    %v3404 = vadd.f32 %v3115, %v3403
    %v3405 = vpop.f32.mrf.mxu0
    %v3406 = vpop.f32.mrf.mxu0
    %v3407 = vadd.f32 %v3118, %v3406
    %v3408 = vpop.f32.mrf.mxu0
    %3409 = vmatprep.mubr.bf16.mxu0 0
    %3410 = vmatmul.mubr.bf16.gmra.mxu0 %v2868
    %v3411 = vpop.f32.mrf.mxu0
    %v3412 = vadd.f32 %v3123, %v3411
    %v3413 = vpop.f32.mrf.mxu0
    %v3414 = vpop.f32.mrf.mxu0
    %v3415 = vadd.f32 %v3126, %v3414
    %v3416 = vpop.f32.mrf.mxu0
    %3417 = vmatprep.mubr.bf16.mxu0 0
    %3418 = vmatmul.mubr.bf16.gmra.mxu0 %v2871
    %v3419 = vpop.f32.mrf.mxu0
    %v3420 = vadd.f32 %v3131, %v3419
    %v3421 = vpop.f32.mrf.mxu0
    %v3422 = vpop.f32.mrf.mxu0
    %v3423 = vadd.f32 %v3134, %v3422
    %v3424 = vpop.f32.mrf.mxu0
    %3425 = vmatprep.mubr.bf16.mxu0 0
    %3426 = vmatmul.mubr.bf16.gmra.mxu0 %v2874
    %v3427 = vpop.f32.mrf.mxu0
    %v3428 = vadd.f32 %v3139, %v3427
    %v3429 = vpop.f32.mrf.mxu0
    %v3430 = vpop.f32.mrf.mxu0
    %v3431 = vadd.f32 %v3142, %v3430
    %v3432 = vpop.f32.mrf.mxu0
    %3433 = vmatprep.mubr.bf16.mxu0 0
    %3434 = vmatmul.mubr.bf16.gmra.mxu0 %v2877
    %v3435 = vpop.f32.mrf.mxu0
    %v3436 = vadd.f32 %v3147, %v3435
    %v3437 = vpop.f32.mrf.mxu0
    %v3438 = vpop.f32.mrf.mxu0
    %v3439 = vadd.f32 %v3150, %v3438
    %v3440 = vpop.f32.mrf.mxu0
    %3441 = vmatprep.mubr.bf16.mxu0 0
    %3442 = vmatmul.mubr.bf16.gmra.mxu0 %v2880
    %v3443 = vpop.f32.mrf.mxu0
    %v3444 = vadd.f32 %v3155, %v3443
    %v3445 = vpop.f32.mrf.mxu0
    %v3446 = vpop.f32.mrf.mxu0
    %v3447 = vadd.f32 %v3158, %v3446
    %v3448 = vpop.f32.mrf.mxu0
    %3449 = vmatprep.mubr.bf16.mxu0 0
    %3450 = vmatmul.mubr.bf16.gmra.mxu0 %v2883
    %v3451 = vpop.f32.mrf.mxu0
    %v3452 = vadd.f32 %v3163, %v3451
    %v3453 = vpop.f32.mrf.mxu0
    %v3454 = vpop.f32.mrf.mxu0
    %v3455 = vadd.f32 %v3166, %v3454
    %v3456 = vpop.f32.mrf.mxu0
    %3457 = vmatprep.mubr.bf16.mxu0 0
    %3458 = vmatmul.mubr.bf16.gmra.mxu0 %v2886
    %v3459 = vpop.f32.mrf.mxu0
    %v3460 = vadd.f32 %v3171, %v3459
    %v3461 = vpop.f32.mrf.mxu0
    %v3462 = vpop.f32.mrf.mxu0
    %v3463 = vadd.f32 %v3174, %v3462
    %v3464 = vpop.f32.mrf.mxu0
    %3465 = vmatprep.mubr.bf16.mxu0 0
    %3466 = vmatmul.mubr.bf16.gmra.mxu0 %v2889
    %v3467 = vpop.f32.mrf.mxu0
    %v3468 = vadd.f32 %v3179, %v3467
    %v3469 = vpop.f32.mrf.mxu0
    %v3470 = vpop.f32.mrf.mxu0
    %v3471 = vadd.f32 %v3182, %v3470
    %v3472 = vpop.f32.mrf.mxu0
    %3473 = vmatprep.mubr.bf16.mxu0 0
    %3474 = vmatmul.mubr.bf16.gmra.mxu0 %v2892
    %v3475 = vpop.f32.mrf.mxu0
    %v3476 = vadd.f32 %v3187, %v3475
    %v3477 = vpop.f32.mrf.mxu0
    %v3478 = vpop.f32.mrf.mxu0
    %v3479 = vadd.f32 %v3190, %v3478
    %v3480 = vpop.f32.mrf.mxu0
    %3481 = vmatprep.mubr.bf16.mxu0 0
    %3482 = vmatmul.mubr.bf16.gmra.mxu0 %v2895
    %v3483 = vpop.f32.mrf.mxu0
    %v3484 = vadd.f32 %v3195, %v3483
    %v3485 = vpop.f32.mrf.mxu0
    %v3486 = vpop.f32.mrf.mxu0
    %v3487 = vadd.f32 %v3198, %v3486
    %v3488 = vpop.f32.mrf.mxu0
    %3489 = vmatprep.mubr.bf16.mxu0 0
    %3490 = vmatmul.mubr.bf16.gmra.mxu0 %v2898
    %v3491 = vpop.f32.mrf.mxu0
    %v3492 = vadd.f32 %v3203, %v3491
    %v3493 = vpop.f32.mrf.mxu0
    %v3494 = vpop.f32.mrf.mxu0
    %v3495 = vadd.f32 %v3206, %v3494
    %v3496 = vpop.f32.mrf.mxu0
    %3497 = vmatprep.mubr.bf16.mxu0 0
    %3498 = vmatmul.mubr.bf16.gmra.mxu0 %v2901
    %v3499 = vpop.f32.mrf.mxu0
    %v3500 = vadd.f32 %v3211, %v3499
    %v3501 = vpop.f32.mrf.mxu0
    %v3502 = vpop.f32.mrf.mxu0
    %v3503 = vadd.f32 %v3214, %v3502
    %v3504 = vpop.f32.mrf.mxu0
    %3505 = vmatprep.mubr.bf16.mxu0 0
    %3506 = vmatmul.mubr.bf16.gmra.mxu0 %v2904
    %v3507 = vpop.f32.mrf.mxu0
    %v3508 = vadd.f32 %v3219, %v3507
    %v3509 = vpop.f32.mrf.mxu0
    %v3510 = vpop.f32.mrf.mxu0
    %v3511 = vadd.f32 %v3222, %v3510
    %v3512 = vpop.f32.mrf.mxu0
    %3513 = vmatprep.mubr.bf16.mxu0 0
    %3514 = vmatmul.mubr.bf16.gmra.mxu0 %v2907
    %v3515 = vpop.f32.mrf.mxu0
    %v3516 = vadd.f32 %v3227, %v3515
    %v3517 = vpop.f32.mrf.mxu0
    %v3518 = vpop.f32.mrf.mxu0
    %v3519 = vadd.f32 %v3230, %v3518
    %v3520 = vpop.f32.mrf.mxu0
    %3521 = vmatprep.mubr.bf16.mxu0 0
    %3522 = vmatmul.mubr.bf16.gmra.mxu0 %v2910
    %v3523 = vpop.f32.mrf.mxu0
    %v3524 = vadd.f32 %v3235, %v3523
    %v3525 = vpop.f32.mrf.mxu0
    %v3526 = vpop.f32.mrf.mxu0
    %v3527 = vadd.f32 %v3238, %v3526
    %v3528 = vpop.f32.mrf.mxu0
    %3529 = vmatprep.mubr.bf16.mxu0 0
    %3530 = vmatmul.mubr.bf16.gmra.mxu0 %v2913
    %v3531 = vpop.f32.mrf.mxu0
    %v3532 = vadd.f32 %v3243, %v3531
    %v3533 = vpop.f32.mrf.mxu0
    %v3534 = vpop.f32.mrf.mxu0
    %v3535 = vadd.f32 %v3246, %v3534
    %v3536 = vpop.f32.mrf.mxu0
    %3537 = vmatprep.mubr.bf16.mxu0 0
    %3538 = vmatmul.mubr.bf16.gmra.mxu0 %v2916
    %v3539 = vpop.f32.mrf.mxu0
    %v3540 = vadd.f32 %v3251, %v3539
    %v3541 = vpop.f32.mrf.mxu0
    %v3542 = vpop.f32.mrf.mxu0
    %v3543 = vadd.f32 %v3254, %v3542
    %v3544 = vpop.f32.mrf.mxu0
    %3545 = vmatprep.mubr.bf16.mxu0 0
    %3546 = vmatmul.mubr.bf16.gmra.mxu0 %v2919
    %v3547 = vpop.f32.mrf.mxu0
    %v3548 = vadd.f32 %v3259, %v3547
    %v3549 = vpop.f32.mrf.mxu0
    %v3550 = vpop.f32.mrf.mxu0
    %v3551 = vadd.f32 %v3262, %v3550
    %v3552 = vpop.f32.mrf.mxu0
    %3553 = vmatprep.mubr.bf16.mxu0 0
    %3554 = vmatmul.mubr.bf16.gmra.mxu0 %v2922
    %v3555 = vpop.f32.mrf.mxu0
    %v3556 = vadd.f32 %v3267, %v3555
    %v3557 = vpop.f32.mrf.mxu0
    %v3558 = vpop.f32.mrf.mxu0
    %v3559 = vadd.f32 %v3270, %v3558
    %v3560 = vpop.f32.mrf.mxu0
    %3561 = vmatprep.mubr.bf16.mxu0 0
    %3562 = vmatmul.mubr.bf16.gmra.mxu0 %v2925
    %v3563 = vpop.f32.mrf.mxu0
    %v3564 = vadd.f32 %v3275, %v3563
    %v3565 = vpop.f32.mrf.mxu0
    %v3566 = vpop.f32.mrf.mxu0
    %v3567 = vadd.f32 %v3278, %v3566
    %v3568 = vpop.f32.mrf.mxu0
    %3569 = vmatprep.mubr.bf16.mxu0 0
    %3570 = vmatmul.mubr.bf16.gmra.mxu0 %v2928
    %v3571 = vpop.f32.mrf.mxu0
    %v3572 = vadd.f32 %v3283, %v3571
    %v3573 = vpop.f32.mrf.mxu0
    %v3574 = vpop.f32.mrf.mxu0
    %v3575 = vadd.f32 %v3286, %v3574
    %v3576 = vpop.f32.mrf.mxu0
    %3577 = vmatprep.mubr.bf16.mxu0 0
    %3578 = vmatmul.mubr.bf16.gmra.mxu0 %v2931
    %v3579 = vpop.f32.mrf.mxu0
    %v3580 = vadd.f32 %v3291, %v3579
    %v3581 = vpop.f32.mrf.mxu0
    %v3582 = vpop.f32.mrf.mxu0
    %v3583 = vadd.f32 %v3294, %v3582
    %v3584 = vpop.f32.mrf.mxu0
    %3585 = vmatprep.mubr.bf16.mxu0 0
    %3586 = vmatmul.mubr.bf16.gmra.mxu0 %v2934
    %v3587 = vpop.f32.mrf.mxu0
    %v3588 = vadd.f32 %v3299, %v3587
    %v3589 = vpop.f32.mrf.mxu0
    %v3590 = vpop.f32.mrf.mxu0
    %v3591 = vadd.f32 %v3302, %v3590
    %v3592 = vpop.f32.mrf.mxu0
    %3593 = vmatprep.mubr.bf16.mxu0 0
    %3594 = vmatmul.mubr.bf16.gmra.mxu0 %v2937
    %v3595 = vpop.f32.mrf.mxu0
    %v3596 = vadd.f32 %v3307, %v3595
    %v3597 = vpop.f32.mrf.mxu0
    %v3598 = vpop.f32.mrf.mxu0
    %v3599 = vadd.f32 %v3310, %v3598
    %v3600 = vpop.f32.mrf.mxu0
    %3601 = vmatprep.mubr.bf16.mxu0 0
    %3602 = vmatmul.mubr.bf16.gmra.mxu0 %v2940
    %v3603 = vpop.f32.mrf.mxu0
    %v3604 = vadd.f32 %v3315, %v3603
    %v3605 = vpop.f32.mrf.mxu0
    %v3606 = vpop.f32.mrf.mxu0
    %v3607 = vadd.f32 %v3318, %v3606
    %v3608 = vpop.f32.mrf.mxu0
    %3609 = vmatprep.mubr.bf16.mxu0 0
    %3610 = vmatmul.mubr.bf16.gmra.mxu0 %v2943
    %v3611 = vpop.f32.mrf.mxu0
    %v3612 = vadd.f32 %v3323, %v3611
    %v3613 = vpop.f32.mrf.mxu0
    %v3614 = vpop.f32.mrf.mxu0
    %v3615 = vadd.f32 %v3326, %v3614
    %v3616 = vpop.f32.mrf.mxu0
    %3617 = vdwg.mxu0
    %v3618 = vmax.f32 %v3364, 0.0
    %v3619 = vmax.f32 %v3367, 0.0
    %v3620 = vmax.f32 %v3372, 0.0
    %v3621 = vmax.f32 %v3375, 0.0
    %v3622 = vmax.f32 %v3380, 0.0
    %v3623 = vmax.f32 %v3383, 0.0
    %v3624 = vmax.f32 %v3388, 0.0
    %v3625 = vmax.f32 %v3391, 0.0
    %v3626 = vmax.f32 %v3396, 0.0
    %v3627 = vmax.f32 %v3399, 0.0
    %v3628 = vmax.f32 %v3404, 0.0
    %v3629 = vmax.f32 %v3407, 0.0
    %v3630 = vmax.f32 %v3412, 0.0
    %v3631 = vmax.f32 %v3415, 0.0
    %v3632 = vmax.f32 %v3420, 0.0
    %v3633 = vmax.f32 %v3423, 0.0
    %v3634 = vmax.f32 %v3428, 0.0
    %v3635 = vmax.f32 %v3431, 0.0
    %v3636 = vmax.f32 %v3436, 0.0
    %v3637 = vmax.f32 %v3439, 0.0
    %v3638 = vmax.f32 %v3444, 0.0
    %v3639 = vmax.f32 %v3447, 0.0
    %v3640 = vmax.f32 %v3452, 0.0
    %v3641 = vmax.f32 %v3455, 0.0
    %v3642 = vmax.f32 %v3460, 0.0
    %v3643 = vmax.f32 %v3463, 0.0
    %v3644 = vmax.f32 %v3468, 0.0
    %v3645 = vmax.f32 %v3471, 0.0
    %v3646 = vmax.f32 %v3476, 0.0
    %v3647 = vmax.f32 %v3479, 0.0
    %v3648 = vmax.f32 %v3484, 0.0
    %v3649 = vmax.f32 %v3487, 0.0
    %v3650 = vmax.f32 %v3492, 0.0
    %v3651 = vmax.f32 %v3495, 0.0
    %v3652 = vmax.f32 %v3500, 0.0
    %v3653 = vmax.f32 %v3503, 0.0
    %v3654 = vmax.f32 %v3508, 0.0
    %v3655 = vmax.f32 %v3511, 0.0
    %v3656 = vmax.f32 %v3516, 0.0
    %v3657 = vmax.f32 %v3519, 0.0
    %v3658 = vmax.f32 %v3524, 0.0
    %v3659 = vmax.f32 %v3527, 0.0
    %v3660 = vmax.f32 %v3532, 0.0
    %v3661 = vmax.f32 %v3535, 0.0
    %v3662 = vmax.f32 %v3540, 0.0
    %v3663 = vmax.f32 %v3543, 0.0
    %v3664 = vmax.f32 %v3548, 0.0
    %v3665 = vmax.f32 %v3551, 0.0
    %v3666 = vmax.f32 %v3556, 0.0
    %v3667 = vmax.f32 %v3559, 0.0
    %v3668 = vmax.f32 %v3564, 0.0
    %v3669 = vmax.f32 %v3567, 0.0
    %v3670 = vmax.f32 %v3572, 0.0
    %v3671 = vmax.f32 %v3575, 0.0
    %v3672 = vmax.f32 %v3580, 0.0
    %v3673 = vmax.f32 %v3583, 0.0
    %v3674 = vmax.f32 %v3588, 0.0
    %v3675 = vmax.f32 %v3591, 0.0
    %v3676 = vmax.f32 %v3596, 0.0
    %v3677 = vmax.f32 %v3599, 0.0
    %v3678 = vmax.f32 %v3604, 0.0
    %v3679 = vmax.f32 %v3607, 0.0
    %v3680 = vmax.f32 %v3612, 0.0
    %v3681 = vmax.f32 %v3615, 0.0
    %v3682 = vld [vmem:[%s5] sm:$0xff]
    %v3683 = vld [vmem:[%s5 + $0x8] sm:$0xff]
    %v3684 = vld [vmem:[%s5 + $0x10] sm:$0xff]
    %v3685 = vld [vmem:[%s5 + $0x18] sm:$0xff]
    %v3686 = vld [vmem:[%s5 + $0x20] sm:$0xff]
    %v3687 = vld [vmem:[%s5 + $0x28] sm:$0xff]
    %v3688 = vld [vmem:[%s5 + $0x30] sm:$0xff]
    %v3689 = vld [vmem:[%s5 + $0x38] sm:$0xff]
    %v3690 = vld [vmem:[%s5 + $0x40] sm:$0xff]
    %v3691 = vld [vmem:[%s5 + $0x48] sm:$0xff]
    %v3692 = vld [vmem:[%s5 + $0x50] sm:$0xff]
    %v3693 = vld [vmem:[%s5 + $0x58] sm:$0xff]
    %v3694 = vld [vmem:[%s5 + $0x60] sm:$0xff]
    %v3695 = vld [vmem:[%s5 + $0x68] sm:$0xff]
    %v3696 = vld [vmem:[%s5 + $0x70] sm:$0xff]
    %v3697 = vld [vmem:[%s5 + $0x78] sm:$0xff]
    %v3698 = vld [vmem:[%s5 + $0x80] sm:$0xff]
    %v3699 = vld [vmem:[%s5 + $0x88] sm:$0xff]
    %v3700 = vld [vmem:[%s5 + $0x90] sm:$0xff]
    %v3701 = vld [vmem:[%s5 + $0x98] sm:$0xff]
    %v3702 = vld [vmem:[%s5 + $0xa0] sm:$0xff]
    %v3703 = vld [vmem:[%s5 + $0xa8] sm:$0xff]
    %v3704 = vld [vmem:[%s5 + $0xb0] sm:$0xff]
    %v3705 = vld [vmem:[%s5 + $0xb8] sm:$0xff]
    %v3706 = vld [vmem:[%s5 + $0xc0] sm:$0xff]
    %v3707 = vld [vmem:[%s5 + $0xc8] sm:$0xff]
    %v3708 = vld [vmem:[%s5 + $0xd0] sm:$0xff]
    %v3709 = vld [vmem:[%s5 + $0xd8] sm:$0xff]
    %v3710 = vld [vmem:[%s5 + $0xe0] sm:$0xff]
    %v3711 = vld [vmem:[%s5 + $0xe8] sm:$0xff]
    %v3712 = vld [vmem:[%s5 + $0xf0] sm:$0xff]
    %v3713 = vld [vmem:[%s5 + $0xf8] sm:$0xff]
    %v3714 = vld [vmem:[%s5 + $0x100] sm:$0xff]
    %v3715 = vld [vmem:[%s5 + $0x108] sm:$0xff]
    %v3716 = vld [vmem:[%s5 + $0x110] sm:$0xff]
    %v3717 = vld [vmem:[%s5 + $0x118] sm:$0xff]
    %v3718 = vld [vmem:[%s5 + $0x120] sm:$0xff]
    %v3719 = vld [vmem:[%s5 + $0x128] sm:$0xff]
    %v3720 = vld [vmem:[%s5 + $0x130] sm:$0xff]
    %v3721 = vld [vmem:[%s5 + $0x138] sm:$0xff]
    %v3722 = vld [vmem:[%s5 + $0x140] sm:$0xff]
    %v3723 = vld [vmem:[%s5 + $0x148] sm:$0xff]
    %v3724 = vld [vmem:[%s5 + $0x150] sm:$0xff]
    %v3725 = vld [vmem:[%s5 + $0x158] sm:$0xff]
    %v3726 = vld [vmem:[%s5 + $0x160] sm:$0xff]
    %v3727 = vld [vmem:[%s5 + $0x168] sm:$0xff]
    %v3728 = vld [vmem:[%s5 + $0x170] sm:$0xff]
    %v3729 = vld [vmem:[%s5 + $0x178] sm:$0xff]
    %v3730 = vld [vmem:[%s5 + $0x180] sm:$0xff]
    %v3731 = vld [vmem:[%s5 + $0x188] sm:$0xff]
    %v3732 = vld [vmem:[%s5 + $0x190] sm:$0xff]
    %v3733 = vld [vmem:[%s5 + $0x198] sm:$0xff]
    %v3734 = vld [vmem:[%s5 + $0x1a0] sm:$0xff]
    %v3735 = vld [vmem:[%s5 + $0x1a8] sm:$0xff]
    %v3736 = vld [vmem:[%s5 + $0x1b0] sm:$0xff]
    %v3737 = vld [vmem:[%s5 + $0x1b8] sm:$0xff]
    %v3738 = vld [vmem:[%s5 + $0x1c0] sm:$0xff]
    %v3739 = vld [vmem:[%s5 + $0x1c8] sm:$0xff]
    %v3740 = vld [vmem:[%s5 + $0x1d0] sm:$0xff]
    %v3741 = vld [vmem:[%s5 + $0x1d8] sm:$0xff]
    %v3742 = vld [vmem:[%s5 + $0x1e0] sm:$0xff]
    %v3743 = vld [vmem:[%s5 + $0x1e8] sm:$0xff]
    %v3744 = vld [vmem:[%s5 + $0x1f0] sm:$0xff]
    %v3745 = vld [vmem:[%s5 + $0x1f8] sm:$0xff]
    %3747 = vset.pattern.permute.xlu0 0
    %3748 = vperm.xlu0 %3747, %v3682
    %v3749 = vpop.permute.xlu0 %3748
    %3752 = vset.pattern.permute.xlu0 0
    %3753 = vperm.xlu0 %3752, %v3683
    %v3754 = vpop.permute.xlu0 %3753
    %3757 = vset.pattern.permute.xlu0 0
    %3758 = vperm.xlu0 %3757, %v3684
    %v3759 = vpop.permute.xlu0 %3758
    %3762 = vset.pattern.permute.xlu0 0
    %3763 = vperm.xlu0 %3762, %v3685
    %v3764 = vpop.permute.xlu0 %3763
    %3767 = vset.pattern.permute.xlu0 0
    %3768 = vperm.xlu0 %3767, %v3686
    %v3769 = vpop.permute.xlu0 %3768
    %3772 = vset.pattern.permute.xlu0 0
    %3773 = vperm.xlu0 %3772, %v3687
    %v3774 = vpop.permute.xlu0 %3773
    %3777 = vset.pattern.permute.xlu0 0
    %3778 = vperm.xlu0 %3777, %v3688
    %v3779 = vpop.permute.xlu0 %3778
    %3782 = vset.pattern.permute.xlu0 0
    %3783 = vperm.xlu0 %3782, %v3689
    %v3784 = vpop.permute.xlu0 %3783
    %3787 = vset.pattern.permute.xlu0 0
    %3788 = vperm.xlu0 %3787, %v3690
    %v3789 = vpop.permute.xlu0 %3788
    %3792 = vset.pattern.permute.xlu0 0
    %3793 = vperm.xlu0 %3792, %v3691
    %v3794 = vpop.permute.xlu0 %3793
    %3797 = vset.pattern.permute.xlu0 0
    %3798 = vperm.xlu0 %3797, %v3692
    %v3799 = vpop.permute.xlu0 %3798
    %3802 = vset.pattern.permute.xlu0 0
    %3803 = vperm.xlu0 %3802, %v3693
    %v3804 = vpop.permute.xlu0 %3803
    %3807 = vset.pattern.permute.xlu0 0
    %3808 = vperm.xlu0 %3807, %v3694
    %v3809 = vpop.permute.xlu0 %3808
    %3812 = vset.pattern.permute.xlu0 0
    %3813 = vperm.xlu0 %3812, %v3695
    %v3814 = vpop.permute.xlu0 %3813
    %3817 = vset.pattern.permute.xlu0 0
    %3818 = vperm.xlu0 %3817, %v3696
    %v3819 = vpop.permute.xlu0 %3818
    %3822 = vset.pattern.permute.xlu0 0
    %3823 = vperm.xlu0 %3822, %v3697
    %v3824 = vpop.permute.xlu0 %3823
    %3827 = vset.pattern.permute.xlu0 0
    %3828 = vperm.xlu0 %3827, %v3698
    %v3829 = vpop.permute.xlu0 %3828
    %3832 = vset.pattern.permute.xlu0 0
    %3833 = vperm.xlu0 %3832, %v3699
    %v3834 = vpop.permute.xlu0 %3833
    %3837 = vset.pattern.permute.xlu0 0
    %3838 = vperm.xlu0 %3837, %v3700
    %v3839 = vpop.permute.xlu0 %3838
    %3842 = vset.pattern.permute.xlu0 0
    %3843 = vperm.xlu0 %3842, %v3701
    %v3844 = vpop.permute.xlu0 %3843
    %3847 = vset.pattern.permute.xlu0 0
    %3848 = vperm.xlu0 %3847, %v3702
    %v3849 = vpop.permute.xlu0 %3848
    %3852 = vset.pattern.permute.xlu0 0
    %3853 = vperm.xlu0 %3852, %v3703
    %v3854 = vpop.permute.xlu0 %3853
    %3857 = vset.pattern.permute.xlu0 0
    %3858 = vperm.xlu0 %3857, %v3704
    %v3859 = vpop.permute.xlu0 %3858
    %3862 = vset.pattern.permute.xlu0 0
    %3863 = vperm.xlu0 %3862, %v3705
    %v3864 = vpop.permute.xlu0 %3863
    %3867 = vset.pattern.permute.xlu0 0
    %3868 = vperm.xlu0 %3867, %v3706
    %v3869 = vpop.permute.xlu0 %3868
    %3872 = vset.pattern.permute.xlu0 0
    %3873 = vperm.xlu0 %3872, %v3707
    %v3874 = vpop.permute.xlu0 %3873
    %3877 = vset.pattern.permute.xlu0 0
    %3878 = vperm.xlu0 %3877, %v3708
    %v3879 = vpop.permute.xlu0 %3878
    %3882 = vset.pattern.permute.xlu0 0
    %3883 = vperm.xlu0 %3882, %v3709
    %v3884 = vpop.permute.xlu0 %3883
    %3887 = vset.pattern.permute.xlu0 0
    %3888 = vperm.xlu0 %3887, %v3710
    %v3889 = vpop.permute.xlu0 %3888
    %3892 = vset.pattern.permute.xlu0 0
    %3893 = vperm.xlu0 %3892, %v3711
    %v3894 = vpop.permute.xlu0 %3893
    %3897 = vset.pattern.permute.xlu0 0
    %3898 = vperm.xlu0 %3897, %v3712
    %v3899 = vpop.permute.xlu0 %3898
    %3902 = vset.pattern.permute.xlu0 0
    %3903 = vperm.xlu0 %3902, %v3713
    %v3904 = vpop.permute.xlu0 %3903
    %3907 = vset.pattern.permute.xlu0 0
    %3908 = vperm.xlu0 %3907, %v3714
    %v3909 = vpop.permute.xlu0 %3908
    %3912 = vset.pattern.permute.xlu0 0
    %3913 = vperm.xlu0 %3912, %v3715
    %v3914 = vpop.permute.xlu0 %3913
    %3917 = vset.pattern.permute.xlu0 0
    %3918 = vperm.xlu0 %3917, %v3716
    %v3919 = vpop.permute.xlu0 %3918
    %3922 = vset.pattern.permute.xlu0 0
    %3923 = vperm.xlu0 %3922, %v3717
    %v3924 = vpop.permute.xlu0 %3923
    %3927 = vset.pattern.permute.xlu0 0
    %3928 = vperm.xlu0 %3927, %v3718
    %v3929 = vpop.permute.xlu0 %3928
    %3932 = vset.pattern.permute.xlu0 0
    %3933 = vperm.xlu0 %3932, %v3719
    %v3934 = vpop.permute.xlu0 %3933
    %3937 = vset.pattern.permute.xlu0 0
    %3938 = vperm.xlu0 %3937, %v3720
    %v3939 = vpop.permute.xlu0 %3938
    %3942 = vset.pattern.permute.xlu0 0
    %3943 = vperm.xlu0 %3942, %v3721
    %v3944 = vpop.permute.xlu0 %3943
    %3947 = vset.pattern.permute.xlu0 0
    %3948 = vperm.xlu0 %3947, %v3722
    %v3949 = vpop.permute.xlu0 %3948
    %3952 = vset.pattern.permute.xlu0 0
    %3953 = vperm.xlu0 %3952, %v3723
    %v3954 = vpop.permute.xlu0 %3953
    %3957 = vset.pattern.permute.xlu0 0
    %3958 = vperm.xlu0 %3957, %v3724
    %v3959 = vpop.permute.xlu0 %3958
    %3962 = vset.pattern.permute.xlu0 0
    %3963 = vperm.xlu0 %3962, %v3725
    %v3964 = vpop.permute.xlu0 %3963
    %3967 = vset.pattern.permute.xlu0 0
    %3968 = vperm.xlu0 %3967, %v3726
    %v3969 = vpop.permute.xlu0 %3968
    %3972 = vset.pattern.permute.xlu0 0
    %3973 = vperm.xlu0 %3972, %v3727
    %v3974 = vpop.permute.xlu0 %3973
    %3977 = vset.pattern.permute.xlu0 0
    %3978 = vperm.xlu0 %3977, %v3728
    %v3979 = vpop.permute.xlu0 %3978
    %3982 = vset.pattern.permute.xlu0 0
    %3983 = vperm.xlu0 %3982, %v3729
    %v3984 = vpop.permute.xlu0 %3983
    %3987 = vset.pattern.permute.xlu0 0
    %3988 = vperm.xlu0 %3987, %v3730
    %v3989 = vpop.permute.xlu0 %3988
    %3992 = vset.pattern.permute.xlu0 0
    %3993 = vperm.xlu0 %3992, %v3731
    %v3994 = vpop.permute.xlu0 %3993
    %3997 = vset.pattern.permute.xlu0 0
    %3998 = vperm.xlu0 %3997, %v3732
    %v3999 = vpop.permute.xlu0 %3998
    %4002 = vset.pattern.permute.xlu0 0
    %4003 = vperm.xlu0 %4002, %v3733
    %v4004 = vpop.permute.xlu0 %4003
    %4007 = vset.pattern.permute.xlu0 0
    %4008 = vperm.xlu0 %4007, %v3734
    %v4009 = vpop.permute.xlu0 %4008
    %4012 = vset.pattern.permute.xlu0 0
    %4013 = vperm.xlu0 %4012, %v3735
    %v4014 = vpop.permute.xlu0 %4013
    %4017 = vset.pattern.permute.xlu0 0
    %4018 = vperm.xlu0 %4017, %v3736
    %v4019 = vpop.permute.xlu0 %4018
    %4022 = vset.pattern.permute.xlu0 0
    %4023 = vperm.xlu0 %4022, %v3737
    %v4024 = vpop.permute.xlu0 %4023
    %4027 = vset.pattern.permute.xlu0 0
    %4028 = vperm.xlu0 %4027, %v3738
    %v4029 = vpop.permute.xlu0 %4028
    %4032 = vset.pattern.permute.xlu0 0
    %4033 = vperm.xlu0 %4032, %v3739
    %v4034 = vpop.permute.xlu0 %4033
    %4037 = vset.pattern.permute.xlu0 0
    %4038 = vperm.xlu0 %4037, %v3740
    %v4039 = vpop.permute.xlu0 %4038
    %4042 = vset.pattern.permute.xlu0 0
    %4043 = vperm.xlu0 %4042, %v3741
    %v4044 = vpop.permute.xlu0 %4043
    %4047 = vset.pattern.permute.xlu0 0
    %4048 = vperm.xlu0 %4047, %v3742
    %v4049 = vpop.permute.xlu0 %4048
    %4052 = vset.pattern.permute.xlu0 0
    %4053 = vperm.xlu0 %4052, %v3743
    %v4054 = vpop.permute.xlu0 %4053
    %4057 = vset.pattern.permute.xlu0 0
    %4058 = vperm.xlu0 %4057, %v3744
    %v4059 = vpop.permute.xlu0 %4058
    %4062 = vset.pattern.permute.xlu0 0
    %4063 = vperm.xlu0 %4062, %v3745
    %v4064 = vpop.permute.xlu0 %4063
    %v4066 = vmul.f32 %v2336, %v3749
    %v4067 = vmul.f32 %v2337, %v3754
    %v4068 = vmul.f32 %v2338, %v3759
    %v4069 = vmul.f32 %v2339, %v3764
    %v4070 = vmul.f32 %v2340, %v3769
    %v4071 = vmul.f32 %v2341, %v3774
    %v4072 = vmul.f32 %v2342, %v3779
    %v4073 = vmul.f32 %v2343, %v3784
    %v4074 = vmul.f32 %v2344, %v3789
    %v4075 = vmul.f32 %v2345, %v3794
    %v4076 = vmul.f32 %v2346, %v3799
    %v4077 = vmul.f32 %v2347, %v3804
    %v4078 = vmul.f32 %v2348, %v3809
    %v4079 = vmul.f32 %v2349, %v3814
    %v4080 = vmul.f32 %v2350, %v3819
    %v4081 = vmul.f32 %v2351, %v3824
    %v4082 = vmul.f32 %v2352, %v3829
    %v4083 = vmul.f32 %v2353, %v3834
    %v4084 = vmul.f32 %v2354, %v3839
    %v4085 = vmul.f32 %v2355, %v3844
    %v4086 = vmul.f32 %v2356, %v3849
    %v4087 = vmul.f32 %v2357, %v3854
    %v4088 = vmul.f32 %v2358, %v3859
    %v4089 = vmul.f32 %v2359, %v3864
    %v4090 = vmul.f32 %v2360, %v3869
    %v4091 = vmul.f32 %v2361, %v3874
    %v4092 = vmul.f32 %v2362, %v3879
    %v4093 = vmul.f32 %v2363, %v3884
    %v4094 = vmul.f32 %v2364, %v3889
    %v4095 = vmul.f32 %v2365, %v3894
    %v4096 = vmul.f32 %v2366, %v3899
    %v4097 = vmul.f32 %v2367, %v3904
    %v4098 = vmul.f32 %v2368, %v3909
    %v4099 = vmul.f32 %v2369, %v3914
    %v4100 = vmul.f32 %v2370, %v3919
    %v4101 = vmul.f32 %v2371, %v3924
    %v4102 = vmul.f32 %v2372, %v3929
    %v4103 = vmul.f32 %v2373, %v3934
    %v4104 = vmul.f32 %v2374, %v3939
    %v4105 = vmul.f32 %v2375, %v3944
    %v4106 = vmul.f32 %v2376, %v3949
    %v4107 = vmul.f32 %v2377, %v3954
    %v4108 = vmul.f32 %v2378, %v3959
    %v4109 = vmul.f32 %v2379, %v3964
    %v4110 = vmul.f32 %v2380, %v3969
    %v4111 = vmul.f32 %v2381, %v3974
    %v4112 = vmul.f32 %v2382, %v3979
    %v4113 = vmul.f32 %v2383, %v3984
    %v4114 = vmul.f32 %v2384, %v3989
    %v4115 = vmul.f32 %v2385, %v3994
    %v4116 = vmul.f32 %v2386, %v3999
    %v4117 = vmul.f32 %v2387, %v4004
    %v4118 = vmul.f32 %v2388, %v4009
    %v4119 = vmul.f32 %v2389, %v4014
    %v4120 = vmul.f32 %v2390, %v4019
    %v4121 = vmul.f32 %v2391, %v4024
    %v4122 = vmul.f32 %v2392, %v4029
    %v4123 = vmul.f32 %v2393, %v4034
    %v4124 = vmul.f32 %v2394, %v4039
    %v4125 = vmul.f32 %v2395, %v4044
    %v4126 = vmul.f32 %v2396, %v4049
    %v4127 = vmul.f32 %v2397, %v4054
    %v4128 = vmul.f32 %v2398, %v4059
    %v4129 = vmul.f32 %v2399, %v4064
    %v4130 = vadd.f32 %v4066, %v4067
    %v4131 = vadd.f32 %v4130, %v4068
    %v4132 = vadd.f32 %v4131, %v4069
    %v4133 = vadd.f32 %v4132, %v4070
    %v4134 = vadd.f32 %v4133, %v4071
    %v4135 = vadd.f32 %v4134, %v4072
    %v4136 = vadd.f32 %v4135, %v4073
    %v4137 = vadd.f32 %v4136, %v4074
    %v4138 = vadd.f32 %v4137, %v4075
    %v4139 = vadd.f32 %v4138, %v4076
    %v4140 = vadd.f32 %v4139, %v4077
    %v4141 = vadd.f32 %v4140, %v4078
    %v4142 = vadd.f32 %v4141, %v4079
    %v4143 = vadd.f32 %v4142, %v4080
    %v4144 = vadd.f32 %v4143, %v4081
    %v4145 = vadd.f32 %v4144, %v4082
    %v4146 = vadd.f32 %v4145, %v4083
    %v4147 = vadd.f32 %v4146, %v4084
    %v4148 = vadd.f32 %v4147, %v4085
    %v4149 = vadd.f32 %v4148, %v4086
    %v4150 = vadd.f32 %v4149, %v4087
    %v4151 = vadd.f32 %v4150, %v4088
    %v4152 = vadd.f32 %v4151, %v4089
    %v4153 = vadd.f32 %v4152, %v4090
    %v4154 = vadd.f32 %v4153, %v4091
    %v4155 = vadd.f32 %v4154, %v4092
    %v4156 = vadd.f32 %v4155, %v4093
    %v4157 = vadd.f32 %v4156, %v4094
    %v4158 = vadd.f32 %v4157, %v4095
    %v4159 = vadd.f32 %v4158, %v4096
    %v4160 = vadd.f32 %v4159, %v4097
    %v4161 = vadd.f32 %v4160, %v4098
    %v4162 = vadd.f32 %v4161, %v4099
    %v4163 = vadd.f32 %v4162, %v4100
    %v4164 = vadd.f32 %v4163, %v4101
    %v4165 = vadd.f32 %v4164, %v4102
    %v4166 = vadd.f32 %v4165, %v4103
    %v4167 = vadd.f32 %v4166, %v4104
    %v4168 = vadd.f32 %v4167, %v4105
    %v4169 = vadd.f32 %v4168, %v4106
    %v4170 = vadd.f32 %v4169, %v4107
    %v4171 = vadd.f32 %v4170, %v4108
    %v4172 = vadd.f32 %v4171, %v4109
    %v4173 = vadd.f32 %v4172, %v4110
    %v4174 = vadd.f32 %v4173, %v4111
    %v4175 = vadd.f32 %v4174, %v4112
    %v4176 = vadd.f32 %v4175, %v4113
    %v4177 = vadd.f32 %v4176, %v4114
    %v4178 = vadd.f32 %v4177, %v4115
    %v4179 = vadd.f32 %v4178, %v4116
    %v4180 = vadd.f32 %v4179, %v4117
    %v4181 = vadd.f32 %v4180, %v4118
    %v4182 = vadd.f32 %v4181, %v4119
    %v4183 = vadd.f32 %v4182, %v4120
    %v4184 = vadd.f32 %v4183, %v4121
    %v4185 = vadd.f32 %v4184, %v4122
    %v4186 = vadd.f32 %v4185, %v4123
    %v4187 = vadd.f32 %v4186, %v4124
    %v4188 = vadd.f32 %v4187, %v4125
    %v4189 = vadd.f32 %v4188, %v4126
    %v4190 = vadd.f32 %v4189, %v4127
    %v4191 = vadd.f32 %v4190, %v4128
    %v4192 = vadd.f32 %v4191, %v4129
    %v4193 = vrot.slane %v4192, 4
    %v4194 = vadd.f32 %v4192, %v4193
    %v4195 = vrot.slane %v4194, 2
    %v4196 = vadd.f32 %v4194, %v4195
    %v4197 = vrot.slane %v4196, 1
    %v4198 = vadd.f32 %v4196, %v4197
    %v4199 = vld [vmem:[#allocation2] sm:$0x1]
    %4201 = vset.pattern.permute.xlu0 0
    %4202 = vperm.xlu0 %4201, %v4199
    %v4203 = vpop.permute.xlu0 %4202
    %v4205 = vlaneseq
    %v4206 = vshrl.u32 %v4205, 7
    %v4207 = vsub.s32 0, %v4206
    %v4208 = vrot.slane %v4203, %v4207
    %v4209 = vadd.f32 %v4198, %v4208
    %v4210 = vld [vmem:[%s7] sm:$0xff]
    %v4211 = vld [vmem:[%s7 + $0x8] sm:$0xff]
    %v4212 = vld [vmem:[%s7 + $0x10] sm:$0xff]
    %v4213 = vld [vmem:[%s7 + $0x18] sm:$0xff]
    %v4214 = vld [vmem:[%s7 + $0x20] sm:$0xff]
    %v4215 = vld [vmem:[%s7 + $0x28] sm:$0xff]
    %v4216 = vld [vmem:[%s7 + $0x30] sm:$0xff]
    %v4217 = vld [vmem:[%s7 + $0x38] sm:$0xff]
    %v4218 = vld [vmem:[%s7 + $0x40] sm:$0xff]
    %v4219 = vld [vmem:[%s7 + $0x48] sm:$0xff]
    %v4220 = vld [vmem:[%s7 + $0x50] sm:$0xff]
    %v4221 = vld [vmem:[%s7 + $0x58] sm:$0xff]
    %v4222 = vld [vmem:[%s7 + $0x60] sm:$0xff]
    %v4223 = vld [vmem:[%s7 + $0x68] sm:$0xff]
    %v4224 = vld [vmem:[%s7 + $0x70] sm:$0xff]
    %v4225 = vld [vmem:[%s7 + $0x78] sm:$0xff]
    %v4226 = vld [vmem:[%s7 + $0x80] sm:$0xff]
    %v4227 = vld [vmem:[%s7 + $0x88] sm:$0xff]
    %v4228 = vld [vmem:[%s7 + $0x90] sm:$0xff]
    %v4229 = vld [vmem:[%s7 + $0x98] sm:$0xff]
    %v4230 = vld [vmem:[%s7 + $0xa0] sm:$0xff]
    %v4231 = vld [vmem:[%s7 + $0xa8] sm:$0xff]
    %v4232 = vld [vmem:[%s7 + $0xb0] sm:$0xff]
    %v4233 = vld [vmem:[%s7 + $0xb8] sm:$0xff]
    %v4234 = vld [vmem:[%s7 + $0xc0] sm:$0xff]
    %v4235 = vld [vmem:[%s7 + $0xc8] sm:$0xff]
    %v4236 = vld [vmem:[%s7 + $0xd0] sm:$0xff]
    %v4237 = vld [vmem:[%s7 + $0xd8] sm:$0xff]
    %v4238 = vld [vmem:[%s7 + $0xe0] sm:$0xff]
    %v4239 = vld [vmem:[%s7 + $0xe8] sm:$0xff]
    %v4240 = vld [vmem:[%s7 + $0xf0] sm:$0xff]
    %v4241 = vld [vmem:[%s7 + $0xf8] sm:$0xff]
    %v4242 = vld [vmem:[%s7 + $0x100] sm:$0xff]
    %v4243 = vld [vmem:[%s7 + $0x108] sm:$0xff]
    %v4244 = vld [vmem:[%s7 + $0x110] sm:$0xff]
    %v4245 = vld [vmem:[%s7 + $0x118] sm:$0xff]
    %v4246 = vld [vmem:[%s7 + $0x120] sm:$0xff]
    %v4247 = vld [vmem:[%s7 + $0x128] sm:$0xff]
    %v4248 = vld [vmem:[%s7 + $0x130] sm:$0xff]
    %v4249 = vld [vmem:[%s7 + $0x138] sm:$0xff]
    %v4250 = vld [vmem:[%s7 + $0x140] sm:$0xff]
    %v4251 = vld [vmem:[%s7 + $0x148] sm:$0xff]
    %v4252 = vld [vmem:[%s7 + $0x150] sm:$0xff]
    %v4253 = vld [vmem:[%s7 + $0x158] sm:$0xff]
    %v4254 = vld [vmem:[%s7 + $0x160] sm:$0xff]
    %v4255 = vld [vmem:[%s7 + $0x168] sm:$0xff]
    %v4256 = vld [vmem:[%s7 + $0x170] sm:$0xff]
    %v4257 = vld [vmem:[%s7 + $0x178] sm:$0xff]
    %v4258 = vld [vmem:[%s7 + $0x180] sm:$0xff]
    %v4259 = vld [vmem:[%s7 + $0x188] sm:$0xff]
    %v4260 = vld [vmem:[%s7 + $0x190] sm:$0xff]
    %v4261 = vld [vmem:[%s7 + $0x198] sm:$0xff]
    %v4262 = vld [vmem:[%s7 + $0x1a0] sm:$0xff]
    %v4263 = vld [vmem:[%s7 + $0x1a8] sm:$0xff]
    %v4264 = vld [vmem:[%s7 + $0x1b0] sm:$0xff]
    %v4265 = vld [vmem:[%s7 + $0x1b8] sm:$0xff]
    %v4266 = vld [vmem:[%s7 + $0x1c0] sm:$0xff]
    %v4267 = vld [vmem:[%s7 + $0x1c8] sm:$0xff]
    %v4268 = vld [vmem:[%s7 + $0x1d0] sm:$0xff]
    %v4269 = vld [vmem:[%s7 + $0x1d8] sm:$0xff]
    %v4270 = vld [vmem:[%s7 + $0x1e0] sm:$0xff]
    %v4271 = vld [vmem:[%s7 + $0x1e8] sm:$0xff]
    %v4272 = vld [vmem:[%s7 + $0x1f0] sm:$0xff]
    %v4273 = vld [vmem:[%s7 + $0x1f8] sm:$0xff]
    %4275 = vset.pattern.permute.xlu0 0
    %4276 = vperm.xlu0 %4275, %v4210
    %v4277 = vpop.permute.xlu0 %4276
    %4280 = vset.pattern.permute.xlu0 0
    %4281 = vperm.xlu0 %4280, %v4211
    %v4282 = vpop.permute.xlu0 %4281
    %4285 = vset.pattern.permute.xlu0 0
    %4286 = vperm.xlu0 %4285, %v4212
    %v4287 = vpop.permute.xlu0 %4286
    %4290 = vset.pattern.permute.xlu0 0
    %4291 = vperm.xlu0 %4290, %v4213
    %v4292 = vpop.permute.xlu0 %4291
    %4295 = vset.pattern.permute.xlu0 0
    %4296 = vperm.xlu0 %4295, %v4214
    %v4297 = vpop.permute.xlu0 %4296
    %4300 = vset.pattern.permute.xlu0 0
    %4301 = vperm.xlu0 %4300, %v4215
    %v4302 = vpop.permute.xlu0 %4301
    %4305 = vset.pattern.permute.xlu0 0
    %4306 = vperm.xlu0 %4305, %v4216
    %v4307 = vpop.permute.xlu0 %4306
    %4310 = vset.pattern.permute.xlu0 0
    %4311 = vperm.xlu0 %4310, %v4217
    %v4312 = vpop.permute.xlu0 %4311
    %4315 = vset.pattern.permute.xlu0 0
    %4316 = vperm.xlu0 %4315, %v4218
    %v4317 = vpop.permute.xlu0 %4316
    %4320 = vset.pattern.permute.xlu0 0
    %4321 = vperm.xlu0 %4320, %v4219
    %v4322 = vpop.permute.xlu0 %4321
    %4325 = vset.pattern.permute.xlu0 0
    %4326 = vperm.xlu0 %4325, %v4220
    %v4327 = vpop.permute.xlu0 %4326
    %4330 = vset.pattern.permute.xlu0 0
    %4331 = vperm.xlu0 %4330, %v4221
    %v4332 = vpop.permute.xlu0 %4331
    %4335 = vset.pattern.permute.xlu0 0
    %4336 = vperm.xlu0 %4335, %v4222
    %v4337 = vpop.permute.xlu0 %4336
    %4340 = vset.pattern.permute.xlu0 0
    %4341 = vperm.xlu0 %4340, %v4223
    %v4342 = vpop.permute.xlu0 %4341
    %4345 = vset.pattern.permute.xlu0 0
    %4346 = vperm.xlu0 %4345, %v4224
    %v4347 = vpop.permute.xlu0 %4346
    %4350 = vset.pattern.permute.xlu0 0
    %4351 = vperm.xlu0 %4350, %v4225
    %v4352 = vpop.permute.xlu0 %4351
    %4355 = vset.pattern.permute.xlu0 0
    %4356 = vperm.xlu0 %4355, %v4226
    %v4357 = vpop.permute.xlu0 %4356
    %4360 = vset.pattern.permute.xlu0 0
    %4361 = vperm.xlu0 %4360, %v4227
    %v4362 = vpop.permute.xlu0 %4361
    %4365 = vset.pattern.permute.xlu0 0
    %4366 = vperm.xlu0 %4365, %v4228
    %v4367 = vpop.permute.xlu0 %4366
    %4370 = vset.pattern.permute.xlu0 0
    %4371 = vperm.xlu0 %4370, %v4229
    %v4372 = vpop.permute.xlu0 %4371
    %4375 = vset.pattern.permute.xlu0 0
    %4376 = vperm.xlu0 %4375, %v4230
    %v4377 = vpop.permute.xlu0 %4376
    %4380 = vset.pattern.permute.xlu0 0
    %4381 = vperm.xlu0 %4380, %v4231
    %v4382 = vpop.permute.xlu0 %4381
    %4385 = vset.pattern.permute.xlu0 0
    %4386 = vperm.xlu0 %4385, %v4232
    %v4387 = vpop.permute.xlu0 %4386
    %4390 = vset.pattern.permute.xlu0 0
    %4391 = vperm.xlu0 %4390, %v4233
    %v4392 = vpop.permute.xlu0 %4391
    %4395 = vset.pattern.permute.xlu0 0
    %4396 = vperm.xlu0 %4395, %v4234
    %v4397 = vpop.permute.xlu0 %4396
    %4400 = vset.pattern.permute.xlu0 0
    %4401 = vperm.xlu0 %4400, %v4235
    %v4402 = vpop.permute.xlu0 %4401
    %4405 = vset.pattern.permute.xlu0 0
    %4406 = vperm.xlu0 %4405, %v4236
    %v4407 = vpop.permute.xlu0 %4406
    %4410 = vset.pattern.permute.xlu0 0
    %4411 = vperm.xlu0 %4410, %v4237
    %v4412 = vpop.permute.xlu0 %4411
    %4415 = vset.pattern.permute.xlu0 0
    %4416 = vperm.xlu0 %4415, %v4238
    %v4417 = vpop.permute.xlu0 %4416
    %4420 = vset.pattern.permute.xlu0 0
    %4421 = vperm.xlu0 %4420, %v4239
    %v4422 = vpop.permute.xlu0 %4421
    %4425 = vset.pattern.permute.xlu0 0
    %4426 = vperm.xlu0 %4425, %v4240
    %v4427 = vpop.permute.xlu0 %4426
    %4430 = vset.pattern.permute.xlu0 0
    %4431 = vperm.xlu0 %4430, %v4241
    %v4432 = vpop.permute.xlu0 %4431
    %4435 = vset.pattern.permute.xlu0 0
    %4436 = vperm.xlu0 %4435, %v4242
    %v4437 = vpop.permute.xlu0 %4436
    %4440 = vset.pattern.permute.xlu0 0
    %4441 = vperm.xlu0 %4440, %v4243
    %v4442 = vpop.permute.xlu0 %4441
    %4445 = vset.pattern.permute.xlu0 0
    %4446 = vperm.xlu0 %4445, %v4244
    %v4447 = vpop.permute.xlu0 %4446
    %4450 = vset.pattern.permute.xlu0 0
    %4451 = vperm.xlu0 %4450, %v4245
    %v4452 = vpop.permute.xlu0 %4451
    %4455 = vset.pattern.permute.xlu0 0
    %4456 = vperm.xlu0 %4455, %v4246
    %v4457 = vpop.permute.xlu0 %4456
    %4460 = vset.pattern.permute.xlu0 0
    %4461 = vperm.xlu0 %4460, %v4247
    %v4462 = vpop.permute.xlu0 %4461
    %4465 = vset.pattern.permute.xlu0 0
    %4466 = vperm.xlu0 %4465, %v4248
    %v4467 = vpop.permute.xlu0 %4466
    %4470 = vset.pattern.permute.xlu0 0
    %4471 = vperm.xlu0 %4470, %v4249
    %v4472 = vpop.permute.xlu0 %4471
    %4475 = vset.pattern.permute.xlu0 0
    %4476 = vperm.xlu0 %4475, %v4250
    %v4477 = vpop.permute.xlu0 %4476
    %4480 = vset.pattern.permute.xlu0 0
    %4481 = vperm.xlu0 %4480, %v4251
    %v4482 = vpop.permute.xlu0 %4481
    %4485 = vset.pattern.permute.xlu0 0
    %4486 = vperm.xlu0 %4485, %v4252
    %v4487 = vpop.permute.xlu0 %4486
    %4490 = vset.pattern.permute.xlu0 0
    %4491 = vperm.xlu0 %4490, %v4253
    %v4492 = vpop.permute.xlu0 %4491
    %4495 = vset.pattern.permute.xlu0 0
    %4496 = vperm.xlu0 %4495, %v4254
    %v4497 = vpop.permute.xlu0 %4496
    %4500 = vset.pattern.permute.xlu0 0
    %4501 = vperm.xlu0 %4500, %v4255
    %v4502 = vpop.permute.xlu0 %4501
    %4505 = vset.pattern.permute.xlu0 0
    %4506 = vperm.xlu0 %4505, %v4256
    %v4507 = vpop.permute.xlu0 %4506
    %4510 = vset.pattern.permute.xlu0 0
    %4511 = vperm.xlu0 %4510, %v4257
    %v4512 = vpop.permute.xlu0 %4511
    %4515 = vset.pattern.permute.xlu0 0
    %4516 = vperm.xlu0 %4515, %v4258
    %v4517 = vpop.permute.xlu0 %4516
    %4520 = vset.pattern.permute.xlu0 0
    %4521 = vperm.xlu0 %4520, %v4259
    %v4522 = vpop.permute.xlu0 %4521
    %4525 = vset.pattern.permute.xlu0 0
    %4526 = vperm.xlu0 %4525, %v4260
    %v4527 = vpop.permute.xlu0 %4526
    %4530 = vset.pattern.permute.xlu0 0
    %4531 = vperm.xlu0 %4530, %v4261
    %v4532 = vpop.permute.xlu0 %4531
    %4535 = vset.pattern.permute.xlu0 0
    %4536 = vperm.xlu0 %4535, %v4262
    %v4537 = vpop.permute.xlu0 %4536
    %4540 = vset.pattern.permute.xlu0 0
    %4541 = vperm.xlu0 %4540, %v4263
    %v4542 = vpop.permute.xlu0 %4541
    %4545 = vset.pattern.permute.xlu0 0
    %4546 = vperm.xlu0 %4545, %v4264
    %v4547 = vpop.permute.xlu0 %4546
    %4550 = vset.pattern.permute.xlu0 0
    %4551 = vperm.xlu0 %4550, %v4265
    %v4552 = vpop.permute.xlu0 %4551
    %4555 = vset.pattern.permute.xlu0 0
    %4556 = vperm.xlu0 %4555, %v4266
    %v4557 = vpop.permute.xlu0 %4556
    %4560 = vset.pattern.permute.xlu0 0
    %4561 = vperm.xlu0 %4560, %v4267
    %v4562 = vpop.permute.xlu0 %4561
    %4565 = vset.pattern.permute.xlu0 0
    %4566 = vperm.xlu0 %4565, %v4268
    %v4567 = vpop.permute.xlu0 %4566
    %4570 = vset.pattern.permute.xlu0 0
    %4571 = vperm.xlu0 %4570, %v4269
    %v4572 = vpop.permute.xlu0 %4571
    %4575 = vset.pattern.permute.xlu0 0
    %4576 = vperm.xlu0 %4575, %v4270
    %v4577 = vpop.permute.xlu0 %4576
    %4580 = vset.pattern.permute.xlu0 0
    %4581 = vperm.xlu0 %4580, %v4271
    %v4582 = vpop.permute.xlu0 %4581
    %4585 = vset.pattern.permute.xlu0 0
    %4586 = vperm.xlu0 %4585, %v4272
    %v4587 = vpop.permute.xlu0 %4586
    %4590 = vset.pattern.permute.xlu0 0
    %4591 = vperm.xlu0 %4590, %v4273
    %v4592 = vpop.permute.xlu0 %4591
    %v4594 = vmul.f32 %v3618, %v4277
    %v4595 = vmul.f32 %v3619, %v4282
    %v4596 = vmul.f32 %v3620, %v4287
    %v4597 = vmul.f32 %v3621, %v4292
    %v4598 = vmul.f32 %v3622, %v4297
    %v4599 = vmul.f32 %v3623, %v4302
    %v4600 = vmul.f32 %v3624, %v4307
    %v4601 = vmul.f32 %v3625, %v4312
    %v4602 = vmul.f32 %v3626, %v4317
    %v4603 = vmul.f32 %v3627, %v4322
    %v4604 = vmul.f32 %v3628, %v4327
    %v4605 = vmul.f32 %v3629, %v4332
    %v4606 = vmul.f32 %v3630, %v4337
    %v4607 = vmul.f32 %v3631, %v4342
    %v4608 = vmul.f32 %v3632, %v4347
    %v4609 = vmul.f32 %v3633, %v4352
    %v4610 = vmul.f32 %v3634, %v4357
    %v4611 = vmul.f32 %v3635, %v4362
    %v4612 = vmul.f32 %v3636, %v4367
    %v4613 = vmul.f32 %v3637, %v4372
    %v4614 = vmul.f32 %v3638, %v4377
    %v4615 = vmul.f32 %v3639, %v4382
    %v4616 = vmul.f32 %v3640, %v4387
    %v4617 = vmul.f32 %v3641, %v4392
    %v4618 = vmul.f32 %v3642, %v4397
    %v4619 = vmul.f32 %v3643, %v4402
    %v4620 = vmul.f32 %v3644, %v4407
    %v4621 = vmul.f32 %v3645, %v4412
    %v4622 = vmul.f32 %v3646, %v4417
    %v4623 = vmul.f32 %v3647, %v4422
    %v4624 = vmul.f32 %v3648, %v4427
    %v4625 = vmul.f32 %v3649, %v4432
    %v4626 = vmul.f32 %v3650, %v4437
    %v4627 = vmul.f32 %v3651, %v4442
    %v4628 = vmul.f32 %v3652, %v4447
    %v4629 = vmul.f32 %v3653, %v4452
    %v4630 = vmul.f32 %v3654, %v4457
    %v4631 = vmul.f32 %v3655, %v4462
    %v4632 = vmul.f32 %v3656, %v4467
    %v4633 = vmul.f32 %v3657, %v4472
    %v4634 = vmul.f32 %v3658, %v4477
    %v4635 = vmul.f32 %v3659, %v4482
    %v4636 = vmul.f32 %v3660, %v4487
    %v4637 = vmul.f32 %v3661, %v4492
    %v4638 = vmul.f32 %v3662, %v4497
    %v4639 = vmul.f32 %v3663, %v4502
    %v4640 = vmul.f32 %v3664, %v4507
    %v4641 = vmul.f32 %v3665, %v4512
    %v4642 = vmul.f32 %v3666, %v4517
    %v4643 = vmul.f32 %v3667, %v4522
    %v4644 = vmul.f32 %v3668, %v4527
    %v4645 = vmul.f32 %v3669, %v4532
    %v4646 = vmul.f32 %v3670, %v4537
    %v4647 = vmul.f32 %v3671, %v4542
    %v4648 = vmul.f32 %v3672, %v4547
    %v4649 = vmul.f32 %v3673, %v4552
    %v4650 = vmul.f32 %v3674, %v4557
    %v4651 = vmul.f32 %v3675, %v4562
    %v4652 = vmul.f32 %v3676, %v4567
    %v4653 = vmul.f32 %v3677, %v4572
    %v4654 = vmul.f32 %v3678, %v4577
    %v4655 = vmul.f32 %v3679, %v4582
    %v4656 = vmul.f32 %v3680, %v4587
    %v4657 = vmul.f32 %v3681, %v4592
    %v4658 = vadd.f32 %v4594, %v4595
    %v4659 = vadd.f32 %v4658, %v4596
    %v4660 = vadd.f32 %v4659, %v4597
    %v4661 = vadd.f32 %v4660, %v4598
    %v4662 = vadd.f32 %v4661, %v4599
    %v4663 = vadd.f32 %v4662, %v4600
    %v4664 = vadd.f32 %v4663, %v4601
    %v4665 = vadd.f32 %v4664, %v4602
    %v4666 = vadd.f32 %v4665, %v4603
    %v4667 = vadd.f32 %v4666, %v4604
    %v4668 = vadd.f32 %v4667, %v4605
    %v4669 = vadd.f32 %v4668, %v4606
    %v4670 = vadd.f32 %v4669, %v4607
    %v4671 = vadd.f32 %v4670, %v4608
    %v4672 = vadd.f32 %v4671, %v4609
    %v4673 = vadd.f32 %v4672, %v4610
    %v4674 = vadd.f32 %v4673, %v4611
    %v4675 = vadd.f32 %v4674, %v4612
    %v4676 = vadd.f32 %v4675, %v4613
    %v4677 = vadd.f32 %v4676, %v4614
    %v4678 = vadd.f32 %v4677, %v4615
    %v4679 = vadd.f32 %v4678, %v4616
    %v4680 = vadd.f32 %v4679, %v4617
    %v4681 = vadd.f32 %v4680, %v4618
    %v4682 = vadd.f32 %v4681, %v4619
    %v4683 = vadd.f32 %v4682, %v4620
    %v4684 = vadd.f32 %v4683, %v4621
    %v4685 = vadd.f32 %v4684, %v4622
    %v4686 = vadd.f32 %v4685, %v4623
    %v4687 = vadd.f32 %v4686, %v4624
    %v4688 = vadd.f32 %v4687, %v4625
    %v4689 = vadd.f32 %v4688, %v4626
    %v4690 = vadd.f32 %v4689, %v4627
    %v4691 = vadd.f32 %v4690, %v4628
    %v4692 = vadd.f32 %v4691, %v4629
    %v4693 = vadd.f32 %v4692, %v4630
    %v4694 = vadd.f32 %v4693, %v4631
    %v4695 = vadd.f32 %v4694, %v4632
    %v4696 = vadd.f32 %v4695, %v4633
    %v4697 = vadd.f32 %v4696, %v4634
    %v4698 = vadd.f32 %v4697, %v4635
    %v4699 = vadd.f32 %v4698, %v4636
    %v4700 = vadd.f32 %v4699, %v4637
    %v4701 = vadd.f32 %v4700, %v4638
    %v4702 = vadd.f32 %v4701, %v4639
    %v4703 = vadd.f32 %v4702, %v4640
    %v4704 = vadd.f32 %v4703, %v4641
    %v4705 = vadd.f32 %v4704, %v4642
    %v4706 = vadd.f32 %v4705, %v4643
    %v4707 = vadd.f32 %v4706, %v4644
    %v4708 = vadd.f32 %v4707, %v4645
    %v4709 = vadd.f32 %v4708, %v4646
    %v4710 = vadd.f32 %v4709, %v4647
    %v4711 = vadd.f32 %v4710, %v4648
    %v4712 = vadd.f32 %v4711, %v4649
    %v4713 = vadd.f32 %v4712, %v4650
    %v4714 = vadd.f32 %v4713, %v4651
    %v4715 = vadd.f32 %v4714, %v4652
    %v4716 = vadd.f32 %v4715, %v4653
    %v4717 = vadd.f32 %v4716, %v4654
    %v4718 = vadd.f32 %v4717, %v4655
    %v4719 = vadd.f32 %v4718, %v4656
    %v4720 = vadd.f32 %v4719, %v4657
    %v4721 = vrot.slane %v4720, 4
    %v4722 = vadd.f32 %v4720, %v4721
    %v4723 = vrot.slane %v4722, 2
    %v4724 = vadd.f32 %v4722, %v4723
    %v4725 = vrot.slane %v4724, 1
    %v4726 = vadd.f32 %v4724, %v4725
    %v4727 = vld [vmem:[#allocation3] sm:$0x1]
    %4729 = vset.pattern.permute.xlu0 0
    %4730 = vperm.xlu0 %4729, %v4727
    %v4731 = vpop.permute.xlu0 %4730
    %v4733 = vlaneseq
    %v4734 = vshrl.u32 %v4733, 7
    %v4735 = vsub.s32 0, %v4734
    %v4736 = vrot.slane %v4731, %v4735
    %v4737 = vadd.f32 %v4726, %v4736
    %v4738 = vld [vmem:[%s1] sm:$0x1]
    %vm4739 = vcmp.gt.f32.partialorder %v4738, 0.0
    %v4740 = vsel %vm4739, %v4737, %v4209
    %4741 = vst [vmem:[#allocation7] sm:$0x1] %v4740
    // Predicated region
    $region42: #{tpu_custom_call.1} parent=1 // pred_check
      _
    $region43: #{tpu_custom_call.1} parent=1 // pred_check_branch
      %4743 = sbr.rel (0) target = $region45
    $region44: #{tpu_custom_call.1} parent=1 // pred_region
      %s4745 = ssub.s32 16, 16
      %4746 = vsyncadd [#allocation6], %s4745
      %s4748 = sshll.u32 [#allocation7], 4
      %s4749 = int_to_ptr.vmem [resolvable:$true] %s4748
      %4751 = dma.vmem_to_hbm [thread:$0]  %s4749, 16, %s9, [#allocation6]
    $region45: #{tpu_custom_call.1} parent=1 // pred_fallthru
      _
    // Predicated region
    $region46: #{tpu_custom_call.1} parent=1 // pred_check
      _
    $region47: #{tpu_custom_call.1} parent=1 // pred_check_branch
      %4753 = sbr.rel (0) target = $region49
    $region48: #{tpu_custom_call.1} parent=1 // pred_region
      %4754 = dma.done [#allocation6], 16
    $region49: #{tpu_custom_call.1} parent=1 // pred_fallthru
      _
    %4755 = vsyncpa [#allocation5], 1
    %4756 = vsyncpa [#allocation6], 1

</llo_original>
